<compile_context>
chip_gen: v5e
topology: v5e:2x2
jax: 0.10.0
libtpu: 0.0.40
codegen_flags: <defaults>
</compile_context>

<pallas_src>
import functools

import jax
import jax.numpy as jnp
from jax.experimental import pallas as pl
from jax.experimental.pallas import tpu as pltpu


def _round_up(x, m):
    return ((x + m - 1) // m) * m


def _mlp_kernel(x_ref, w1_ref, b1_ref, w2_ref, b2_ref, o_ref):
    # x_ref:  (TB, in_dim)  f32 batch tile (cast to bf16 in-register; avoids a
    #                       separate HBM cast/pad pass over the activations)
    # w1_ref: (in_dim, hid) bf16, grid-invariant (constant index_map)
    # b1_ref: (1, hid)      f32
    # w2_ref: (hid, N_pad)  bf16, grid-invariant
    # b2_ref: (1, N_pad)    f32
    # o_ref:  (TB, N_pad)   bf16 (lane-dense store; wrapper slices/casts back)
    x = x_ref[...].astype(jnp.bfloat16)
    h = jnp.dot(x, w1_ref[...], preferred_element_type=jnp.float32)
    h = jnp.maximum(h + b1_ref[...], 0.0)          # bias + ReLU on f32 accumulator
    # Dropout(0.3): identity at inference time.
    # TODO(synk): pltpu.prng_random_bits-based mask for training-mode forward.
    y = jnp.dot(h.astype(jnp.bfloat16), w2_ref[...],
                preferred_element_type=jnp.float32)
    o_ref[...] = (y + b2_ref[...]).astype(o_ref.dtype)


def prepare_params(w1, b1, w2, b2):
    """One-time (init-time) parameter prep: bf16 cast + lane padding of the
    tiny class dim (2 -> 128). Hoisted out of the per-call path so a forward
    never re-reads/re-writes the weights through HBM."""
    in_dim, hid = w1.shape
    n_cls = w2.shape[1]
    n_pad = _round_up(max(n_cls, 128), 128)
    w1_p = jnp.asarray(w1, jnp.bfloat16)                       # K left at in_dim (no pad)
    b1_p = jnp.asarray(b1, jnp.float32).reshape(1, hid)
    w2_p = jnp.pad(jnp.asarray(w2, jnp.bfloat16), ((0, 0), (0, n_pad - n_cls)))
    b2_p = jnp.pad(jnp.asarray(b2, jnp.float32).reshape(1, n_cls),
                   ((0, 0), (0, n_pad - n_cls)))
    return w1_p, b1_p, w2_p, b2_p


def _pick_block_b(batch, max_block=512):
    """Batch tile: multiple of 16 rows (bf16 sublane packing), >= 2 grid steps
    when the batch allows (v7x megacore), capped for VMEM headroom."""
    if batch <= 16:
        return batch                       # full-dim block is always legal
    return min(max_block, _round_up(pl.cdiv(batch, 2), 16))


@functools.partial(jax.jit, static_argnames=("n_cls", "block_b"))
def sarcasm_mlp_forward(x, w1_p, b1_p, w2_p, b2_p, *, n_cls=2, block_b=None):
    """Fused MLP forward. x: (B, in_dim) f32 (or bf16); params from
    prepare_params(). Returns (B, n_cls) f32 logits."""
    B, in_dim = x.shape
    hid = w1_p.shape[1]
    n_pad = w2_p.shape[1]

    if block_b is None:
        block_b = _pick_block_b(B)
    grid = (pl.cdiv(B, block_b),)

    cost = pl.CostEstimate(
        flops=2 * B * in_dim * hid + 2 * B * hid * n_pad,
        transcendentals=0,
        bytes_accessed=(B * in_dim * x.dtype.itemsize   # x streamed once
                        + in_dim * hid * 2              # w1 (bf16)
                        + hid * 4                       # b1 (f32)
                        + hid * n_pad * 2               # w2 (bf16)
                        + n_pad * 4                     # b2 (f32)
                        + B * n_pad * 2),               # out (bf16)
    )

    out_p = pl.pallas_call(
        _mlp_kernel,
        out_shape=jax.ShapeDtypeStruct((B, n_pad), jnp.bfloat16),
        grid_spec=pltpu.PrefetchScalarGridSpec(
            num_scalar_prefetch=0,
            grid=grid,
            in_specs=[
                # Streamed activation tile; last dim = full in_dim (1540), so
                # no HBM-side K padding and no extra cast pass over x.
                pl.BlockSpec((block_b, in_dim), lambda i: (i, 0)),
                # Grid-invariant weights / biases (constant index_map: fetched
                # once by the pipeline). At block_b <= 512 total VMEM stays far
                # below the 16 MiB v5e scoped default, so default buffering of
                # these constants costs nothing; if max_block is raised toward
                # 2048, add pipeline_mode=pl.Buffered(1) here and raise
                # vmem_limit_bytes accordingly.
                pl.BlockSpec((in_dim, hid), lambda i: (0, 0)),
                pl.BlockSpec((1, hid), lambda i: (0, 0)),
                pl.BlockSpec((hid, n_pad), lambda i: (0, 0)),
                pl.BlockSpec((1, n_pad), lambda i: (0, 0)),
            ],
            out_specs=pl.BlockSpec((block_b, n_pad), lambda i: (i, 0)),
        ),
        compiler_params=pltpu.CompilerParams(
            dimension_semantics=("parallel",),
            vmem_limit_bytes=32 * 1024 * 1024,   # guardrail; safe on v5e/v6e/v7x
        ),
        cost_estimate=cost,
    )(x, w1_p, b1_p, w2_p, b2_p)

    # Slice the 128-lane padded logits back to n_cls and return f32.
    return out_p[:, :n_cls].astype(jnp.float32)


def init_params(key, in_dim=1540, hid=512, n_cls=2, dtype=jnp.float32):
    """Deterministic synthetic parameters (PyTorch-like uniform fan-in init)."""
    k1, k2, k3, k4 = jax.random.split(key, 4)
    bound1 = 1.0 / (in_dim ** 0.5)
    bound2 = 1.0 / (hid ** 0.5)
    w1 = jax.random.uniform(k1, (in_dim, hid), dtype, -bound1, bound1)
    b1 = jax.random.uniform(k2, (hid,), dtype, -bound1, bound1)
    w2 = jax.random.uniform(k3, (hid, n_cls), dtype, -bound2, bound2)
    b2 = jax.random.uniform(k4, (n_cls,), dtype, -bound2, bound2)
    return w1, b1, w2, b2


def reference_forward(x, w1, b1, w2, b2):
    h = jnp.maximum(x @ w1 + b1, 0.0)
    return h @ w2 + b2


if __name__ == "__main__":
    in_dim, hid, n_cls = 1540, 512, 2
    batch = 48   # small; adaptive tile -> block_b=32 -> 2 grid steps (pipeline + megacore)

    key = jax.random.PRNGKey(0)
    kx, kp = jax.random.split(key)
    x = jax.random.normal(kx, (batch, in_dim), jnp.float32)
    w1, b1, w2, b2 = init_params(kp, in_dim, hid, n_cls)

    # One-time weight prep (hoisted out of the per-forward path).
    params = jax.block_until_ready(prepare_params(w1, b1, w2, b2))

    out = sarcasm_mlp_forward(x, *params, n_cls=n_cls)
    out = jax.block_until_ready(out)

    # Reference uses the same bf16-rounded inputs with f32 math, matching the
    # kernel's bf16-in / f32-accumulate MXU path (bf16 logits add ~0.4% error).
    ref = reference_forward(
        x.astype(jnp.bfloat16).astype(jnp.float32),
        w1.astype(jnp.bfloat16).astype(jnp.float32), b1,
        w2.astype(jnp.bfloat16).astype(jnp.float32), b2)

    assert out.shape == (batch, n_cls)
    assert jnp.allclose(out, ref, atol=3e-2, rtol=3e-2)

    print("KERNEL_OK")
</pallas_src>

<mosaic_0001>
module attributes {stable_mosaic.version = 11 : i64} {
  func.func @_mlp_kernel(%arg0: i32, %arg1: memref<32x1540xf32, #tpu.memory_space<vmem>>, %arg2: memref<1540x512xbf16, #tpu.memory_space<vmem>>, %arg3: memref<1x512xf32, #tpu.memory_space<vmem>>, %arg4: memref<512x128xbf16, #tpu.memory_space<vmem>>, %arg5: memref<1x128xf32, #tpu.memory_space<vmem>>, %arg6: memref<32x128xbf16, #tpu.memory_space<vmem>>) attributes {dimension_semantics = [#tpu.dimension_semantics<parallel>], iteration_bounds = array<i64: 2>, scalar_prefetch = 0 : i64, scratch_operands = 0 : i64, tpu.core_type = #tpu.core_type<tc>, window_params = [{transform_indices = @transform_0, window_bounds = array<i64: 32, 1540>}, {pipeline_mode = #tpu.pipeline_mode<synchronous>, transform_indices = @transform_1, window_bounds = array<i64: 1540, 512>}, {pipeline_mode = #tpu.pipeline_mode<synchronous>, transform_indices = @transform_2, window_bounds = array<i64: 1, 512>}, {pipeline_mode = #tpu.pipeline_mode<synchronous>, transform_indices = @transform_3, window_bounds = array<i64: 512, 128>}, {pipeline_mode = #tpu.pipeline_mode<synchronous>, transform_indices = @transform_4, window_bounds = array<i64: 1, 128>}, {transform_indices = @transform_5, window_bounds = array<i64: 32, 128>}]} {
    %c0 = arith.constant 0 : index
    %c0_0 = arith.constant 0 : index
    %0 = vector.load %arg1[%c0, %c0_0] : memref<32x1540xf32, #tpu.memory_space<vmem>>, vector<32x1540xf32>
    %1 = arith.truncf %0 : vector<32x1540xf32> to vector<32x1540xbf16>
    %c0_1 = arith.constant 0 : index
    %c0_2 = arith.constant 0 : index
    %2 = vector.load %arg2[%c0_1, %c0_2] : memref<1540x512xbf16, #tpu.memory_space<vmem>>, vector<1540x512xbf16>
    %cst = arith.constant dense<0.000000e+00> : vector<32x512xf32>
    %3 = tpu.matmul %1, %2, %cst {dimension_numbers = #tpu.dot_dimension_numbers<[1], [0], [0], [1], [0, 0, 1, 1], [], []>} : vector<32x1540xbf16>, vector<1540x512xbf16>, vector<32x512xf32> -> vector<32x512xf32>
    %c0_3 = arith.constant 0 : index
    %c0_4 = arith.constant 0 : index
    %4 = vector.load %arg3[%c0_3, %c0_4] : memref<1x512xf32, #tpu.memory_space<vmem>>, vector<1x512xf32>
    %5 = vector.broadcast %4 : vector<1x512xf32> to vector<32x512xf32>
    %6 = arith.addf %3, %5 : vector<32x512xf32>
    %cst_5 = arith.constant 0.000000e+00 : f32
    %7 = vector.broadcast %cst_5 : f32 to vector<32x512xf32>
    %8 = arith.maximumf %6, %7 : vector<32x512xf32>
    %9 = arith.truncf %8 : vector<32x512xf32> to vector<32x512xbf16>
    %c0_6 = arith.constant 0 : index
    %c0_7 = arith.constant 0 : index
    %10 = vector.load %arg4[%c0_6, %c0_7] : memref<512x128xbf16, #tpu.memory_space<vmem>>, vector<512x128xbf16>
    %cst_8 = arith.constant dense<0.000000e+00> : vector<32x128xf32>
    %11 = tpu.matmul %9, %10, %cst_8 {dimension_numbers = #tpu.dot_dimension_numbers<[1], [0], [0], [1], [0, 0, 1, 1], [], []>} : vector<32x512xbf16>, vector<512x128xbf16>, vector<32x128xf32> -> vector<32x128xf32>
    %c0_9 = arith.constant 0 : index
    %c0_10 = arith.constant 0 : index
    %12 = vector.load %arg5[%c0_9, %c0_10] : memref<1x128xf32, #tpu.memory_space<vmem>>, vector<1x128xf32>
    %13 = vector.broadcast %12 : vector<1x128xf32> to vector<32x128xf32>
    %14 = arith.addf %11, %13 : vector<32x128xf32>
    %15 = arith.truncf %14 : vector<32x128xf32> to vector<32x128xbf16>
    %c0_11 = arith.constant 0 : index
    %c0_12 = arith.constant 0 : index
    %16 = vector.load %arg6[%c0_11, %c0_12] : memref<32x128xbf16, #tpu.memory_space<vmem>>, vector<32x128xbf16>
    tpu.vector_store %arg6[%c0_11, %c0_12], %15 {strides = array<i32>} : memref<32x128xbf16, #tpu.memory_space<vmem>>, vector<32x128xbf16>,
    return
  }
  func.func @transform_0(%arg0: i32) -> (i32, i32) {
    %c0_i32 = arith.constant 0 : i32
    %c0_i32_0 = arith.constant 0 : i32
    return %arg0, %c0_i32 : i32, i32
  }
  func.func @transform_1(%arg0: i32) -> (i32, i32) {
    %c0_i32 = arith.constant 0 : i32
    %c0_i32_0 = arith.constant 0 : i32
    %c0_i32_1 = arith.constant 0 : i32
    return %c0_i32, %c0_i32_0 : i32, i32
  }
  func.func @transform_2(%arg0: i32) -> (i32, i32) {
    %c0_i32 = arith.constant 0 : i32
    %c0_i32_0 = arith.constant 0 : i32
    %c0_i32_1 = arith.constant 0 : i32
    return %c0_i32, %c0_i32_0 : i32, i32
  }
  func.func @transform_3(%arg0: i32) -> (i32, i32) {
    %c0_i32 = arith.constant 0 : i32
    %c0_i32_0 = arith.constant 0 : i32
    %c0_i32_1 = arith.constant 0 : i32
    return %c0_i32, %c0_i32_0 : i32, i32
  }
  func.func @transform_4(%arg0: i32) -> (i32, i32) {
    %c0_i32 = arith.constant 0 : i32
    %c0_i32_0 = arith.constant 0 : i32
    %c0_i32_1 = arith.constant 0 : i32
    return %c0_i32, %c0_i32_0 : i32, i32
  }
  func.func @transform_5(%arg0: i32) -> (i32, i32) {
    %c0_i32 = arith.constant 0 : i32
    %c0_i32_0 = arith.constant 0 : i32
    return %arg0, %c0_i32 : i32, i32
  }
}

</mosaic_0001>

<llo_original>
// kernel: sarcasm_mlp_forward.1
$region0: #{sarcasm_mlp_forward.1}
  #allocation0 [shape = 'u32[]', space=smem, size = 0x4, offset = 0x4, fixed_abs, tag = 'smem constant byte address 0x4 - core index']
  #allocation1 [shape = 'u32[72,128]{1,0:T(1,128)}', space=vmem, size = 0x9000, scoped, tag = 'internal scratch']
  %s0 = inlined_call_operand.hbm [shape: f32[48,1540], index: 0, kind: input, shape index: {}]
  %s1 = inlined_call_operand.hbm [shape: bf16[1540,512], index: 1, kind: input, shape index: {}]
  %s2 = inlined_call_operand.hbm [shape: f32[1,512], index: 2, kind: input, shape index: {}]
  %s3 = inlined_call_operand.hbm [shape: bf16[512,128], index: 3, kind: input, shape index: {}]
  %s4 = inlined_call_operand.hbm [shape: f32[1,128], index: 4, kind: input, shape index: {}]
  %s5 = inlined_call_operand.vmem [shape: bf16[48,128], index: 5, kind: output, shape index: {}]
  %s6 = sld [smem:[#allocation0]]
  $region117: #{sarcasm_mlp_forward.1} parent=0
    _
  %s8 = ssub.s32 1, %s6
  %s9 = scalar_select 0, %s8, %s6
  $region1: #{sarcasm_mlp_forward.1} parent=0
    #allocation2 [shape = 'u8[425984]{0}', space=vmem, size = 0x68000, scoped, tag = 'input window, operand 0']
    #allocation3 [shape = 's32[2]{0}', space=sflag, size = 0x8, scoped, tag = 'scoped memory for sarcasm_mlp_forward.1']
    #allocation4 [shape = 'u8[1581056]{0}', space=vmem, size = 0x182000, scoped, tag = 'input window, operand 1, single buffered']
    #allocation5 [shape = 's32[1]{0}', space=sflag, size = 0x4, scoped, tag = 'scoped memory for sarcasm_mlp_forward.1']
    #allocation6 [shape = 'u8[2048]{0}', space=vmem, size = 0x800, scoped, tag = 'input window, operand 2, single buffered']
    #allocation7 [shape = 'u8[131072]{0}', space=vmem, size = 0x20000, scoped, tag = 'input window, operand 3, single buffered']
    #allocation8 [shape = 's32[1]{0}', space=sflag, size = 0x4, scoped, tag = 'scoped memory for sarcasm_mlp_forward.1']
    #allocation9 [shape = 'u8[512]{0}', space=vmem, size = 0x400, scoped, tag = 'input window, operand 4, single buffered']
    #allocation10 [shape = 'u8[16384]{0}', space=vmem, size = 0x4000, scoped, tag = 'output window, operand 0']
    %10 = vsyncpa [#allocation3], 0
    %s11 = scalar_lea.sflag [#allocation3], 1
    %12 = vsyncpa %s11, 0
    %13 = vsyncpa [#allocation5], 0
    %14 = vsyncpa [#allocation8], 0
    loop: start=0, step=1, limit=4
    $region2: #{sarcasm_mlp_forward.1} parent=1 // loop_pre_header
      _
    $region3: #{sarcasm_mlp_forward.1} parent=1 // loop_header
      %s16 = sphi 0, %s20
      %p17 = scmp.ge.s32.totalorder %s16, 4
      %s26 = sphi 0, %s28
      %s29 = sphi 0, %s26
      %s30 = sphi 0, %s29
      %s46 = sphi 0, %s30
      %s50 = sphi 0, %s50
      %s52 = sphi 0, %s50
      %s53 = sphi 0, %s52
      %s67 = sphi 0, %s53
      %s71 = sphi 0, %s71
      %s73 = sphi 0, %s71
      %s74 = sphi 0, %s73
      %s88 = sphi 0, %s74
      %s92 = sphi 0, %s92
      %s94 = sphi 0, %s92
      %s95 = sphi 0, %s94
      %s109 = sphi 0, %s95
      %s113 = sphi 0, %s113
      %s115 = sphi 0, %s113
      %s116 = sphi 0, %s115
      %s130 = sphi 0, %s116
      %s136 = sphi 0, %s138
      %s139 = sphi 0, %s136
      %s140 = sphi 0, %s139
      %s156 = sphi 0, %s140
    $region4: #{sarcasm_mlp_forward.1} parent=1 // loop_header_branch
      %19 = sbr.rel (%p17) target = $region8
    $region5: #{sarcasm_mlp_forward.1} parent=1 // loop_body
      %s21 = ssub.s32 %s16, 1
      %s22 = ssub.s32 %s16, 2
      %s23 = sadd.s32 %s16, 1
      %s24 = ssub.s32 %s16, %s23
      %p25 = scmp.eq.s32.totalorder %s24, 0
      %s27 = sadd.s32 %s26, 1
      %s28 = scalar_select %p25, %s26, %s27
      %p31 = pneg %p25
      %p32 = scmp.eq.s32.totalorder %s16, 1
      %p33 = por %p31, %p32
      %p34 = scmp.ne.s32.totalorder %s26, %s29
      %p35 = scmp.eq.s32.totalorder %s16, 0
      %p36 = por %p34, %p35
      %p37 = scmp.ne.s32.totalorder %s26, %s29
      %p38 = scmp.eq.s32.totalorder %s21, 1
      %p39 = por %p37, %p38
      %p40 = scmp.ne.s32.totalorder %s29, %s30
      %p41 = scmp.eq.s32.totalorder %s21, 0
      %p42 = por %p40, %p41
      %p43 = scmp.ne.s32.totalorder %s29, %s30
      %p44 = scmp.eq.s32.totalorder %s22, 1
      %p45 = por %p43, %p44
      %p47 = scmp.ne.s32.totalorder %s30, %s46
      %p48 = scmp.eq.s32.totalorder %s22, 0
      %p49 = por %p47, %p48
      %s51 = sadd.s32 %s50, 1
      %p54 = scmp.eq.s32.totalorder %s16, 1
      %p55 = scmp.ne.s32.totalorder %s50, %s52
      %p56 = scmp.eq.s32.totalorder %s16, 0
      %p57 = por %p55, %p56
      %p58 = scmp.ne.s32.totalorder %s50, %s52
      %p59 = scmp.eq.s32.totalorder %s21, 1
      %p60 = por %p58, %p59
      %p61 = scmp.ne.s32.totalorder %s52, %s53
      %p62 = scmp.eq.s32.totalorder %s21, 0
      %p63 = por %p61, %p62
      %p64 = scmp.ne.s32.totalorder %s52, %s53
      %p65 = scmp.eq.s32.totalorder %s22, 1
      %p66 = por %p64, %p65
      %p68 = scmp.ne.s32.totalorder %s53, %s67
      %p69 = scmp.eq.s32.totalorder %s22, 0
      %p70 = por %p68, %p69
      %s72 = sadd.s32 %s71, 1
      %p75 = scmp.eq.s32.totalorder %s16, 1
      %p76 = scmp.ne.s32.totalorder %s71, %s73
      %p77 = scmp.eq.s32.totalorder %s16, 0
      %p78 = por %p76, %p77
      %p79 = scmp.ne.s32.totalorder %s71, %s73
      %p80 = scmp.eq.s32.totalorder %s21, 1
      %p81 = por %p79, %p80
      %p82 = scmp.ne.s32.totalorder %s73, %s74
      %p83 = scmp.eq.s32.totalorder %s21, 0
      %p84 = por %p82, %p83
      %p85 = scmp.ne.s32.totalorder %s73, %s74
      %p86 = scmp.eq.s32.totalorder %s22, 1
      %p87 = por %p85, %p86
      %p89 = scmp.ne.s32.totalorder %s74, %s88
      %p90 = scmp.eq.s32.totalorder %s22, 0
      %p91 = por %p89, %p90
      %s93 = sadd.s32 %s92, 1
      %p96 = scmp.eq.s32.totalorder %s16, 1
      %p97 = scmp.ne.s32.totalorder %s92, %s94
      %p98 = scmp.eq.s32.totalorder %s16, 0
      %p99 = por %p97, %p98
      %p100 = scmp.ne.s32.totalorder %s92, %s94
      %p101 = scmp.eq.s32.totalorder %s21, 1
      %p102 = por %p100, %p101
      %p103 = scmp.ne.s32.totalorder %s94, %s95
      %p104 = scmp.eq.s32.totalorder %s21, 0
      %p105 = por %p103, %p104
      %p106 = scmp.ne.s32.totalorder %s94, %s95
      %p107 = scmp.eq.s32.totalorder %s22, 1
      %p108 = por %p106, %p107
      %p110 = scmp.ne.s32.totalorder %s95, %s109
      %p111 = scmp.eq.s32.totalorder %s22, 0
      %p112 = por %p110, %p111
      %s114 = sadd.s32 %s113, 1
      %p117 = scmp.eq.s32.totalorder %s16, 1
      %p118 = scmp.ne.s32.totalorder %s113, %s115
      %p119 = scmp.eq.s32.totalorder %s16, 0
      %p120 = por %p118, %p119
      %p121 = scmp.ne.s32.totalorder %s113, %s115
      %p122 = scmp.eq.s32.totalorder %s21, 1
      %p123 = por %p121, %p122
      %p124 = scmp.ne.s32.totalorder %s115, %s116
      %p125 = scmp.eq.s32.totalorder %s21, 0
      %p126 = por %p124, %p125
      %p127 = scmp.ne.s32.totalorder %s115, %s116
      %p128 = scmp.eq.s32.totalorder %s22, 1
      %p129 = por %p127, %p128
      %p131 = scmp.ne.s32.totalorder %s116, %s130
      %p132 = scmp.eq.s32.totalorder %s22, 0
      %p133 = por %p131, %p132
      %s134 = ssub.s32 %s16, %s23
      %p135 = scmp.eq.s32.totalorder %s134, 0
      %s137 = sadd.s32 %s136, 1
      %s138 = scalar_select %p135, %s136, %s137
      %p141 = pneg %p135
      %p142 = scmp.eq.s32.totalorder %s16, 1
      %p143 = por %p141, %p142
      %p144 = scmp.ne.s32.totalorder %s136, %s139
      %p145 = scmp.eq.s32.totalorder %s16, 0
      %p146 = por %p144, %p145
      %p147 = scmp.ne.s32.totalorder %s136, %s139
      %p148 = scmp.eq.s32.totalorder %s21, 1
      %p149 = por %p147, %p148
      %p150 = scmp.ne.s32.totalorder %s139, %s140
      %p151 = scmp.eq.s32.totalorder %s21, 0
      %p152 = por %p150, %p151
      %p153 = scmp.ne.s32.totalorder %s139, %s140
      %p154 = scmp.eq.s32.totalorder %s22, 1
      %p155 = por %p153, %p154
      %p157 = scmp.ne.s32.totalorder %s140, %s156
      %p158 = scmp.eq.s32.totalorder %s22, 0
      %p159 = por %p157, %p158
      %p160 = scmp.le.s32.totalorder 1, %s16
      %p161 = scmp.lt.s32.totalorder %s16, 3
      %p162 = pnand %p160, %p161
      %p163 = pneg %p162
      // Predicated region
      $region9: #{sarcasm_mlp_forward.1} parent=5 // pred_check
        _
      $region10: #{sarcasm_mlp_forward.1} parent=5 // pred_check_branch
        %165 = sbr.rel (%p162) target = $region12
      $region11: #{sarcasm_mlp_forward.1} parent=5 // pred_region
        %s166 = ssub.s32 %s16, 1
        // Predicated region
        $region13: #{sarcasm_mlp_forward.1} parent=11 // pred_check
          %p167 = pneg %p63
        $region14: #{sarcasm_mlp_forward.1} parent=11 // pred_check_branch
          %169 = sbr.rel (%p167) target = $region16
        $region15: #{sarcasm_mlp_forward.1} parent=11 // pred_region
          %171 = vsyncadd [#allocation5], 0
          %s172 = sshll.u32 %s1, 4
          %s173 = int_to_ptr.hbm [resolvable:$true] %s172
          %s174 = sshll.u32 [#allocation4], 4
          %s175 = int_to_ptr.vmem [resolvable:$true] %s174
          %180 = dma.hbm_to_vmem [thread:$0]  %s173, 49408, %s175, [#allocation5], 256, 256, 16
        $region16: #{sarcasm_mlp_forward.1} parent=11 // pred_fallthru
          _
        // Predicated region
        $region17: #{sarcasm_mlp_forward.1} parent=11 // pred_check
          %p181 = pneg %p84
        $region18: #{sarcasm_mlp_forward.1} parent=11 // pred_check_branch
          %183 = sbr.rel (%p181) target = $region20
        $region19: #{sarcasm_mlp_forward.1} parent=11 // pred_region
          %185 = vsyncadd [#allocation5], 0
          %s187 = sshll.u32 %s2, 4
          %s188 = int_to_ptr.hbm [resolvable:$true] %s187
          %s189 = sshll.u32 [#allocation6], 4
          %s190 = int_to_ptr.vmem [resolvable:$true] %s189
          %192 = dma.hbm_to_vmem [thread:$0]  %s188, 64, %s190, [#allocation5]
        $region20: #{sarcasm_mlp_forward.1} parent=11 // pred_fallthru
          _
        // Predicated region
        $region21: #{sarcasm_mlp_forward.1} parent=11 // pred_check
          %p193 = pneg %p105
        $region22: #{sarcasm_mlp_forward.1} parent=11 // pred_check_branch
          %195 = sbr.rel (%p193) target = $region24
        $region23: #{sarcasm_mlp_forward.1} parent=11 // pred_region
          %197 = vsyncadd [#allocation8], 0
          %s198 = sshll.u32 %s3, 4
          %s199 = int_to_ptr.hbm [resolvable:$true] %s198
          %s200 = sshll.u32 [#allocation7], 4
          %s201 = int_to_ptr.vmem [resolvable:$true] %s200
          %206 = dma.hbm_to_vmem [thread:$0]  %s199, 4096, %s201, [#allocation8], 64, 64, 4
        $region24: #{sarcasm_mlp_forward.1} parent=11 // pred_fallthru
          _
        // Predicated region
        $region25: #{sarcasm_mlp_forward.1} parent=11 // pred_check
          %p207 = pneg %p126
        $region26: #{sarcasm_mlp_forward.1} parent=11 // pred_check_branch
          %209 = sbr.rel (%p207) target = $region28
        $region27: #{sarcasm_mlp_forward.1} parent=11 // pred_region
          %211 = vsyncadd [#allocation8], 0
          %s213 = sshll.u32 %s4, 4
          %s214 = int_to_ptr.hbm [resolvable:$true] %s213
          %s215 = sshll.u32 [#allocation9], 4
          %s216 = int_to_ptr.vmem [resolvable:$true] %s215
          %218 = dma.hbm_to_vmem [thread:$0]  %s214, 16, %s216, [#allocation8]
        $region28: #{sarcasm_mlp_forward.1} parent=11 // pred_fallthru
          _
      $region12: #{sarcasm_mlp_forward.1} parent=5 // pred_fallthru
        _
      %p219 = scmp.lt.s32.totalorder %s16, 2
      // Predicated region
      $region29: #{sarcasm_mlp_forward.1} parent=5 // pred_check
        %p220 = pneg %p219
      $region30: #{sarcasm_mlp_forward.1} parent=5 // pred_check_branch
        %222 = sbr.rel (%p220) target = $region32
      $region31: #{sarcasm_mlp_forward.1} parent=5 // pred_region
        // Predicated region
        $region33: #{sarcasm_mlp_forward.1} parent=31 // pred_check
          %p223 = pneg %p36
        $region34: #{sarcasm_mlp_forward.1} parent=31 // pred_check_branch
          %225 = sbr.rel (%p223) target = $region36
        $region35: #{sarcasm_mlp_forward.1} parent=31 // pred_region
          %s226 = sand.u32 %s26, 1
          %s227 = scalar_lea.sflag [#allocation3], %s226
          %s228 = sand.u32 %s26, 1
          %s229 = smul.addr %s228, 416
          %s230 = scalar_lea.vmem [#allocation2], %s229
          %s231 = smul.u32 4, %s16
          %s232 = ssub.s32 6, %s231
          %p233 = scmp.lt.s32.totalorder %s232, 4
          %s234 = scalar_select %p233, %s232, 4
          %s235 = smul.u32 8, %s234
          %s236 = smul.u32 %s235, 13
          %s237 = ssub.s32 416, %s236
          %s238 = sshll.u32 %s237, 4
          %239 = vsyncadd %s227, %s238
          %p240 = scmp.ne.s32.totalorder 0, %s236
          %s241 = smul.addr %s231, 13
          %s242 = smul.addr %s241, 8
          %s243 = scalar_lea.hbm %s0, %s242
          %s244 = smul.u32 104, %s234
          %s245 = sshll.u32 %s243, 4
          %s246 = int_to_ptr.hbm [resolvable:$true] %s245
          %s247 = sshll.u32 %s230, 4
          %s248 = int_to_ptr.vmem [resolvable:$true] %s247
          %s249 = sshll.u32 %s244, 4
          %253 = dma.hbm_to_vmem [thread:$0]  (%p240), %s246, %s249, %s248, %s227, 1664, 1664, 104
        $region36: #{sarcasm_mlp_forward.1} parent=31 // pred_fallthru
          _
      $region32: #{sarcasm_mlp_forward.1} parent=5 // pred_fallthru
        _
      %p254 = scmp.le.s32.totalorder 1, %s16
      %p255 = scmp.lt.s32.totalorder %s16, 3
      %p256 = pnand %p254, %p255
      %p257 = pneg %p256
      // Predicated region
      $region37: #{sarcasm_mlp_forward.1} parent=5 // pred_check
        _
      $region38: #{sarcasm_mlp_forward.1} parent=5 // pred_check_branch
        %259 = sbr.rel (%p256) target = $region40
      $region39: #{sarcasm_mlp_forward.1} parent=5 // pred_region
        %s260 = ssub.s32 %s16, 1
        %s261 = sand.u32 %s29, 1
        %s262 = scalar_lea.sflag [#allocation3], %s261
        %s263 = sand.u32 %s29, 1
        %s264 = smul.addr %s263, 416
        %s265 = scalar_lea.vmem [#allocation2], %s264
        // Predicated region
        $region41: #{sarcasm_mlp_forward.1} parent=39 // pred_check
          %p266 = pneg %p42
        $region42: #{sarcasm_mlp_forward.1} parent=39 // pred_check_branch
          %268 = sbr.rel (%p266) target = $region44
        $region43: #{sarcasm_mlp_forward.1} parent=39 // pred_region
          %270 = dma.done %s262, 6656
        $region44: #{sarcasm_mlp_forward.1} parent=39 // pred_fallthru
          _
        // Predicated region
        $region45: #{sarcasm_mlp_forward.1} parent=39 // pred_check
          %p271 = pneg %p63
        $region46: #{sarcasm_mlp_forward.1} parent=39 // pred_check_branch
          %273 = sbr.rel (%p271) target = $region48
        $region47: #{sarcasm_mlp_forward.1} parent=39 // pred_region
          %275 = dma.done [#allocation5], 49408
        $region48: #{sarcasm_mlp_forward.1} parent=39 // pred_fallthru
          _
        // Predicated region
        $region49: #{sarcasm_mlp_forward.1} parent=39 // pred_check
          %p276 = pneg %p84
        $region50: #{sarcasm_mlp_forward.1} parent=39 // pred_check_branch
          %278 = sbr.rel (%p276) target = $region52
        $region51: #{sarcasm_mlp_forward.1} parent=39 // pred_region
          %280 = dma.done [#allocation5], 64
        $region52: #{sarcasm_mlp_forward.1} parent=39 // pred_fallthru
          _
        // Predicated region
        $region53: #{sarcasm_mlp_forward.1} parent=39 // pred_check
          %p281 = pneg %p105
        $region54: #{sarcasm_mlp_forward.1} parent=39 // pred_check_branch
          %283 = sbr.rel (%p281) target = $region56
        $region55: #{sarcasm_mlp_forward.1} parent=39 // pred_region
          %285 = dma.done [#allocation8], 4096
        $region56: #{sarcasm_mlp_forward.1} parent=39 // pred_fallthru
          _
        // Predicated region
        $region57: #{sarcasm_mlp_forward.1} parent=39 // pred_check
          %p286 = pneg %p126
        $region58: #{sarcasm_mlp_forward.1} parent=39 // pred_check_branch
          %288 = sbr.rel (%p286) target = $region60
        $region59: #{sarcasm_mlp_forward.1} parent=39 // pred_region
          %290 = dma.done [#allocation8], 16
        $region60: #{sarcasm_mlp_forward.1} parent=39 // pred_fallthru
          _
        %s291 = sand.u32 %s29, 1
        %s292 = scalar_lea.sflag [#allocation3], %s291
        %s293 = sand.u32 %s29, 1
        %s294 = smul.addr %s293, 416
        %s295 = scalar_lea.vmem [#allocation2], %s294
        %p296 = pneg %p42
        %p297 = pneg %p39
        %p298 = pneg %p63
        %p299 = pneg %p60
        %p300 = pneg %p84
        %p301 = pneg %p81
        %p302 = pneg %p105
        %p303 = pneg %p102
        %p304 = pneg %p126
        %p305 = pneg %p123
        %p306 = pneg %p152
        %p307 = pneg %p149
        %s308 = sand.u32 %s139, 1
        %s309 = sand.u32 %s139, 1
        %s310 = smul.addr %s309, 16
        %s311 = scalar_lea.vmem [#allocation10], %s310
        %s312 = smul.u32 4, %s21
        %s313 = ssub.s32 6, %s312
        %p314 = scmp.lt.s32.totalorder %s313, 4
        %s315 = scalar_select %p314, %s313, 4
        %s316 = smul.u32 8, %s315
        %s317 = smul.u32 %s316, 13
        %s318 = smul.u32 4, %s21
        %s319 = ssub.s32 6, %s318
        %p320 = scmp.lt.s32.totalorder %s319, 4
        %s321 = scalar_select %p320, %s319, 4
        %s322 = smul.u32 4, %s321
        %v324 = vld [vmem:[%s265] sm:$0xff]
        %v325 = vld [vmem:[%s265 + $0x8] sm:$0xff]
        %v326 = vld [vmem:[%s265 + $0x10] sm:$0xff]
        %v327 = vld [vmem:[%s265 + $0x18] sm:$0xff]
        %v328 = vld [vmem:[%s265 + $0x20] sm:$0xff]
        %v329 = vld [vmem:[%s265 + $0x28] sm:$0xff]
        %v330 = vld [vmem:[%s265 + $0x30] sm:$0xff]
        %v331 = vld [vmem:[%s265 + $0x38] sm:$0xff]
        %v332 = vld [vmem:[%s265 + $0x40] sm:$0xff]
        %v333 = vld [vmem:[%s265 + $0x48] sm:$0xff]
        %v334 = vld [vmem:[%s265 + $0x50] sm:$0xff]
        %v335 = vld [vmem:[%s265 + $0x58] sm:$0xff]
        %v336 = vld [vmem:[%s265 + $0x60] sm:$0xff]
        %v337 = vld [vmem:[%s265 + $0x68] sm:$0xff]
        %v338 = vld [vmem:[%s265 + $0x70] sm:$0xff]
        %v339 = vld [vmem:[%s265 + $0x78] sm:$0xff]
        %v340 = vld [vmem:[%s265 + $0x80] sm:$0xff]
        %v341 = vld [vmem:[%s265 + $0x88] sm:$0xff]
        %v342 = vld [vmem:[%s265 + $0x90] sm:$0xff]
        %v343 = vld [vmem:[%s265 + $0x98] sm:$0xff]
        %v344 = vld [vmem:[%s265 + $0xa0] sm:$0xff]
        %v345 = vld [vmem:[%s265 + $0xa8] sm:$0xff]
        %v346 = vld [vmem:[%s265 + $0xb0] sm:$0xff]
        %v347 = vld [vmem:[%s265 + $0xb8] sm:$0xff]
        %v348 = vld [vmem:[%s265 + $0xc0] sm:$0xff]
        %v349 = vld [vmem:[%s265 + $0xc8] sm:$0xff]
        %v350 = vld [vmem:[%s265 + $0xd0] sm:$0xff]
        %v351 = vld [vmem:[%s265 + $0xd8] sm:$0xff]
        %v352 = vld [vmem:[%s265 + $0xe0] sm:$0xff]
        %v353 = vld [vmem:[%s265 + $0xe8] sm:$0xff]
        %v354 = vld [vmem:[%s265 + $0xf0] sm:$0xff]
        %v355 = vld [vmem:[%s265 + $0xf8] sm:$0xff]
        %v356 = vld [vmem:[%s265 + $0x100] sm:$0xff]
        %v357 = vld [vmem:[%s265 + $0x108] sm:$0xff]
        %v358 = vld [vmem:[%s265 + $0x110] sm:$0xff]
        %v359 = vld [vmem:[%s265 + $0x118] sm:$0xff]
        %v360 = vld [vmem:[%s265 + $0x120] sm:$0xff]
        %v361 = vld [vmem:[%s265 + $0x128] sm:$0xff]
        %v362 = vld [vmem:[%s265 + $0x130] sm:$0xff]
        %v363 = vld [vmem:[%s265 + $0x138] sm:$0xff]
        %v364 = vld [vmem:[%s265 + $0x140] sm:$0xff]
        %v365 = vld [vmem:[%s265 + $0x148] sm:$0xff]
        %v366 = vld [vmem:[%s265 + $0x150] sm:$0xff]
        %v367 = vld [vmem:[%s265 + $0x158] sm:$0xff]
        %v368 = vld [vmem:[%s265 + $0x160] sm:$0xff]
        %v369 = vld [vmem:[%s265 + $0x168] sm:$0xff]
        %v370 = vld [vmem:[%s265 + $0x170] sm:$0xff]
        %v371 = vld [vmem:[%s265 + $0x178] sm:$0xff]
        %v372 = vld [vmem:[%s265 + $0x180] sm:$0xff]
        %v373 = vld [vmem:[%s265 + $0x188] sm:$0xff]
        %v374 = vld [vmem:[%s265 + $0x190] sm:$0xff]
        %v375 = vld [vmem:[%s265 + $0x198] sm:$0xff]
        %v376 = vpack.c.bf16 %v337, %v324
        %v377 = vpack.c.bf16 %v338, %v325
        %v378 = vpack.c.bf16 %v339, %v326
        %v379 = vpack.c.bf16 %v340, %v327
        %v380 = vpack.c.bf16 %v341, %v328
        %v381 = vpack.c.bf16 %v342, %v329
        %v382 = vpack.c.bf16 %v343, %v330
        %v383 = vpack.c.bf16 %v344, %v331
        %v384 = vpack.c.bf16 %v345, %v332
        %v385 = vpack.c.bf16 %v346, %v333
        %v386 = vpack.c.bf16 %v347, %v334
        %v387 = vpack.c.bf16 %v348, %v335
        %v388 = vpack.c.bf16 %v349, %v336
        %v389 = vpack.c.bf16 %v363, %v350
        %v390 = vpack.c.bf16 %v364, %v351
        %v391 = vpack.c.bf16 %v365, %v352
        %v392 = vpack.c.bf16 %v366, %v353
        %v393 = vpack.c.bf16 %v367, %v354
        %v394 = vpack.c.bf16 %v368, %v355
        %v395 = vpack.c.bf16 %v369, %v356
        %v396 = vpack.c.bf16 %v370, %v357
        %v397 = vpack.c.bf16 %v371, %v358
        %v398 = vpack.c.bf16 %v372, %v359
        %v399 = vpack.c.bf16 %v373, %v360
        %v400 = vpack.c.bf16 %v374, %v361
        %v401 = vpack.c.bf16 %v375, %v362
        %v402 = vld [vmem:[#allocation4] sm:$0xff]
        %v403 = vld [vmem:[#allocation4 + $0x8] sm:$0xff]
        %v404 = vld [vmem:[#allocation4 + $0x10] sm:$0xff]
        %v405 = vld [vmem:[#allocation4 + $0x18] sm:$0xff]
        %v406 = vld [vmem:[#allocation4 + $0x20] sm:$0xff]
        %v407 = vld [vmem:[#allocation4 + $0x28] sm:$0xff]
        %v408 = vld [vmem:[#allocation4 + $0x30] sm:$0xff]
        %v409 = vld [vmem:[#allocation4 + $0x38] sm:$0xff]
        %v410 = vld [vmem:[#allocation4 + $0x40] sm:$0xff]
        %v411 = vld [vmem:[#allocation4 + $0x48] sm:$0xff]
        %v412 = vld [vmem:[#allocation4 + $0x50] sm:$0xff]
        %v413 = vld [vmem:[#allocation4 + $0x58] sm:$0xff]
        %v414 = vld [vmem:[#allocation4 + $0x60] sm:$0xff]
        %v415 = vld [vmem:[#allocation4 + $0x68] sm:$0xff]
        %v416 = vld [vmem:[#allocation4 + $0x70] sm:$0xff]
        %v417 = vld [vmem:[#allocation4 + $0x78] sm:$0xff]
        %v418 = vld [vmem:[#allocation4 + $0x80] sm:$0xff]
        %v419 = vld [vmem:[#allocation4 + $0x88] sm:$0xff]
        %v420 = vld [vmem:[#allocation4 + $0x90] sm:$0xff]
        %v421 = vld [vmem:[#allocation4 + $0x98] sm:$0xff]
        %v422 = vld [vmem:[#allocation4 + $0xa0] sm:$0xff]
        %v423 = vld [vmem:[#allocation4 + $0xa8] sm:$0xff]
        %v424 = vld [vmem:[#allocation4 + $0xb0] sm:$0xff]
        %v425 = vld [vmem:[#allocation4 + $0xb8] sm:$0xff]
        %v426 = vld [vmem:[#allocation4 + $0xc0] sm:$0xff]
        %v427 = vld [vmem:[#allocation4 + $0xc8] sm:$0xff]
        %v428 = vld [vmem:[#allocation4 + $0xd0] sm:$0xff]
        %v429 = vld [vmem:[#allocation4 + $0xd8] sm:$0xff]
        %v430 = vld [vmem:[#allocation4 + $0xe0] sm:$0xff]
        %v431 = vld [vmem:[#allocation4 + $0xe8] sm:$0xff]
        %v432 = vld [vmem:[#allocation4 + $0xf0] sm:$0xff]
        %v433 = vld [vmem:[#allocation4 + $0xf8] sm:$0xff]
        %v434 = vld [vmem:[#allocation4 + $0x100] sm:$0xff]
        %v435 = vld [vmem:[#allocation4 + $0x108] sm:$0xff]
        %v436 = vld [vmem:[#allocation4 + $0x110] sm:$0xff]
        %v437 = vld [vmem:[#allocation4 + $0x118] sm:$0xff]
        %v438 = vld [vmem:[#allocation4 + $0x120] sm:$0xff]
        %v439 = vld [vmem:[#allocation4 + $0x128] sm:$0xff]
        %v440 = vld [vmem:[#allocation4 + $0x130] sm:$0xff]
        %v441 = vld [vmem:[#allocation4 + $0x138] sm:$0xff]
        %v442 = vld [vmem:[#allocation4 + $0x140] sm:$0xff]
        %v443 = vld [vmem:[#allocation4 + $0x148] sm:$0xff]
        %v444 = vld [vmem:[#allocation4 + $0x150] sm:$0xff]
        %v445 = vld [vmem:[#allocation4 + $0x158] sm:$0xff]
        %v446 = vld [vmem:[#allocation4 + $0x160] sm:$0xff]
        %v447 = vld [vmem:[#allocation4 + $0x168] sm:$0xff]
        %v448 = vld [vmem:[#allocation4 + $0x170] sm:$0xff]
        %v449 = vld [vmem:[#allocation4 + $0x178] sm:$0xff]
        %v450 = vld [vmem:[#allocation4 + $0x180] sm:$0xff]
        %v451 = vld [vmem:[#allocation4 + $0x188] sm:$0xff]
        %v452 = vld [vmem:[#allocation4 + $0x190] sm:$0xff]
        %v453 = vld [vmem:[#allocation4 + $0x198] sm:$0xff]
        %v454 = vld [vmem:[#allocation4 + $0x1a0] sm:$0xff]
        %v455 = vld [vmem:[#allocation4 + $0x1a8] sm:$0xff]
        %v456 = vld [vmem:[#allocation4 + $0x1b0] sm:$0xff]
        %v457 = vld [vmem:[#allocation4 + $0x1b8] sm:$0xff]
        %v458 = vld [vmem:[#allocation4 + $0x1c0] sm:$0xff]
        %v459 = vld [vmem:[#allocation4 + $0x1c8] sm:$0xff]
        %v460 = vld [vmem:[#allocation4 + $0x1d0] sm:$0xff]
        %v461 = vld [vmem:[#allocation4 + $0x1d8] sm:$0xff]
        %v462 = vld [vmem:[#allocation4 + $0x1e0] sm:$0xff]
        %v463 = vld [vmem:[#allocation4 + $0x1e8] sm:$0xff]
        %v464 = vld [vmem:[#allocation4 + $0x1f0] sm:$0xff]
        %v465 = vld [vmem:[#allocation4 + $0x1f8] sm:$0xff]
        %v466 = vld [vmem:[#allocation4 + $0x200] sm:$0xff]
        %v467 = vld [vmem:[#allocation4 + $0x208] sm:$0xff]
        %v468 = vld [vmem:[#allocation4 + $0x210] sm:$0xff]
        %v469 = vld [vmem:[#allocation4 + $0x218] sm:$0xff]
        %v470 = vld [vmem:[#allocation4 + $0x220] sm:$0xff]
        %v471 = vld [vmem:[#allocation4 + $0x228] sm:$0xff]
        %v472 = vld [vmem:[#allocation4 + $0x230] sm:$0xff]
        %v473 = vld [vmem:[#allocation4 + $0x238] sm:$0xff]
        %v474 = vld [vmem:[#allocation4 + $0x240] sm:$0xff]
        %v475 = vld [vmem:[#allocation4 + $0x248] sm:$0xff]
        %v476 = vld [vmem:[#allocation4 + $0x250] sm:$0xff]
        %v477 = vld [vmem:[#allocation4 + $0x258] sm:$0xff]
        %v478 = vld [vmem:[#allocation4 + $0x260] sm:$0xff]
        %v479 = vld [vmem:[#allocation4 + $0x268] sm:$0xff]
        %v480 = vld [vmem:[#allocation4 + $0x270] sm:$0xff]
        %v481 = vld [vmem:[#allocation4 + $0x278] sm:$0xff]
        %v482 = vld [vmem:[#allocation4 + $0x280] sm:$0xff]
        %v483 = vld [vmem:[#allocation4 + $0x288] sm:$0xff]
        %v484 = vld [vmem:[#allocation4 + $0x290] sm:$0xff]
        %v485 = vld [vmem:[#allocation4 + $0x298] sm:$0xff]
        %v486 = vld [vmem:[#allocation4 + $0x2a0] sm:$0xff]
        %v487 = vld [vmem:[#allocation4 + $0x2a8] sm:$0xff]
        %v488 = vld [vmem:[#allocation4 + $0x2b0] sm:$0xff]
        %v489 = vld [vmem:[#allocation4 + $0x2b8] sm:$0xff]
        %v490 = vld [vmem:[#allocation4 + $0x2c0] sm:$0xff]
        %v491 = vld [vmem:[#allocation4 + $0x2c8] sm:$0xff]
        %v492 = vld [vmem:[#allocation4 + $0x2d0] sm:$0xff]
        %v493 = vld [vmem:[#allocation4 + $0x2d8] sm:$0xff]
        %v494 = vld [vmem:[#allocation4 + $0x2e0] sm:$0xff]
        %v495 = vld [vmem:[#allocation4 + $0x2e8] sm:$0xff]
        %v496 = vld [vmem:[#allocation4 + $0x2f0] sm:$0xff]
        %v497 = vld [vmem:[#allocation4 + $0x2f8] sm:$0xff]
        %v498 = vld [vmem:[#allocation4 + $0x300] sm:$0xff]
        %v499 = vld [vmem:[#allocation4 + $0x308] sm:$0xff]
        %v500 = vld [vmem:[#allocation4 + $0x310] sm:$0xff]
        %v501 = vld [vmem:[#allocation4 + $0x318] sm:$0xff]
        %v502 = vld [vmem:[#allocation4 + $0x320] sm:$0xff]
        %v503 = vld [vmem:[#allocation4 + $0x328] sm:$0xff]
        %v504 = vld [vmem:[#allocation4 + $0x330] sm:$0xff]
        %v505 = vld [vmem:[#allocation4 + $0x338] sm:$0xff]
        %v506 = vld [vmem:[#allocation4 + $0x340] sm:$0xff]
        %v507 = vld [vmem:[#allocation4 + $0x348] sm:$0xff]
        %v508 = vld [vmem:[#allocation4 + $0x350] sm:$0xff]
        %v509 = vld [vmem:[#allocation4 + $0x358] sm:$0xff]
        %v510 = vld [vmem:[#allocation4 + $0x360] sm:$0xff]
        %v511 = vld [vmem:[#allocation4 + $0x368] sm:$0xff]
        %v512 = vld [vmem:[#allocation4 + $0x370] sm:$0xff]
        %v513 = vld [vmem:[#allocation4 + $0x378] sm:$0xff]
        %v514 = vld [vmem:[#allocation4 + $0x380] sm:$0xff]
        %v515 = vld [vmem:[#allocation4 + $0x388] sm:$0xff]
        %v516 = vld [vmem:[#allocation4 + $0x390] sm:$0xff]
        %v517 = vld [vmem:[#allocation4 + $0x398] sm:$0xff]
        %v518 = vld [vmem:[#allocation4 + $0x3a0] sm:$0xff]
        %v519 = vld [vmem:[#allocation4 + $0x3a8] sm:$0xff]
        %v520 = vld [vmem:[#allocation4 + $0x3b0] sm:$0xff]
        %v521 = vld [vmem:[#allocation4 + $0x3b8] sm:$0xff]
        %v522 = vld [vmem:[#allocation4 + $0x3c0] sm:$0xff]
        %v523 = vld [vmem:[#allocation4 + $0x3c8] sm:$0xff]
        %v524 = vld [vmem:[#allocation4 + $0x3d0] sm:$0xff]
        %v525 = vld [vmem:[#allocation4 + $0x3d8] sm:$0xff]
        %v526 = vld [vmem:[#allocation4 + $0x3e0] sm:$0xff]
        %v527 = vld [vmem:[#allocation4 + $0x3e8] sm:$0xff]
        %v528 = vld [vmem:[#allocation4 + $0x3f0] sm:$0xff]
        %v529 = vld [vmem:[#allocation4 + $0x3f8] sm:$0xff]
        %v530 = vld [vmem:[#allocation4 + $0x400] sm:$0xff]
        %v531 = vld [vmem:[#allocation4 + $0x408] sm:$0xff]
        %v532 = vld [vmem:[#allocation4 + $0x410] sm:$0xff]
        %v533 = vld [vmem:[#allocation4 + $0x418] sm:$0xff]
        %v534 = vld [vmem:[#allocation4 + $0x420] sm:$0xff]
        %v535 = vld [vmem:[#allocation4 + $0x428] sm:$0xff]
        %v536 = vld [vmem:[#allocation4 + $0x430] sm:$0xff]
        %v537 = vld [vmem:[#allocation4 + $0x438] sm:$0xff]
        %v538 = vld [vmem:[#allocation4 + $0x440] sm:$0xff]
        %v539 = vld [vmem:[#allocation4 + $0x448] sm:$0xff]
        %v540 = vld [vmem:[#allocation4 + $0x450] sm:$0xff]
        %v541 = vld [vmem:[#allocation4 + $0x458] sm:$0xff]
        %v542 = vld [vmem:[#allocation4 + $0x460] sm:$0xff]
        %v543 = vld [vmem:[#allocation4 + $0x468] sm:$0xff]
        %v544 = vld [vmem:[#allocation4 + $0x470] sm:$0xff]
        %v545 = vld [vmem:[#allocation4 + $0x478] sm:$0xff]
        %v546 = vld [vmem:[#allocation4 + $0x480] sm:$0xff]
        %v547 = vld [vmem:[#allocation4 + $0x488] sm:$0xff]
        %v548 = vld [vmem:[#allocation4 + $0x490] sm:$0xff]
        %v549 = vld [vmem:[#allocation4 + $0x498] sm:$0xff]
        %v550 = vld [vmem:[#allocation4 + $0x4a0] sm:$0xff]
        %v551 = vld [vmem:[#allocation4 + $0x4a8] sm:$0xff]
        %v552 = vld [vmem:[#allocation4 + $0x4b0] sm:$0xff]
        %v553 = vld [vmem:[#allocation4 + $0x4b8] sm:$0xff]
        %v554 = vld [vmem:[#allocation4 + $0x4c0] sm:$0xff]
        %v555 = vld [vmem:[#allocation4 + $0x4c8] sm:$0xff]
        %v556 = vld [vmem:[#allocation4 + $0x4d0] sm:$0xff]
        %v557 = vld [vmem:[#allocation4 + $0x4d8] sm:$0xff]
        %v558 = vld [vmem:[#allocation4 + $0x4e0] sm:$0xff]
        %v559 = vld [vmem:[#allocation4 + $0x4e8] sm:$0xff]
        %v560 = vld [vmem:[#allocation4 + $0x4f0] sm:$0xff]
        %v561 = vld [vmem:[#allocation4 + $0x4f8] sm:$0xff]
        %v562 = vld [vmem:[#allocation4 + $0x500] sm:$0xff]
        %v563 = vld [vmem:[#allocation4 + $0x508] sm:$0xff]
        %v564 = vld [vmem:[#allocation4 + $0x510] sm:$0xff]
        %v565 = vld [vmem:[#allocation4 + $0x518] sm:$0xff]
        %v566 = vld [vmem:[#allocation4 + $0x520] sm:$0xff]
        %v567 = vld [vmem:[#allocation4 + $0x528] sm:$0xff]
        %v568 = vld [vmem:[#allocation4 + $0x530] sm:$0xff]
        %v569 = vld [vmem:[#allocation4 + $0x538] sm:$0xff]
        %v570 = vld [vmem:[#allocation4 + $0x540] sm:$0xff]
        %v571 = vld [vmem:[#allocation4 + $0x548] sm:$0xff]
        %v572 = vld [vmem:[#allocation4 + $0x550] sm:$0xff]
        %v573 = vld [vmem:[#allocation4 + $0x558] sm:$0xff]
        %v574 = vld [vmem:[#allocation4 + $0x560] sm:$0xff]
        %v575 = vld [vmem:[#allocation4 + $0x568] sm:$0xff]
        %v576 = vld [vmem:[#allocation4 + $0x570] sm:$0xff]
        %v577 = vld [vmem:[#allocation4 + $0x578] sm:$0xff]
        %v578 = vld [vmem:[#allocation4 + $0x580] sm:$0xff]
        %v579 = vld [vmem:[#allocation4 + $0x588] sm:$0xff]
        %v580 = vld [vmem:[#allocation4 + $0x590] sm:$0xff]
        %v581 = vld [vmem:[#allocation4 + $0x598] sm:$0xff]
        %v582 = vld [vmem:[#allocation4 + $0x5a0] sm:$0xff]
        %v583 = vld [vmem:[#allocation4 + $0x5a8] sm:$0xff]
        %v584 = vld [vmem:[#allocation4 + $0x5b0] sm:$0xff]
        %v585 = vld [vmem:[#allocation4 + $0x5b8] sm:$0xff]
        %v586 = vld [vmem:[#allocation4 + $0x5c0] sm:$0xff]
        %v587 = vld [vmem:[#allocation4 + $0x5c8] sm:$0xff]
        %v588 = vld [vmem:[#allocation4 + $0x5d0] sm:$0xff]
        %v589 = vld [vmem:[#allocation4 + $0x5d8] sm:$0xff]
        %v590 = vld [vmem:[#allocation4 + $0x5e0] sm:$0xff]
        %v591 = vld [vmem:[#allocation4 + $0x5e8] sm:$0xff]
        %v592 = vld [vmem:[#allocation4 + $0x5f0] sm:$0xff]
        %v593 = vld [vmem:[#allocation4 + $0x5f8] sm:$0xff]
        %v594 = vld [vmem:[#allocation4 + $0x600] sm:$0xff]
        %v595 = vld [vmem:[#allocation4 + $0x608] sm:$0xff]
        %v596 = vld [vmem:[#allocation4 + $0x610] sm:$0xff]
        %v597 = vld [vmem:[#allocation4 + $0x618] sm:$0xff]
        %v598 = vld [vmem:[#allocation4 + $0x620] sm:$0xff]
        %v599 = vld [vmem:[#allocation4 + $0x628] sm:$0xff]
        %v600 = vld [vmem:[#allocation4 + $0x630] sm:$0xff]
        %v601 = vld [vmem:[#allocation4 + $0x638] sm:$0xff]
        %v602 = vld [vmem:[#allocation4 + $0x640] sm:$0xff]
        %v603 = vld [vmem:[#allocation4 + $0x648] sm:$0xff]
        %v604 = vld [vmem:[#allocation4 + $0x650] sm:$0xff]
        %v605 = vld [vmem:[#allocation4 + $0x658] sm:$0xff]
        %v606 = vld [vmem:[#allocation4 + $0x660] sm:$0xff]
        %v607 = vld [vmem:[#allocation4 + $0x668] sm:$0xff]
        %v608 = vld [vmem:[#allocation4 + $0x670] sm:$0xff]
        %v609 = vld [vmem:[#allocation4 + $0x678] sm:$0xff]
        %v610 = vld [vmem:[#allocation4 + $0x680] sm:$0xff]
        %v611 = vld [vmem:[#allocation4 + $0x688] sm:$0xff]
        %v612 = vld [vmem:[#allocation4 + $0x690] sm:$0xff]
        %v613 = vld [vmem:[#allocation4 + $0x698] sm:$0xff]
        %v614 = vld [vmem:[#allocation4 + $0x6a0] sm:$0xff]
        %v615 = vld [vmem:[#allocation4 + $0x6a8] sm:$0xff]
        %v616 = vld [vmem:[#allocation4 + $0x6b0] sm:$0xff]
        %v617 = vld [vmem:[#allocation4 + $0x6b8] sm:$0xff]
        %v618 = vld [vmem:[#allocation4 + $0x6c0] sm:$0xff]
        %v619 = vld [vmem:[#allocation4 + $0x6c8] sm:$0xff]
        %v620 = vld [vmem:[#allocation4 + $0x6d0] sm:$0xff]
        %v621 = vld [vmem:[#allocation4 + $0x6d8] sm:$0xff]
        %v622 = vld [vmem:[#allocation4 + $0x6e0] sm:$0xff]
        %v623 = vld [vmem:[#allocation4 + $0x6e8] sm:$0xff]
        %v624 = vld [vmem:[#allocation4 + $0x6f0] sm:$0xff]
        %v625 = vld [vmem:[#allocation4 + $0x6f8] sm:$0xff]
        %v626 = vld [vmem:[#allocation4 + $0x700] sm:$0xff]
        %v627 = vld [vmem:[#allocation4 + $0x708] sm:$0xff]
        %v628 = vld [vmem:[#allocation4 + $0x710] sm:$0xff]
        %v629 = vld [vmem:[#allocation4 + $0x718] sm:$0xff]
        %v630 = vld [vmem:[#allocation4 + $0x720] sm:$0xff]
        %v631 = vld [vmem:[#allocation4 + $0x728] sm:$0xff]
        %v632 = vld [vmem:[#allocation4 + $0x730] sm:$0xff]
        %v633 = vld [vmem:[#allocation4 + $0x738] sm:$0xff]
        %v634 = vld [vmem:[#allocation4 + $0x740] sm:$0xff]
        %v635 = vld [vmem:[#allocation4 + $0x748] sm:$0xff]
        %v636 = vld [vmem:[#allocation4 + $0x750] sm:$0xff]
        %v637 = vld [vmem:[#allocation4 + $0x758] sm:$0xff]
        %v638 = vld [vmem:[#allocation4 + $0x760] sm:$0xff]
        %v639 = vld [vmem:[#allocation4 + $0x768] sm:$0xff]
        %v640 = vld [vmem:[#allocation4 + $0x770] sm:$0xff]
        %v641 = vld [vmem:[#allocation4 + $0x778] sm:$0xff]
        %v642 = vld [vmem:[#allocation4 + $0x780] sm:$0xff]
        %v643 = vld [vmem:[#allocation4 + $0x788] sm:$0xff]
        %v644 = vld [vmem:[#allocation4 + $0x790] sm:$0xff]
        %v645 = vld [vmem:[#allocation4 + $0x798] sm:$0xff]
        %v646 = vld [vmem:[#allocation4 + $0x7a0] sm:$0xff]
        %v647 = vld [vmem:[#allocation4 + $0x7a8] sm:$0xff]
        %v648 = vld [vmem:[#allocation4 + $0x7b0] sm:$0xff]
        %v649 = vld [vmem:[#allocation4 + $0x7b8] sm:$0xff]
        %v650 = vld [vmem:[#allocation4 + $0x7c0] sm:$0xff]
        %v651 = vld [vmem:[#allocation4 + $0x7c8] sm:$0xff]
        %v652 = vld [vmem:[#allocation4 + $0x7d0] sm:$0xff]
        %v653 = vld [vmem:[#allocation4 + $0x7d8] sm:$0xff]
        %v654 = vld [vmem:[#allocation4 + $0x7e0] sm:$0xff]
        %v655 = vld [vmem:[#allocation4 + $0x7e8] sm:$0xff]
        %v656 = vld [vmem:[#allocation4 + $0x7f0] sm:$0xff]
        %v657 = vld [vmem:[#allocation4 + $0x7f8] sm:$0xff]
        %v658 = vld [vmem:[#allocation4 + $0x800] sm:$0xff]
        %v659 = vld [vmem:[#allocation4 + $0x808] sm:$0xff]
        %v660 = vld [vmem:[#allocation4 + $0x810] sm:$0xff]
        %v661 = vld [vmem:[#allocation4 + $0x818] sm:$0xff]
        %v662 = vld [vmem:[#allocation4 + $0x820] sm:$0xff]
        %v663 = vld [vmem:[#allocation4 + $0x828] sm:$0xff]
        %v664 = vld [vmem:[#allocation4 + $0x830] sm:$0xff]
        %v665 = vld [vmem:[#allocation4 + $0x838] sm:$0xff]
        %v666 = vld [vmem:[#allocation4 + $0x840] sm:$0xff]
        %v667 = vld [vmem:[#allocation4 + $0x848] sm:$0xff]
        %v668 = vld [vmem:[#allocation4 + $0x850] sm:$0xff]
        %v669 = vld [vmem:[#allocation4 + $0x858] sm:$0xff]
        %v670 = vld [vmem:[#allocation4 + $0x860] sm:$0xff]
        %v671 = vld [vmem:[#allocation4 + $0x868] sm:$0xff]
        %v672 = vld [vmem:[#allocation4 + $0x870] sm:$0xff]
        %v673 = vld [vmem:[#allocation4 + $0x878] sm:$0xff]
        %v674 = vld [vmem:[#allocation4 + $0x880] sm:$0xff]
        %v675 = vld [vmem:[#allocation4 + $0x888] sm:$0xff]
        %v676 = vld [vmem:[#allocation4 + $0x890] sm:$0xff]
        %v677 = vld [vmem:[#allocation4 + $0x898] sm:$0xff]
        %v678 = vld [vmem:[#allocation4 + $0x8a0] sm:$0xff]
        %v679 = vld [vmem:[#allocation4 + $0x8a8] sm:$0xff]
        %v680 = vld [vmem:[#allocation4 + $0x8b0] sm:$0xff]
        %v681 = vld [vmem:[#allocation4 + $0x8b8] sm:$0xff]
        %v682 = vld [vmem:[#allocation4 + $0x8c0] sm:$0xff]
        %v683 = vld [vmem:[#allocation4 + $0x8c8] sm:$0xff]
        %v684 = vld [vmem:[#allocation4 + $0x8d0] sm:$0xff]
        %v685 = vld [vmem:[#allocation4 + $0x8d8] sm:$0xff]
        %v686 = vld [vmem:[#allocation4 + $0x8e0] sm:$0xff]
        %v687 = vld [vmem:[#allocation4 + $0x8e8] sm:$0xff]
        %v688 = vld [vmem:[#allocation4 + $0x8f0] sm:$0xff]
        %v689 = vld [vmem:[#allocation4 + $0x8f8] sm:$0xff]
        %v690 = vld [vmem:[#allocation4 + $0x900] sm:$0xff]
        %v691 = vld [vmem:[#allocation4 + $0x908] sm:$0xff]
        %v692 = vld [vmem:[#allocation4 + $0x910] sm:$0xff]
        %v693 = vld [vmem:[#allocation4 + $0x918] sm:$0xff]
        %v694 = vld [vmem:[#allocation4 + $0x920] sm:$0xff]
        %v695 = vld [vmem:[#allocation4 + $0x928] sm:$0xff]
        %v696 = vld [vmem:[#allocation4 + $0x930] sm:$0xff]
        %v697 = vld [vmem:[#allocation4 + $0x938] sm:$0xff]
        %v698 = vld [vmem:[#allocation4 + $0x940] sm:$0xff]
        %v699 = vld [vmem:[#allocation4 + $0x948] sm:$0xff]
        %v700 = vld [vmem:[#allocation4 + $0x950] sm:$0xff]
        %v701 = vld [vmem:[#allocation4 + $0x958] sm:$0xff]
        %v702 = vld [vmem:[#allocation4 + $0x960] sm:$0xff]
        %v703 = vld [vmem:[#allocation4 + $0x968] sm:$0xff]
        %v704 = vld [vmem:[#allocation4 + $0x970] sm:$0xff]
        %v705 = vld [vmem:[#allocation4 + $0x978] sm:$0xff]
        %v706 = vld [vmem:[#allocation4 + $0x980] sm:$0xff]
        %v707 = vld [vmem:[#allocation4 + $0x988] sm:$0xff]
        %v708 = vld [vmem:[#allocation4 + $0x990] sm:$0xff]
        %v709 = vld [vmem:[#allocation4 + $0x998] sm:$0xff]
        %v710 = vld [vmem:[#allocation4 + $0x9a0] sm:$0xff]
        %v711 = vld [vmem:[#allocation4 + $0x9a8] sm:$0xff]
        %v712 = vld [vmem:[#allocation4 + $0x9b0] sm:$0xff]
        %v713 = vld [vmem:[#allocation4 + $0x9b8] sm:$0xff]
        %v714 = vld [vmem:[#allocation4 + $0x9c0] sm:$0xff]
        %v715 = vld [vmem:[#allocation4 + $0x9c8] sm:$0xff]
        %v716 = vld [vmem:[#allocation4 + $0x9d0] sm:$0xff]
        %v717 = vld [vmem:[#allocation4 + $0x9d8] sm:$0xff]
        %v718 = vld [vmem:[#allocation4 + $0x9e0] sm:$0xff]
        %v719 = vld [vmem:[#allocation4 + $0x9e8] sm:$0xff]
        %v720 = vld [vmem:[#allocation4 + $0x9f0] sm:$0xff]
        %v721 = vld [vmem:[#allocation4 + $0x9f8] sm:$0xff]
        %v722 = vld [vmem:[#allocation4 + $0xa00] sm:$0xff]
        %v723 = vld [vmem:[#allocation4 + $0xa08] sm:$0xff]
        %v724 = vld [vmem:[#allocation4 + $0xa10] sm:$0xff]
        %v725 = vld [vmem:[#allocation4 + $0xa18] sm:$0xff]
        %v726 = vld [vmem:[#allocation4 + $0xa20] sm:$0xff]
        %v727 = vld [vmem:[#allocation4 + $0xa28] sm:$0xff]
        %v728 = vld [vmem:[#allocation4 + $0xa30] sm:$0xff]
        %v729 = vld [vmem:[#allocation4 + $0xa38] sm:$0xff]
        %v730 = vld [vmem:[#allocation4 + $0xa40] sm:$0xff]
        %v731 = vld [vmem:[#allocation4 + $0xa48] sm:$0xff]
        %v732 = vld [vmem:[#allocation4 + $0xa50] sm:$0xff]
        %v733 = vld [vmem:[#allocation4 + $0xa58] sm:$0xff]
        %v734 = vld [vmem:[#allocation4 + $0xa60] sm:$0xff]
        %v735 = vld [vmem:[#allocation4 + $0xa68] sm:$0xff]
        %v736 = vld [vmem:[#allocation4 + $0xa70] sm:$0xff]
        %v737 = vld [vmem:[#allocation4 + $0xa78] sm:$0xff]
        %v738 = vld [vmem:[#allocation4 + $0xa80] sm:$0xff]
        %v739 = vld [vmem:[#allocation4 + $0xa88] sm:$0xff]
        %v740 = vld [vmem:[#allocation4 + $0xa90] sm:$0xff]
        %v741 = vld [vmem:[#allocation4 + $0xa98] sm:$0xff]
        %v742 = vld [vmem:[#allocation4 + $0xaa0] sm:$0xff]
        %v743 = vld [vmem:[#allocation4 + $0xaa8] sm:$0xff]
        %v744 = vld [vmem:[#allocation4 + $0xab0] sm:$0xff]
        %v745 = vld [vmem:[#allocation4 + $0xab8] sm:$0xff]
        %v746 = vld [vmem:[#allocation4 + $0xac0] sm:$0xff]
        %v747 = vld [vmem:[#allocation4 + $0xac8] sm:$0xff]
        %v748 = vld [vmem:[#allocation4 + $0xad0] sm:$0xff]
        %v749 = vld [vmem:[#allocation4 + $0xad8] sm:$0xff]
        %v750 = vld [vmem:[#allocation4 + $0xae0] sm:$0xff]
        %v751 = vld [vmem:[#allocation4 + $0xae8] sm:$0xff]
        %v752 = vld [vmem:[#allocation4 + $0xaf0] sm:$0xff]
        %v753 = vld [vmem:[#allocation4 + $0xaf8] sm:$0xff]
        %v754 = vld [vmem:[#allocation4 + $0xb00] sm:$0xff]
        %v755 = vld [vmem:[#allocation4 + $0xb08] sm:$0xff]
        %v756 = vld [vmem:[#allocation4 + $0xb10] sm:$0xff]
        %v757 = vld [vmem:[#allocation4 + $0xb18] sm:$0xff]
        %v758 = vld [vmem:[#allocation4 + $0xb20] sm:$0xff]
        %v759 = vld [vmem:[#allocation4 + $0xb28] sm:$0xff]
        %v760 = vld [vmem:[#allocation4 + $0xb30] sm:$0xff]
        %v761 = vld [vmem:[#allocation4 + $0xb38] sm:$0xff]
        %v762 = vld [vmem:[#allocation4 + $0xb40] sm:$0xff]
        %v763 = vld [vmem:[#allocation4 + $0xb48] sm:$0xff]
        %v764 = vld [vmem:[#allocation4 + $0xb50] sm:$0xff]
        %v765 = vld [vmem:[#allocation4 + $0xb58] sm:$0xff]
        %v766 = vld [vmem:[#allocation4 + $0xb60] sm:$0xff]
        %v767 = vld [vmem:[#allocation4 + $0xb68] sm:$0xff]
        %v768 = vld [vmem:[#allocation4 + $0xb70] sm:$0xff]
        %v769 = vld [vmem:[#allocation4 + $0xb78] sm:$0xff]
        %v770 = vld [vmem:[#allocation4 + $0xb80] sm:$0xff]
        %v771 = vld [vmem:[#allocation4 + $0xb88] sm:$0xff]
        %v772 = vld [vmem:[#allocation4 + $0xb90] sm:$0xff]
        %v773 = vld [vmem:[#allocation4 + $0xb98] sm:$0xff]
        %v774 = vld [vmem:[#allocation4 + $0xba0] sm:$0xff]
        %v775 = vld [vmem:[#allocation4 + $0xba8] sm:$0xff]
        %v776 = vld [vmem:[#allocation4 + $0xbb0] sm:$0xff]
        %v777 = vld [vmem:[#allocation4 + $0xbb8] sm:$0xff]
        %v778 = vld [vmem:[#allocation4 + $0xbc0] sm:$0xff]
        %v779 = vld [vmem:[#allocation4 + $0xbc8] sm:$0xff]
        %v780 = vld [vmem:[#allocation4 + $0xbd0] sm:$0xff]
        %v781 = vld [vmem:[#allocation4 + $0xbd8] sm:$0xff]
        %v782 = vld [vmem:[#allocation4 + $0xbe0] sm:$0xff]
        %v783 = vld [vmem:[#allocation4 + $0xbe8] sm:$0xff]
        %v784 = vld [vmem:[#allocation4 + $0xbf0] sm:$0xff]
        %v785 = vld [vmem:[#allocation4 + $0xbf8] sm:$0xff]
        %v786 = vld [vmem:[#allocation4 + $0xc00] sm:$0x33]
        %v787 = vld [vmem:[#allocation4 + $0xc08] sm:$0x33]
        %v788 = vld [vmem:[#allocation6] sm:$0xf]
        %v790 = vperm.slane %v788, 0
        %v791 = vperm.slane %v788, 1
        %v792 = vperm.slane %v788, 2
        %v793 = vperm.slane %v788, 3
        %v1184 = vunpack.c.l.b16 %v402
        %v1185 = vunpack.c.h.b16 %v402
        %v1186 = vunpack.c.l.b16 %v403
        %v1187 = vunpack.c.h.b16 %v403
        %v1188 = vunpack.c.l.b16 %v404
        %v1189 = vunpack.c.h.b16 %v404
        %v1190 = vunpack.c.l.b16 %v405
        %v1191 = vunpack.c.h.b16 %v405
        %v1192 = vunpack.c.l.b16 %v406
        %v1193 = vunpack.c.h.b16 %v406
        %v1194 = vunpack.c.l.b16 %v407
        %v1195 = vunpack.c.h.b16 %v407
        %v1196 = vunpack.c.l.b16 %v408
        %v1197 = vunpack.c.h.b16 %v408
        %v1198 = vunpack.c.l.b16 %v409
        %v1199 = vunpack.c.h.b16 %v409
        %v1200 = vunpack.c.l.b16 %v410
        %v1201 = vunpack.c.h.b16 %v410
        %v1202 = vunpack.c.l.b16 %v411
        %v1203 = vunpack.c.h.b16 %v411
        %v1204 = vunpack.c.l.b16 %v412
        %v1205 = vunpack.c.h.b16 %v412
        %v1206 = vunpack.c.l.b16 %v413
        %v1207 = vunpack.c.h.b16 %v413
        %v1208 = vunpack.c.l.b16 %v414
        %v1209 = vunpack.c.h.b16 %v414
        %v1210 = vunpack.c.l.b16 %v415
        %v1211 = vunpack.c.h.b16 %v415
        %v1212 = vunpack.c.l.b16 %v416
        %v1213 = vunpack.c.h.b16 %v416
        %v1214 = vunpack.c.l.b16 %v417
        %v1215 = vunpack.c.h.b16 %v417
        %v1216 = vunpack.c.l.b16 %v418
        %v1217 = vunpack.c.h.b16 %v418
        %v1218 = vunpack.c.l.b16 %v419
        %v1219 = vunpack.c.h.b16 %v419
        %v1220 = vunpack.c.l.b16 %v420
        %v1221 = vunpack.c.h.b16 %v420
        %v1222 = vunpack.c.l.b16 %v421
        %v1223 = vunpack.c.h.b16 %v421
        %v1224 = vunpack.c.l.b16 %v422
        %v1225 = vunpack.c.h.b16 %v422
        %v1226 = vunpack.c.l.b16 %v423
        %v1227 = vunpack.c.h.b16 %v423
        %v1228 = vunpack.c.l.b16 %v424
        %v1229 = vunpack.c.h.b16 %v424
        %v1230 = vunpack.c.l.b16 %v425
        %v1231 = vunpack.c.h.b16 %v425
        %v1232 = vunpack.c.l.b16 %v426
        %v1233 = vunpack.c.h.b16 %v426
        %v1234 = vunpack.c.l.b16 %v427
        %v1235 = vunpack.c.h.b16 %v427
        %v1236 = vunpack.c.l.b16 %v428
        %v1237 = vunpack.c.h.b16 %v428
        %v1238 = vunpack.c.l.b16 %v429
        %v1239 = vunpack.c.h.b16 %v429
        %v1240 = vunpack.c.l.b16 %v430
        %v1241 = vunpack.c.h.b16 %v430
        %v1242 = vunpack.c.l.b16 %v431
        %v1243 = vunpack.c.h.b16 %v431
        %v1244 = vunpack.c.l.b16 %v432
        %v1245 = vunpack.c.h.b16 %v432
        %v1246 = vunpack.c.l.b16 %v433
        %v1247 = vunpack.c.h.b16 %v433
        %v1248 = vunpack.c.l.b16 %v434
        %v1249 = vunpack.c.h.b16 %v434
        %v1250 = vunpack.c.l.b16 %v435
        %v1251 = vunpack.c.h.b16 %v435
        %v1252 = vunpack.c.l.b16 %v436
        %v1253 = vunpack.c.h.b16 %v436
        %v1254 = vunpack.c.l.b16 %v437
        %v1255 = vunpack.c.h.b16 %v437
        %v1256 = vunpack.c.l.b16 %v438
        %v1257 = vunpack.c.h.b16 %v438
        %v1258 = vunpack.c.l.b16 %v439
        %v1259 = vunpack.c.h.b16 %v439
        %v1260 = vunpack.c.l.b16 %v440
        %v1261 = vunpack.c.h.b16 %v440
        %v1262 = vunpack.c.l.b16 %v441
        %v1263 = vunpack.c.h.b16 %v441
        %v1264 = vunpack.c.l.b16 %v442
        %v1265 = vunpack.c.h.b16 %v442
        %v1266 = vunpack.c.l.b16 %v443
        %v1267 = vunpack.c.h.b16 %v443
        %v1268 = vunpack.c.l.b16 %v444
        %v1269 = vunpack.c.h.b16 %v444
        %v1270 = vunpack.c.l.b16 %v445
        %v1271 = vunpack.c.h.b16 %v445
        %v1272 = vunpack.c.l.b16 %v446
        %v1273 = vunpack.c.h.b16 %v446
        %v1274 = vunpack.c.l.b16 %v447
        %v1275 = vunpack.c.h.b16 %v447
        %v1276 = vunpack.c.l.b16 %v448
        %v1277 = vunpack.c.h.b16 %v448
        %v1278 = vunpack.c.l.b16 %v449
        %v1279 = vunpack.c.h.b16 %v449
        %v1280 = vunpack.c.l.b16 %v450
        %v1281 = vunpack.c.h.b16 %v450
        %v1282 = vunpack.c.l.b16 %v451
        %v1283 = vunpack.c.h.b16 %v451
        %v1284 = vunpack.c.l.b16 %v452
        %v1285 = vunpack.c.h.b16 %v452
        %v1286 = vunpack.c.l.b16 %v453
        %v1287 = vunpack.c.h.b16 %v453
        %v1288 = vunpack.c.l.b16 %v454
        %v1289 = vunpack.c.h.b16 %v454
        %v1290 = vunpack.c.l.b16 %v455
        %v1291 = vunpack.c.h.b16 %v455
        %v1292 = vunpack.c.l.b16 %v456
        %v1293 = vunpack.c.h.b16 %v456
        %v1294 = vunpack.c.l.b16 %v457
        %v1295 = vunpack.c.h.b16 %v457
        %v1296 = vunpack.c.l.b16 %v458
        %v1297 = vunpack.c.h.b16 %v458
        %v1298 = vunpack.c.l.b16 %v459
        %v1299 = vunpack.c.h.b16 %v459
        %v1300 = vunpack.c.l.b16 %v460
        %v1301 = vunpack.c.h.b16 %v460
        %v1302 = vunpack.c.l.b16 %v461
        %v1303 = vunpack.c.h.b16 %v461
        %v1304 = vunpack.c.l.b16 %v462
        %v1305 = vunpack.c.h.b16 %v462
        %v1306 = vunpack.c.l.b16 %v463
        %v1307 = vunpack.c.h.b16 %v463
        %v1308 = vunpack.c.l.b16 %v464
        %v1309 = vunpack.c.h.b16 %v464
        %v1310 = vunpack.c.l.b16 %v465
        %v1311 = vunpack.c.h.b16 %v465
        %v1312 = vunpack.c.l.b16 %v466
        %v1313 = vunpack.c.h.b16 %v466
        %v1314 = vunpack.c.l.b16 %v467
        %v1315 = vunpack.c.h.b16 %v467
        %v1316 = vunpack.c.l.b16 %v468
        %v1317 = vunpack.c.h.b16 %v468
        %v1318 = vunpack.c.l.b16 %v469
        %v1319 = vunpack.c.h.b16 %v469
        %v1320 = vunpack.c.l.b16 %v470
        %v1321 = vunpack.c.h.b16 %v470
        %v1322 = vunpack.c.l.b16 %v471
        %v1323 = vunpack.c.h.b16 %v471
        %v1324 = vunpack.c.l.b16 %v472
        %v1325 = vunpack.c.h.b16 %v472
        %v1326 = vunpack.c.l.b16 %v473
        %v1327 = vunpack.c.h.b16 %v473
        %v1328 = vunpack.c.l.b16 %v474
        %v1329 = vunpack.c.h.b16 %v474
        %v1330 = vunpack.c.l.b16 %v475
        %v1331 = vunpack.c.h.b16 %v475
        %v1332 = vunpack.c.l.b16 %v476
        %v1333 = vunpack.c.h.b16 %v476
        %v1334 = vunpack.c.l.b16 %v477
        %v1335 = vunpack.c.h.b16 %v477
        %v1336 = vunpack.c.l.b16 %v478
        %v1337 = vunpack.c.h.b16 %v478
        %v1338 = vunpack.c.l.b16 %v479
        %v1339 = vunpack.c.h.b16 %v479
        %v1340 = vunpack.c.l.b16 %v480
        %v1341 = vunpack.c.h.b16 %v480
        %v1342 = vunpack.c.l.b16 %v481
        %v1343 = vunpack.c.h.b16 %v481
        %v1344 = vunpack.c.l.b16 %v482
        %v1345 = vunpack.c.h.b16 %v482
        %v1346 = vunpack.c.l.b16 %v483
        %v1347 = vunpack.c.h.b16 %v483
        %v1348 = vunpack.c.l.b16 %v484
        %v1349 = vunpack.c.h.b16 %v484
        %v1350 = vunpack.c.l.b16 %v485
        %v1351 = vunpack.c.h.b16 %v485
        %v1352 = vunpack.c.l.b16 %v486
        %v1353 = vunpack.c.h.b16 %v486
        %v1354 = vunpack.c.l.b16 %v487
        %v1355 = vunpack.c.h.b16 %v487
        %v1356 = vunpack.c.l.b16 %v488
        %v1357 = vunpack.c.h.b16 %v488
        %v1358 = vunpack.c.l.b16 %v489
        %v1359 = vunpack.c.h.b16 %v489
        %v1360 = vunpack.c.l.b16 %v490
        %v1361 = vunpack.c.h.b16 %v490
        %v1362 = vunpack.c.l.b16 %v491
        %v1363 = vunpack.c.h.b16 %v491
        %v1364 = vunpack.c.l.b16 %v492
        %v1365 = vunpack.c.h.b16 %v492
        %v1366 = vunpack.c.l.b16 %v493
        %v1367 = vunpack.c.h.b16 %v493
        %v1368 = vunpack.c.l.b16 %v494
        %v1369 = vunpack.c.h.b16 %v494
        %v1370 = vunpack.c.l.b16 %v495
        %v1371 = vunpack.c.h.b16 %v495
        %v1372 = vunpack.c.l.b16 %v496
        %v1373 = vunpack.c.h.b16 %v496
        %v1374 = vunpack.c.l.b16 %v497
        %v1375 = vunpack.c.h.b16 %v497
        %v1376 = vunpack.c.l.b16 %v498
        %v1377 = vunpack.c.h.b16 %v498
        %v1378 = vunpack.c.l.b16 %v499
        %v1379 = vunpack.c.h.b16 %v499
        %v1380 = vunpack.c.l.b16 %v500
        %v1381 = vunpack.c.h.b16 %v500
        %v1382 = vunpack.c.l.b16 %v501
        %v1383 = vunpack.c.h.b16 %v501
        %v1384 = vunpack.c.l.b16 %v502
        %v1385 = vunpack.c.h.b16 %v502
        %v1386 = vunpack.c.l.b16 %v503
        %v1387 = vunpack.c.h.b16 %v503
        %v1388 = vunpack.c.l.b16 %v504
        %v1389 = vunpack.c.h.b16 %v504
        %v1390 = vunpack.c.l.b16 %v505
        %v1391 = vunpack.c.h.b16 %v505
        %v1392 = vunpack.c.l.b16 %v506
        %v1393 = vunpack.c.h.b16 %v506
        %v1394 = vunpack.c.l.b16 %v507
        %v1395 = vunpack.c.h.b16 %v507
        %v1396 = vunpack.c.l.b16 %v508
        %v1397 = vunpack.c.h.b16 %v508
        %v1398 = vunpack.c.l.b16 %v509
        %v1399 = vunpack.c.h.b16 %v509
        %v1400 = vunpack.c.l.b16 %v510
        %v1401 = vunpack.c.h.b16 %v510
        %v1402 = vunpack.c.l.b16 %v511
        %v1403 = vunpack.c.h.b16 %v511
        %v1404 = vunpack.c.l.b16 %v512
        %v1405 = vunpack.c.h.b16 %v512
        %v1406 = vunpack.c.l.b16 %v513
        %v1407 = vunpack.c.h.b16 %v513
        %v1408 = vunpack.c.l.b16 %v514
        %v1409 = vunpack.c.h.b16 %v514
        %v1410 = vunpack.c.l.b16 %v515
        %v1411 = vunpack.c.h.b16 %v515
        %v1412 = vunpack.c.l.b16 %v516
        %v1413 = vunpack.c.h.b16 %v516
        %v1414 = vunpack.c.l.b16 %v517
        %v1415 = vunpack.c.h.b16 %v517
        %v1416 = vunpack.c.l.b16 %v518
        %v1417 = vunpack.c.h.b16 %v518
        %v1418 = vunpack.c.l.b16 %v519
        %v1419 = vunpack.c.h.b16 %v519
        %v1420 = vunpack.c.l.b16 %v520
        %v1421 = vunpack.c.h.b16 %v520
        %v1422 = vunpack.c.l.b16 %v521
        %v1423 = vunpack.c.h.b16 %v521
        %v1424 = vunpack.c.l.b16 %v522
        %v1425 = vunpack.c.h.b16 %v522
        %v1426 = vunpack.c.l.b16 %v523
        %v1427 = vunpack.c.h.b16 %v523
        %v1428 = vunpack.c.l.b16 %v524
        %v1429 = vunpack.c.h.b16 %v524
        %v1430 = vunpack.c.l.b16 %v525
        %v1431 = vunpack.c.h.b16 %v525
        %v1432 = vunpack.c.l.b16 %v526
        %v1433 = vunpack.c.h.b16 %v526
        %v1434 = vunpack.c.l.b16 %v527
        %v1435 = vunpack.c.h.b16 %v527
        %v1436 = vunpack.c.l.b16 %v528
        %v1437 = vunpack.c.h.b16 %v528
        %v1438 = vunpack.c.l.b16 %v529
        %v1439 = vunpack.c.h.b16 %v529
        %v1440 = vunpack.c.l.b16 %v530
        %v1441 = vunpack.c.h.b16 %v530
        %v1442 = vunpack.c.l.b16 %v531
        %v1443 = vunpack.c.h.b16 %v531
        %v1444 = vunpack.c.l.b16 %v532
        %v1445 = vunpack.c.h.b16 %v532
        %v1446 = vunpack.c.l.b16 %v533
        %v1447 = vunpack.c.h.b16 %v533
        %v1448 = vunpack.c.l.b16 %v534
        %v1449 = vunpack.c.h.b16 %v534
        %v1450 = vunpack.c.l.b16 %v535
        %v1451 = vunpack.c.h.b16 %v535
        %v1452 = vunpack.c.l.b16 %v536
        %v1453 = vunpack.c.h.b16 %v536
        %v1454 = vunpack.c.l.b16 %v537
        %v1455 = vunpack.c.h.b16 %v537
        %v1456 = vunpack.c.l.b16 %v538
        %v1457 = vunpack.c.h.b16 %v538
        %v1458 = vunpack.c.l.b16 %v539
        %v1459 = vunpack.c.h.b16 %v539
        %v1460 = vunpack.c.l.b16 %v540
        %v1461 = vunpack.c.h.b16 %v540
        %v1462 = vunpack.c.l.b16 %v541
        %v1463 = vunpack.c.h.b16 %v541
        %v1464 = vunpack.c.l.b16 %v542
        %v1465 = vunpack.c.h.b16 %v542
        %v1466 = vunpack.c.l.b16 %v543
        %v1467 = vunpack.c.h.b16 %v543
        %v1468 = vunpack.c.l.b16 %v544
        %v1469 = vunpack.c.h.b16 %v544
        %v1470 = vunpack.c.l.b16 %v545
        %v1471 = vunpack.c.h.b16 %v545
        %v1472 = vunpack.c.l.b16 %v546
        %v1473 = vunpack.c.h.b16 %v546
        %v1474 = vunpack.c.l.b16 %v547
        %v1475 = vunpack.c.h.b16 %v547
        %v1476 = vunpack.c.l.b16 %v548
        %v1477 = vunpack.c.h.b16 %v548
        %v1478 = vunpack.c.l.b16 %v549
        %v1479 = vunpack.c.h.b16 %v549
        %v1480 = vunpack.c.l.b16 %v550
        %v1481 = vunpack.c.h.b16 %v550
        %v1482 = vunpack.c.l.b16 %v551
        %v1483 = vunpack.c.h.b16 %v551
        %v1484 = vunpack.c.l.b16 %v552
        %v1485 = vunpack.c.h.b16 %v552
        %v1486 = vunpack.c.l.b16 %v553
        %v1487 = vunpack.c.h.b16 %v553
        %v1488 = vunpack.c.l.b16 %v554
        %v1489 = vunpack.c.h.b16 %v554
        %v1490 = vunpack.c.l.b16 %v555
        %v1491 = vunpack.c.h.b16 %v555
        %v1492 = vunpack.c.l.b16 %v556
        %v1493 = vunpack.c.h.b16 %v556
        %v1494 = vunpack.c.l.b16 %v557
        %v1495 = vunpack.c.h.b16 %v557
        %v1496 = vunpack.c.l.b16 %v558
        %v1497 = vunpack.c.h.b16 %v558
        %v1498 = vunpack.c.l.b16 %v559
        %v1499 = vunpack.c.h.b16 %v559
        %v1500 = vunpack.c.l.b16 %v560
        %v1501 = vunpack.c.h.b16 %v560
        %v1502 = vunpack.c.l.b16 %v561
        %v1503 = vunpack.c.h.b16 %v561
        %v1504 = vunpack.c.l.b16 %v562
        %v1505 = vunpack.c.h.b16 %v562
        %v1506 = vunpack.c.l.b16 %v563
        %v1507 = vunpack.c.h.b16 %v563
        %v1508 = vunpack.c.l.b16 %v564
        %v1509 = vunpack.c.h.b16 %v564
        %v1510 = vunpack.c.l.b16 %v565
        %v1511 = vunpack.c.h.b16 %v565
        %v1512 = vunpack.c.l.b16 %v566
        %v1513 = vunpack.c.h.b16 %v566
        %v1514 = vunpack.c.l.b16 %v567
        %v1515 = vunpack.c.h.b16 %v567
        %v1516 = vunpack.c.l.b16 %v568
        %v1517 = vunpack.c.h.b16 %v568
        %v1518 = vunpack.c.l.b16 %v569
        %v1519 = vunpack.c.h.b16 %v569
        %v1520 = vunpack.c.l.b16 %v570
        %v1521 = vunpack.c.h.b16 %v570
        %v1522 = vunpack.c.l.b16 %v571
        %v1523 = vunpack.c.h.b16 %v571
        %v1524 = vunpack.c.l.b16 %v572
        %v1525 = vunpack.c.h.b16 %v572
        %v1526 = vunpack.c.l.b16 %v573
        %v1527 = vunpack.c.h.b16 %v573
        %v1528 = vunpack.c.l.b16 %v574
        %v1529 = vunpack.c.h.b16 %v574
        %v1530 = vunpack.c.l.b16 %v575
        %v1531 = vunpack.c.h.b16 %v575
        %v1532 = vunpack.c.l.b16 %v576
        %v1533 = vunpack.c.h.b16 %v576
        %v1534 = vunpack.c.l.b16 %v577
        %v1535 = vunpack.c.h.b16 %v577
        %v1536 = vunpack.c.l.b16 %v578
        %v1537 = vunpack.c.h.b16 %v578
        %v1538 = vunpack.c.l.b16 %v579
        %v1539 = vunpack.c.h.b16 %v579
        %v1540 = vunpack.c.l.b16 %v580
        %v1541 = vunpack.c.h.b16 %v580
        %v1542 = vunpack.c.l.b16 %v581
        %v1543 = vunpack.c.h.b16 %v581
        %v1544 = vunpack.c.l.b16 %v582
        %v1545 = vunpack.c.h.b16 %v582
        %v1546 = vunpack.c.l.b16 %v583
        %v1547 = vunpack.c.h.b16 %v583
        %v1548 = vunpack.c.l.b16 %v584
        %v1549 = vunpack.c.h.b16 %v584
        %v1550 = vunpack.c.l.b16 %v585
        %v1551 = vunpack.c.h.b16 %v585
        %v1552 = vunpack.c.l.b16 %v586
        %v1553 = vunpack.c.h.b16 %v586
        %v1554 = vunpack.c.l.b16 %v587
        %v1555 = vunpack.c.h.b16 %v587
        %v1556 = vunpack.c.l.b16 %v588
        %v1557 = vunpack.c.h.b16 %v588
        %v1558 = vunpack.c.l.b16 %v589
        %v1559 = vunpack.c.h.b16 %v589
        %v1560 = vunpack.c.l.b16 %v590
        %v1561 = vunpack.c.h.b16 %v590
        %v1562 = vunpack.c.l.b16 %v591
        %v1563 = vunpack.c.h.b16 %v591
        %v1564 = vunpack.c.l.b16 %v592
        %v1565 = vunpack.c.h.b16 %v592
        %v1566 = vunpack.c.l.b16 %v593
        %v1567 = vunpack.c.h.b16 %v593
        %v1568 = vunpack.c.l.b16 %v594
        %v1569 = vunpack.c.h.b16 %v594
        %v1570 = vunpack.c.l.b16 %v595
        %v1571 = vunpack.c.h.b16 %v595
        %v1572 = vunpack.c.l.b16 %v596
        %v1573 = vunpack.c.h.b16 %v596
        %v1574 = vunpack.c.l.b16 %v597
        %v1575 = vunpack.c.h.b16 %v597
        %v1576 = vunpack.c.l.b16 %v598
        %v1577 = vunpack.c.h.b16 %v598
        %v1578 = vunpack.c.l.b16 %v599
        %v1579 = vunpack.c.h.b16 %v599
        %v1580 = vunpack.c.l.b16 %v600
        %v1581 = vunpack.c.h.b16 %v600
        %v1582 = vunpack.c.l.b16 %v601
        %v1583 = vunpack.c.h.b16 %v601
        %v1584 = vunpack.c.l.b16 %v602
        %v1585 = vunpack.c.h.b16 %v602
        %v1586 = vunpack.c.l.b16 %v603
        %v1587 = vunpack.c.h.b16 %v603
        %v1588 = vunpack.c.l.b16 %v604
        %v1589 = vunpack.c.h.b16 %v604
        %v1590 = vunpack.c.l.b16 %v605
        %v1591 = vunpack.c.h.b16 %v605
        %v1592 = vunpack.c.l.b16 %v606
        %v1593 = vunpack.c.h.b16 %v606
        %v1594 = vunpack.c.l.b16 %v607
        %v1595 = vunpack.c.h.b16 %v607
        %v1596 = vunpack.c.l.b16 %v608
        %v1597 = vunpack.c.h.b16 %v608
        %v1598 = vunpack.c.l.b16 %v609
        %v1599 = vunpack.c.h.b16 %v609
        %v1600 = vunpack.c.l.b16 %v610
        %v1601 = vunpack.c.h.b16 %v610
        %v1602 = vunpack.c.l.b16 %v611
        %v1603 = vunpack.c.h.b16 %v611
        %v1604 = vunpack.c.l.b16 %v612
        %v1605 = vunpack.c.h.b16 %v612
        %v1606 = vunpack.c.l.b16 %v613
        %v1607 = vunpack.c.h.b16 %v613
        %v1608 = vunpack.c.l.b16 %v614
        %v1609 = vunpack.c.h.b16 %v614
        %v1610 = vunpack.c.l.b16 %v615
        %v1611 = vunpack.c.h.b16 %v615
        %v1612 = vunpack.c.l.b16 %v616
        %v1613 = vunpack.c.h.b16 %v616
        %v1614 = vunpack.c.l.b16 %v617
        %v1615 = vunpack.c.h.b16 %v617
        %v1616 = vunpack.c.l.b16 %v618
        %v1617 = vunpack.c.h.b16 %v618
        %v1618 = vunpack.c.l.b16 %v619
        %v1619 = vunpack.c.h.b16 %v619
        %v1620 = vunpack.c.l.b16 %v620
        %v1621 = vunpack.c.h.b16 %v620
        %v1622 = vunpack.c.l.b16 %v621
        %v1623 = vunpack.c.h.b16 %v621
        %v1624 = vunpack.c.l.b16 %v622
        %v1625 = vunpack.c.h.b16 %v622
        %v1626 = vunpack.c.l.b16 %v623
        %v1627 = vunpack.c.h.b16 %v623
        %v1628 = vunpack.c.l.b16 %v624
        %v1629 = vunpack.c.h.b16 %v624
        %v1630 = vunpack.c.l.b16 %v625
        %v1631 = vunpack.c.h.b16 %v625
        %v1632 = vunpack.c.l.b16 %v626
        %v1633 = vunpack.c.h.b16 %v626
        %v1634 = vunpack.c.l.b16 %v627
        %v1635 = vunpack.c.h.b16 %v627
        %v1636 = vunpack.c.l.b16 %v628
        %v1637 = vunpack.c.h.b16 %v628
        %v1638 = vunpack.c.l.b16 %v629
        %v1639 = vunpack.c.h.b16 %v629
        %v1640 = vunpack.c.l.b16 %v630
        %v1641 = vunpack.c.h.b16 %v630
        %v1642 = vunpack.c.l.b16 %v631
        %v1643 = vunpack.c.h.b16 %v631
        %v1644 = vunpack.c.l.b16 %v632
        %v1645 = vunpack.c.h.b16 %v632
        %v1646 = vunpack.c.l.b16 %v633
        %v1647 = vunpack.c.h.b16 %v633
        %v1648 = vunpack.c.l.b16 %v634
        %v1649 = vunpack.c.h.b16 %v634
        %v1650 = vunpack.c.l.b16 %v635
        %v1651 = vunpack.c.h.b16 %v635
        %v1652 = vunpack.c.l.b16 %v636
        %v1653 = vunpack.c.h.b16 %v636
        %v1654 = vunpack.c.l.b16 %v637
        %v1655 = vunpack.c.h.b16 %v637
        %v1656 = vunpack.c.l.b16 %v638
        %v1657 = vunpack.c.h.b16 %v638
        %v1658 = vunpack.c.l.b16 %v639
        %v1659 = vunpack.c.h.b16 %v639
        %v1660 = vunpack.c.l.b16 %v640
        %v1661 = vunpack.c.h.b16 %v640
        %v1662 = vunpack.c.l.b16 %v641
        %v1663 = vunpack.c.h.b16 %v641
        %v1664 = vunpack.c.l.b16 %v642
        %v1665 = vunpack.c.h.b16 %v642
        %v1666 = vunpack.c.l.b16 %v643
        %v1667 = vunpack.c.h.b16 %v643
        %v1668 = vunpack.c.l.b16 %v644
        %v1669 = vunpack.c.h.b16 %v644
        %v1670 = vunpack.c.l.b16 %v645
        %v1671 = vunpack.c.h.b16 %v645
        %v1672 = vunpack.c.l.b16 %v646
        %v1673 = vunpack.c.h.b16 %v646
        %v1674 = vunpack.c.l.b16 %v647
        %v1675 = vunpack.c.h.b16 %v647
        %v1676 = vunpack.c.l.b16 %v648
        %v1677 = vunpack.c.h.b16 %v648
        %v1678 = vunpack.c.l.b16 %v649
        %v1679 = vunpack.c.h.b16 %v649
        %v1680 = vunpack.c.l.b16 %v650
        %v1681 = vunpack.c.h.b16 %v650
        %v1682 = vunpack.c.l.b16 %v651
        %v1683 = vunpack.c.h.b16 %v651
        %v1684 = vunpack.c.l.b16 %v652
        %v1685 = vunpack.c.h.b16 %v652
        %v1686 = vunpack.c.l.b16 %v653
        %v1687 = vunpack.c.h.b16 %v653
        %v1688 = vunpack.c.l.b16 %v654
        %v1689 = vunpack.c.h.b16 %v654
        %v1690 = vunpack.c.l.b16 %v655
        %v1691 = vunpack.c.h.b16 %v655
        %v1692 = vunpack.c.l.b16 %v656
        %v1693 = vunpack.c.h.b16 %v656
        %v1694 = vunpack.c.l.b16 %v657
        %v1695 = vunpack.c.h.b16 %v657
        %v1696 = vunpack.c.l.b16 %v658
        %v1697 = vunpack.c.h.b16 %v658
        %v1698 = vunpack.c.l.b16 %v659
        %v1699 = vunpack.c.h.b16 %v659
        %v1700 = vunpack.c.l.b16 %v660
        %v1701 = vunpack.c.h.b16 %v660
        %v1702 = vunpack.c.l.b16 %v661
        %v1703 = vunpack.c.h.b16 %v661
        %v1704 = vunpack.c.l.b16 %v662
        %v1705 = vunpack.c.h.b16 %v662
        %v1706 = vunpack.c.l.b16 %v663
        %v1707 = vunpack.c.h.b16 %v663
        %v1708 = vunpack.c.l.b16 %v664
        %v1709 = vunpack.c.h.b16 %v664
        %v1710 = vunpack.c.l.b16 %v665
        %v1711 = vunpack.c.h.b16 %v665
        %v1712 = vunpack.c.l.b16 %v666
        %v1713 = vunpack.c.h.b16 %v666
        %v1714 = vunpack.c.l.b16 %v667
        %v1715 = vunpack.c.h.b16 %v667
        %v1716 = vunpack.c.l.b16 %v668
        %v1717 = vunpack.c.h.b16 %v668
        %v1718 = vunpack.c.l.b16 %v669
        %v1719 = vunpack.c.h.b16 %v669
        %v1720 = vunpack.c.l.b16 %v670
        %v1721 = vunpack.c.h.b16 %v670
        %v1722 = vunpack.c.l.b16 %v671
        %v1723 = vunpack.c.h.b16 %v671
        %v1724 = vunpack.c.l.b16 %v672
        %v1725 = vunpack.c.h.b16 %v672
        %v1726 = vunpack.c.l.b16 %v673
        %v1727 = vunpack.c.h.b16 %v673
        %v1728 = vunpack.c.l.b16 %v674
        %v1729 = vunpack.c.h.b16 %v674
        %v1730 = vunpack.c.l.b16 %v675
        %v1731 = vunpack.c.h.b16 %v675
        %v1732 = vunpack.c.l.b16 %v676
        %v1733 = vunpack.c.h.b16 %v676
        %v1734 = vunpack.c.l.b16 %v677
        %v1735 = vunpack.c.h.b16 %v677
        %v1736 = vunpack.c.l.b16 %v678
        %v1737 = vunpack.c.h.b16 %v678
        %v1738 = vunpack.c.l.b16 %v679
        %v1739 = vunpack.c.h.b16 %v679
        %v1740 = vunpack.c.l.b16 %v680
        %v1741 = vunpack.c.h.b16 %v680
        %v1742 = vunpack.c.l.b16 %v681
        %v1743 = vunpack.c.h.b16 %v681
        %v1744 = vunpack.c.l.b16 %v682
        %v1745 = vunpack.c.h.b16 %v682
        %v1746 = vunpack.c.l.b16 %v683
        %v1747 = vunpack.c.h.b16 %v683
        %v1748 = vunpack.c.l.b16 %v684
        %v1749 = vunpack.c.h.b16 %v684
        %v1750 = vunpack.c.l.b16 %v685
        %v1751 = vunpack.c.h.b16 %v685
        %v1752 = vunpack.c.l.b16 %v686
        %v1753 = vunpack.c.h.b16 %v686
        %v1754 = vunpack.c.l.b16 %v687
        %v1755 = vunpack.c.h.b16 %v687
        %v1756 = vunpack.c.l.b16 %v688
        %v1757 = vunpack.c.h.b16 %v688
        %v1758 = vunpack.c.l.b16 %v689
        %v1759 = vunpack.c.h.b16 %v689
        %v1760 = vunpack.c.l.b16 %v690
        %v1761 = vunpack.c.h.b16 %v690
        %v1762 = vunpack.c.l.b16 %v691
        %v1763 = vunpack.c.h.b16 %v691
        %v1764 = vunpack.c.l.b16 %v692
        %v1765 = vunpack.c.h.b16 %v692
        %v1766 = vunpack.c.l.b16 %v693
        %v1767 = vunpack.c.h.b16 %v693
        %v1768 = vunpack.c.l.b16 %v694
        %v1769 = vunpack.c.h.b16 %v694
        %v1770 = vunpack.c.l.b16 %v695
        %v1771 = vunpack.c.h.b16 %v695
        %v1772 = vunpack.c.l.b16 %v696
        %v1773 = vunpack.c.h.b16 %v696
        %v1774 = vunpack.c.l.b16 %v697
        %v1775 = vunpack.c.h.b16 %v697
        %v1776 = vunpack.c.l.b16 %v698
        %v1777 = vunpack.c.h.b16 %v698
        %v1778 = vunpack.c.l.b16 %v699
        %v1779 = vunpack.c.h.b16 %v699
        %v1780 = vunpack.c.l.b16 %v700
        %v1781 = vunpack.c.h.b16 %v700
        %v1782 = vunpack.c.l.b16 %v701
        %v1783 = vunpack.c.h.b16 %v701
        %v1784 = vunpack.c.l.b16 %v702
        %v1785 = vunpack.c.h.b16 %v702
        %v1786 = vunpack.c.l.b16 %v703
        %v1787 = vunpack.c.h.b16 %v703
        %v1788 = vunpack.c.l.b16 %v704
        %v1789 = vunpack.c.h.b16 %v704
        %v1790 = vunpack.c.l.b16 %v705
        %v1791 = vunpack.c.h.b16 %v705
        %v1792 = vunpack.c.l.b16 %v706
        %v1793 = vunpack.c.h.b16 %v706
        %v1794 = vunpack.c.l.b16 %v707
        %v1795 = vunpack.c.h.b16 %v707
        %v1796 = vunpack.c.l.b16 %v708
        %v1797 = vunpack.c.h.b16 %v708
        %v1798 = vunpack.c.l.b16 %v709
        %v1799 = vunpack.c.h.b16 %v709
        %v1800 = vunpack.c.l.b16 %v710
        %v1801 = vunpack.c.h.b16 %v710
        %v1802 = vunpack.c.l.b16 %v711
        %v1803 = vunpack.c.h.b16 %v711
        %v1804 = vunpack.c.l.b16 %v712
        %v1805 = vunpack.c.h.b16 %v712
        %v1806 = vunpack.c.l.b16 %v713
        %v1807 = vunpack.c.h.b16 %v713
        %v1808 = vunpack.c.l.b16 %v714
        %v1809 = vunpack.c.h.b16 %v714
        %v1810 = vunpack.c.l.b16 %v715
        %v1811 = vunpack.c.h.b16 %v715
        %v1812 = vunpack.c.l.b16 %v716
        %v1813 = vunpack.c.h.b16 %v716
        %v1814 = vunpack.c.l.b16 %v717
        %v1815 = vunpack.c.h.b16 %v717
        %v1816 = vunpack.c.l.b16 %v718
        %v1817 = vunpack.c.h.b16 %v718
        %v1818 = vunpack.c.l.b16 %v719
        %v1819 = vunpack.c.h.b16 %v719
        %v1820 = vunpack.c.l.b16 %v720
        %v1821 = vunpack.c.h.b16 %v720
        %v1822 = vunpack.c.l.b16 %v721
        %v1823 = vunpack.c.h.b16 %v721
        %v1824 = vunpack.c.l.b16 %v722
        %v1825 = vunpack.c.h.b16 %v722
        %v1826 = vunpack.c.l.b16 %v723
        %v1827 = vunpack.c.h.b16 %v723
        %v1828 = vunpack.c.l.b16 %v724
        %v1829 = vunpack.c.h.b16 %v724
        %v1830 = vunpack.c.l.b16 %v725
        %v1831 = vunpack.c.h.b16 %v725
        %v1832 = vunpack.c.l.b16 %v726
        %v1833 = vunpack.c.h.b16 %v726
        %v1834 = vunpack.c.l.b16 %v727
        %v1835 = vunpack.c.h.b16 %v727
        %v1836 = vunpack.c.l.b16 %v728
        %v1837 = vunpack.c.h.b16 %v728
        %v1838 = vunpack.c.l.b16 %v729
        %v1839 = vunpack.c.h.b16 %v729
        %v1840 = vunpack.c.l.b16 %v730
        %v1841 = vunpack.c.h.b16 %v730
        %v1842 = vunpack.c.l.b16 %v731
        %v1843 = vunpack.c.h.b16 %v731
        %v1844 = vunpack.c.l.b16 %v732
        %v1845 = vunpack.c.h.b16 %v732
        %v1846 = vunpack.c.l.b16 %v733
        %v1847 = vunpack.c.h.b16 %v733
        %v1848 = vunpack.c.l.b16 %v734
        %v1849 = vunpack.c.h.b16 %v734
        %v1850 = vunpack.c.l.b16 %v735
        %v1851 = vunpack.c.h.b16 %v735
        %v1852 = vunpack.c.l.b16 %v736
        %v1853 = vunpack.c.h.b16 %v736
        %v1854 = vunpack.c.l.b16 %v737
        %v1855 = vunpack.c.h.b16 %v737
        %v1856 = vunpack.c.l.b16 %v738
        %v1857 = vunpack.c.h.b16 %v738
        %v1858 = vunpack.c.l.b16 %v739
        %v1859 = vunpack.c.h.b16 %v739
        %v1860 = vunpack.c.l.b16 %v740
        %v1861 = vunpack.c.h.b16 %v740
        %v1862 = vunpack.c.l.b16 %v741
        %v1863 = vunpack.c.h.b16 %v741
        %v1864 = vunpack.c.l.b16 %v742
        %v1865 = vunpack.c.h.b16 %v742
        %v1866 = vunpack.c.l.b16 %v743
        %v1867 = vunpack.c.h.b16 %v743
        %v1868 = vunpack.c.l.b16 %v744
        %v1869 = vunpack.c.h.b16 %v744
        %v1870 = vunpack.c.l.b16 %v745
        %v1871 = vunpack.c.h.b16 %v745
        %v1872 = vunpack.c.l.b16 %v746
        %v1873 = vunpack.c.h.b16 %v746
        %v1874 = vunpack.c.l.b16 %v747
        %v1875 = vunpack.c.h.b16 %v747
        %v1876 = vunpack.c.l.b16 %v748
        %v1877 = vunpack.c.h.b16 %v748
        %v1878 = vunpack.c.l.b16 %v749
        %v1879 = vunpack.c.h.b16 %v749
        %v1880 = vunpack.c.l.b16 %v750
        %v1881 = vunpack.c.h.b16 %v750
        %v1882 = vunpack.c.l.b16 %v751
        %v1883 = vunpack.c.h.b16 %v751
        %v1884 = vunpack.c.l.b16 %v752
        %v1885 = vunpack.c.h.b16 %v752
        %v1886 = vunpack.c.l.b16 %v753
        %v1887 = vunpack.c.h.b16 %v753
        %v1888 = vunpack.c.l.b16 %v754
        %v1889 = vunpack.c.h.b16 %v754
        %v1890 = vunpack.c.l.b16 %v755
        %v1891 = vunpack.c.h.b16 %v755
        %v1892 = vunpack.c.l.b16 %v756
        %v1893 = vunpack.c.h.b16 %v756
        %v1894 = vunpack.c.l.b16 %v757
        %v1895 = vunpack.c.h.b16 %v757
        %v1896 = vunpack.c.l.b16 %v758
        %v1897 = vunpack.c.h.b16 %v758
        %v1898 = vunpack.c.l.b16 %v759
        %v1899 = vunpack.c.h.b16 %v759
        %v1900 = vunpack.c.l.b16 %v760
        %v1901 = vunpack.c.h.b16 %v760
        %v1902 = vunpack.c.l.b16 %v761
        %v1903 = vunpack.c.h.b16 %v761
        %v1904 = vunpack.c.l.b16 %v762
        %v1905 = vunpack.c.h.b16 %v762
        %v1906 = vunpack.c.l.b16 %v763
        %v1907 = vunpack.c.h.b16 %v763
        %v1908 = vunpack.c.l.b16 %v764
        %v1909 = vunpack.c.h.b16 %v764
        %v1910 = vunpack.c.l.b16 %v765
        %v1911 = vunpack.c.h.b16 %v765
        %v1912 = vunpack.c.l.b16 %v766
        %v1913 = vunpack.c.h.b16 %v766
        %v1914 = vunpack.c.l.b16 %v767
        %v1915 = vunpack.c.h.b16 %v767
        %v1916 = vunpack.c.l.b16 %v768
        %v1917 = vunpack.c.h.b16 %v768
        %v1918 = vunpack.c.l.b16 %v769
        %v1919 = vunpack.c.h.b16 %v769
        %v1920 = vunpack.c.l.b16 %v770
        %v1921 = vunpack.c.h.b16 %v770
        %v1922 = vunpack.c.l.b16 %v771
        %v1923 = vunpack.c.h.b16 %v771
        %v1924 = vunpack.c.l.b16 %v772
        %v1925 = vunpack.c.h.b16 %v772
        %v1926 = vunpack.c.l.b16 %v773
        %v1927 = vunpack.c.h.b16 %v773
        %v1928 = vunpack.c.l.b16 %v774
        %v1929 = vunpack.c.h.b16 %v774
        %v1930 = vunpack.c.l.b16 %v775
        %v1931 = vunpack.c.h.b16 %v775
        %v1932 = vunpack.c.l.b16 %v776
        %v1933 = vunpack.c.h.b16 %v776
        %v1934 = vunpack.c.l.b16 %v777
        %v1935 = vunpack.c.h.b16 %v777
        %v1936 = vunpack.c.l.b16 %v778
        %v1937 = vunpack.c.h.b16 %v778
        %v1938 = vunpack.c.l.b16 %v779
        %v1939 = vunpack.c.h.b16 %v779
        %v1940 = vunpack.c.l.b16 %v780
        %v1941 = vunpack.c.h.b16 %v780
        %v1942 = vunpack.c.l.b16 %v781
        %v1943 = vunpack.c.h.b16 %v781
        %v1944 = vunpack.c.l.b16 %v782
        %v1945 = vunpack.c.h.b16 %v782
        %v1946 = vunpack.c.l.b16 %v783
        %v1947 = vunpack.c.h.b16 %v783
        %v1948 = vunpack.c.l.b16 %v784
        %v1949 = vunpack.c.h.b16 %v784
        %v1950 = vunpack.c.l.b16 %v785
        %v1951 = vunpack.c.h.b16 %v785
        %v1952 = vunpack.c.l.b16 %v786
        %v1953 = vunpack.c.h.b16 %v786
        %v1954 = vunpack.c.l.b16 %v787
        %v1955 = vunpack.c.h.b16 %v787
        %v1956 = vpack.c.b16 %v1188, %v1184
        %v1957 = vpack.c.b16 %v1189, %v1185
        %v1958 = vpack.c.b16 %v1190, %v1186
        %v1959 = vpack.c.b16 %v1191, %v1187
        %v1960 = vpack.c.b16 %v1196, %v1192
        %v1961 = vpack.c.b16 %v1197, %v1193
        %v1962 = vpack.c.b16 %v1198, %v1194
        %v1963 = vpack.c.b16 %v1199, %v1195
        %v1964 = vpack.c.b16 %v1204, %v1200
        %v1965 = vpack.c.b16 %v1205, %v1201
        %v1966 = vpack.c.b16 %v1206, %v1202
        %v1967 = vpack.c.b16 %v1207, %v1203
        %v1968 = vpack.c.b16 %v1212, %v1208
        %v1969 = vpack.c.b16 %v1213, %v1209
        %v1970 = vpack.c.b16 %v1214, %v1210
        %v1971 = vpack.c.b16 %v1215, %v1211
        %v1972 = vpack.c.b16 %v1220, %v1216
        %v1973 = vpack.c.b16 %v1221, %v1217
        %v1974 = vpack.c.b16 %v1222, %v1218
        %v1975 = vpack.c.b16 %v1223, %v1219
        %v1976 = vpack.c.b16 %v1228, %v1224
        %v1977 = vpack.c.b16 %v1229, %v1225
        %v1978 = vpack.c.b16 %v1230, %v1226
        %v1979 = vpack.c.b16 %v1231, %v1227
        %v1980 = vpack.c.b16 %v1236, %v1232
        %v1981 = vpack.c.b16 %v1237, %v1233
        %v1982 = vpack.c.b16 %v1238, %v1234
        %v1983 = vpack.c.b16 %v1239, %v1235
        %v1984 = vpack.c.b16 %v1244, %v1240
        %v1985 = vpack.c.b16 %v1245, %v1241
        %v1986 = vpack.c.b16 %v1246, %v1242
        %v1987 = vpack.c.b16 %v1247, %v1243
        %v1988 = vpack.c.b16 %v1252, %v1248
        %v1989 = vpack.c.b16 %v1253, %v1249
        %v1990 = vpack.c.b16 %v1254, %v1250
        %v1991 = vpack.c.b16 %v1255, %v1251
        %v1992 = vpack.c.b16 %v1260, %v1256
        %v1993 = vpack.c.b16 %v1261, %v1257
        %v1994 = vpack.c.b16 %v1262, %v1258
        %v1995 = vpack.c.b16 %v1263, %v1259
        %v1996 = vpack.c.b16 %v1268, %v1264
        %v1997 = vpack.c.b16 %v1269, %v1265
        %v1998 = vpack.c.b16 %v1270, %v1266
        %v1999 = vpack.c.b16 %v1271, %v1267
        %v2000 = vpack.c.b16 %v1276, %v1272
        %v2001 = vpack.c.b16 %v1277, %v1273
        %v2002 = vpack.c.b16 %v1278, %v1274
        %v2003 = vpack.c.b16 %v1279, %v1275
        %v2004 = vpack.c.b16 %v1284, %v1280
        %v2005 = vpack.c.b16 %v1285, %v1281
        %v2006 = vpack.c.b16 %v1286, %v1282
        %v2007 = vpack.c.b16 %v1287, %v1283
        %v2008 = vpack.c.b16 %v1292, %v1288
        %v2009 = vpack.c.b16 %v1293, %v1289
        %v2010 = vpack.c.b16 %v1294, %v1290
        %v2011 = vpack.c.b16 %v1295, %v1291
        %v2012 = vpack.c.b16 %v1300, %v1296
        %v2013 = vpack.c.b16 %v1301, %v1297
        %v2014 = vpack.c.b16 %v1302, %v1298
        %v2015 = vpack.c.b16 %v1303, %v1299
        %v2016 = vpack.c.b16 %v1308, %v1304
        %v2017 = vpack.c.b16 %v1309, %v1305
        %v2018 = vpack.c.b16 %v1310, %v1306
        %v2019 = vpack.c.b16 %v1311, %v1307
        %v2020 = vpack.c.b16 %v1316, %v1312
        %v2021 = vpack.c.b16 %v1317, %v1313
        %v2022 = vpack.c.b16 %v1318, %v1314
        %v2023 = vpack.c.b16 %v1319, %v1315
        %v2024 = vpack.c.b16 %v1324, %v1320
        %v2025 = vpack.c.b16 %v1325, %v1321
        %v2026 = vpack.c.b16 %v1326, %v1322
        %v2027 = vpack.c.b16 %v1327, %v1323
        %v2028 = vpack.c.b16 %v1332, %v1328
        %v2029 = vpack.c.b16 %v1333, %v1329
        %v2030 = vpack.c.b16 %v1334, %v1330
        %v2031 = vpack.c.b16 %v1335, %v1331
        %v2032 = vpack.c.b16 %v1340, %v1336
        %v2033 = vpack.c.b16 %v1341, %v1337
        %v2034 = vpack.c.b16 %v1342, %v1338
        %v2035 = vpack.c.b16 %v1343, %v1339
        %v2036 = vpack.c.b16 %v1348, %v1344
        %v2037 = vpack.c.b16 %v1349, %v1345
        %v2038 = vpack.c.b16 %v1350, %v1346
        %v2039 = vpack.c.b16 %v1351, %v1347
        %v2040 = vpack.c.b16 %v1356, %v1352
        %v2041 = vpack.c.b16 %v1357, %v1353
        %v2042 = vpack.c.b16 %v1358, %v1354
        %v2043 = vpack.c.b16 %v1359, %v1355
        %v2044 = vpack.c.b16 %v1364, %v1360
        %v2045 = vpack.c.b16 %v1365, %v1361
        %v2046 = vpack.c.b16 %v1366, %v1362
        %v2047 = vpack.c.b16 %v1367, %v1363
        %v2048 = vpack.c.b16 %v1372, %v1368
        %v2049 = vpack.c.b16 %v1373, %v1369
        %v2050 = vpack.c.b16 %v1374, %v1370
        %v2051 = vpack.c.b16 %v1375, %v1371
        %v2052 = vpack.c.b16 %v1380, %v1376
        %v2053 = vpack.c.b16 %v1381, %v1377
        %v2054 = vpack.c.b16 %v1382, %v1378
        %v2055 = vpack.c.b16 %v1383, %v1379
        %v2056 = vpack.c.b16 %v1388, %v1384
        %v2057 = vpack.c.b16 %v1389, %v1385
        %v2058 = vpack.c.b16 %v1390, %v1386
        %v2059 = vpack.c.b16 %v1391, %v1387
        %v2060 = vpack.c.b16 %v1396, %v1392
        %v2061 = vpack.c.b16 %v1397, %v1393
        %v2062 = vpack.c.b16 %v1398, %v1394
        %v2063 = vpack.c.b16 %v1399, %v1395
        %v2064 = vpack.c.b16 %v1404, %v1400
        %v2065 = vpack.c.b16 %v1405, %v1401
        %v2066 = vpack.c.b16 %v1406, %v1402
        %v2067 = vpack.c.b16 %v1407, %v1403
        %v2068 = vpack.c.b16 %v1412, %v1408
        %v2069 = vpack.c.b16 %v1413, %v1409
        %v2070 = vpack.c.b16 %v1414, %v1410
        %v2071 = vpack.c.b16 %v1415, %v1411
        %v2072 = vpack.c.b16 %v1420, %v1416
        %v2073 = vpack.c.b16 %v1421, %v1417
        %v2074 = vpack.c.b16 %v1422, %v1418
        %v2075 = vpack.c.b16 %v1423, %v1419
        %v2076 = vpack.c.b16 %v1428, %v1424
        %v2077 = vpack.c.b16 %v1429, %v1425
        %v2078 = vpack.c.b16 %v1430, %v1426
        %v2079 = vpack.c.b16 %v1431, %v1427
        %v2080 = vpack.c.b16 %v1436, %v1432
        %v2081 = vpack.c.b16 %v1437, %v1433
        %v2082 = vpack.c.b16 %v1438, %v1434
        %v2083 = vpack.c.b16 %v1439, %v1435
        %v2084 = vpack.c.b16 %v1444, %v1440
        %v2085 = vpack.c.b16 %v1445, %v1441
        %v2086 = vpack.c.b16 %v1446, %v1442
        %v2087 = vpack.c.b16 %v1447, %v1443
        %v2088 = vpack.c.b16 %v1452, %v1448
        %v2089 = vpack.c.b16 %v1453, %v1449
        %v2090 = vpack.c.b16 %v1454, %v1450
        %v2091 = vpack.c.b16 %v1455, %v1451
        %v2092 = vpack.c.b16 %v1460, %v1456
        %v2093 = vpack.c.b16 %v1461, %v1457
        %v2094 = vpack.c.b16 %v1462, %v1458
        %v2095 = vpack.c.b16 %v1463, %v1459
        %v2096 = vpack.c.b16 %v1468, %v1464
        %v2097 = vpack.c.b16 %v1469, %v1465
        %v2098 = vpack.c.b16 %v1470, %v1466
        %v2099 = vpack.c.b16 %v1471, %v1467
        %v2100 = vpack.c.b16 %v1476, %v1472
        %v2101 = vpack.c.b16 %v1477, %v1473
        %v2102 = vpack.c.b16 %v1478, %v1474
        %v2103 = vpack.c.b16 %v1479, %v1475
        %v2104 = vpack.c.b16 %v1484, %v1480
        %v2105 = vpack.c.b16 %v1485, %v1481
        %v2106 = vpack.c.b16 %v1486, %v1482
        %v2107 = vpack.c.b16 %v1487, %v1483
        %v2108 = vpack.c.b16 %v1492, %v1488
        %v2109 = vpack.c.b16 %v1493, %v1489
        %v2110 = vpack.c.b16 %v1494, %v1490
        %v2111 = vpack.c.b16 %v1495, %v1491
        %v2112 = vpack.c.b16 %v1500, %v1496
        %v2113 = vpack.c.b16 %v1501, %v1497
        %v2114 = vpack.c.b16 %v1502, %v1498
        %v2115 = vpack.c.b16 %v1503, %v1499
        %v2116 = vpack.c.b16 %v1508, %v1504
        %v2117 = vpack.c.b16 %v1509, %v1505
        %v2118 = vpack.c.b16 %v1510, %v1506
        %v2119 = vpack.c.b16 %v1511, %v1507
        %v2120 = vpack.c.b16 %v1516, %v1512
        %v2121 = vpack.c.b16 %v1517, %v1513
        %v2122 = vpack.c.b16 %v1518, %v1514
        %v2123 = vpack.c.b16 %v1519, %v1515
        %v2124 = vpack.c.b16 %v1524, %v1520
        %v2125 = vpack.c.b16 %v1525, %v1521
        %v2126 = vpack.c.b16 %v1526, %v1522
        %v2127 = vpack.c.b16 %v1527, %v1523
        %v2128 = vpack.c.b16 %v1532, %v1528
        %v2129 = vpack.c.b16 %v1533, %v1529
        %v2130 = vpack.c.b16 %v1534, %v1530
        %v2131 = vpack.c.b16 %v1535, %v1531
        %v2132 = vpack.c.b16 %v1540, %v1536
        %v2133 = vpack.c.b16 %v1541, %v1537
        %v2134 = vpack.c.b16 %v1542, %v1538
        %v2135 = vpack.c.b16 %v1543, %v1539
        %v2136 = vpack.c.b16 %v1548, %v1544
        %v2137 = vpack.c.b16 %v1549, %v1545
        %v2138 = vpack.c.b16 %v1550, %v1546
        %v2139 = vpack.c.b16 %v1551, %v1547
        %v2140 = vpack.c.b16 %v1556, %v1552
        %v2141 = vpack.c.b16 %v1557, %v1553
        %v2142 = vpack.c.b16 %v1558, %v1554
        %v2143 = vpack.c.b16 %v1559, %v1555
        %v2144 = vpack.c.b16 %v1564, %v1560
        %v2145 = vpack.c.b16 %v1565, %v1561
        %v2146 = vpack.c.b16 %v1566, %v1562
        %v2147 = vpack.c.b16 %v1567, %v1563
        %v2148 = vpack.c.b16 %v1572, %v1568
        %v2149 = vpack.c.b16 %v1573, %v1569
        %v2150 = vpack.c.b16 %v1574, %v1570
        %v2151 = vpack.c.b16 %v1575, %v1571
        %v2152 = vpack.c.b16 %v1580, %v1576
        %v2153 = vpack.c.b16 %v1581, %v1577
        %v2154 = vpack.c.b16 %v1582, %v1578
        %v2155 = vpack.c.b16 %v1583, %v1579
        %v2156 = vpack.c.b16 %v1588, %v1584
        %v2157 = vpack.c.b16 %v1589, %v1585
        %v2158 = vpack.c.b16 %v1590, %v1586
        %v2159 = vpack.c.b16 %v1591, %v1587
        %v2160 = vpack.c.b16 %v1596, %v1592
        %v2161 = vpack.c.b16 %v1597, %v1593
        %v2162 = vpack.c.b16 %v1598, %v1594
        %v2163 = vpack.c.b16 %v1599, %v1595
        %v2164 = vpack.c.b16 %v1604, %v1600
        %v2165 = vpack.c.b16 %v1605, %v1601
        %v2166 = vpack.c.b16 %v1606, %v1602
        %v2167 = vpack.c.b16 %v1607, %v1603
        %v2168 = vpack.c.b16 %v1612, %v1608
        %v2169 = vpack.c.b16 %v1613, %v1609
        %v2170 = vpack.c.b16 %v1614, %v1610
        %v2171 = vpack.c.b16 %v1615, %v1611
        %v2172 = vpack.c.b16 %v1620, %v1616
        %v2173 = vpack.c.b16 %v1621, %v1617
        %v2174 = vpack.c.b16 %v1622, %v1618
        %v2175 = vpack.c.b16 %v1623, %v1619
        %v2176 = vpack.c.b16 %v1628, %v1624
        %v2177 = vpack.c.b16 %v1629, %v1625
        %v2178 = vpack.c.b16 %v1630, %v1626
        %v2179 = vpack.c.b16 %v1631, %v1627
        %v2180 = vpack.c.b16 %v1636, %v1632
        %v2181 = vpack.c.b16 %v1637, %v1633
        %v2182 = vpack.c.b16 %v1638, %v1634
        %v2183 = vpack.c.b16 %v1639, %v1635
        %v2184 = vpack.c.b16 %v1644, %v1640
        %v2185 = vpack.c.b16 %v1645, %v1641
        %v2186 = vpack.c.b16 %v1646, %v1642
        %v2187 = vpack.c.b16 %v1647, %v1643
        %v2188 = vpack.c.b16 %v1652, %v1648
        %v2189 = vpack.c.b16 %v1653, %v1649
        %v2190 = vpack.c.b16 %v1654, %v1650
        %v2191 = vpack.c.b16 %v1655, %v1651
        %v2192 = vpack.c.b16 %v1660, %v1656
        %v2193 = vpack.c.b16 %v1661, %v1657
        %v2194 = vpack.c.b16 %v1662, %v1658
        %v2195 = vpack.c.b16 %v1663, %v1659
        %v2196 = vpack.c.b16 %v1668, %v1664
        %v2197 = vpack.c.b16 %v1669, %v1665
        %v2198 = vpack.c.b16 %v1670, %v1666
        %v2199 = vpack.c.b16 %v1671, %v1667
        %v2200 = vpack.c.b16 %v1676, %v1672
        %v2201 = vpack.c.b16 %v1677, %v1673
        %v2202 = vpack.c.b16 %v1678, %v1674
        %v2203 = vpack.c.b16 %v1679, %v1675
        %v2204 = vpack.c.b16 %v1684, %v1680
        %v2205 = vpack.c.b16 %v1685, %v1681
        %v2206 = vpack.c.b16 %v1686, %v1682
        %v2207 = vpack.c.b16 %v1687, %v1683
        %v2208 = vpack.c.b16 %v1692, %v1688
        %v2209 = vpack.c.b16 %v1693, %v1689
        %v2210 = vpack.c.b16 %v1694, %v1690
        %v2211 = vpack.c.b16 %v1695, %v1691
        %v2212 = vpack.c.b16 %v1700, %v1696
        %v2213 = vpack.c.b16 %v1701, %v1697
        %v2214 = vpack.c.b16 %v1702, %v1698
        %v2215 = vpack.c.b16 %v1703, %v1699
        %v2216 = vpack.c.b16 %v1708, %v1704
        %v2217 = vpack.c.b16 %v1709, %v1705
        %v2218 = vpack.c.b16 %v1710, %v1706
        %v2219 = vpack.c.b16 %v1711, %v1707
        %v2220 = vpack.c.b16 %v1716, %v1712
        %v2221 = vpack.c.b16 %v1717, %v1713
        %v2222 = vpack.c.b16 %v1718, %v1714
        %v2223 = vpack.c.b16 %v1719, %v1715
        %v2224 = vpack.c.b16 %v1724, %v1720
        %v2225 = vpack.c.b16 %v1725, %v1721
        %v2226 = vpack.c.b16 %v1726, %v1722
        %v2227 = vpack.c.b16 %v1727, %v1723
        %v2228 = vpack.c.b16 %v1732, %v1728
        %v2229 = vpack.c.b16 %v1733, %v1729
        %v2230 = vpack.c.b16 %v1734, %v1730
        %v2231 = vpack.c.b16 %v1735, %v1731
        %v2232 = vpack.c.b16 %v1740, %v1736
        %v2233 = vpack.c.b16 %v1741, %v1737
        %v2234 = vpack.c.b16 %v1742, %v1738
        %v2235 = vpack.c.b16 %v1743, %v1739
        %v2236 = vpack.c.b16 %v1748, %v1744
        %v2237 = vpack.c.b16 %v1749, %v1745
        %v2238 = vpack.c.b16 %v1750, %v1746
        %v2239 = vpack.c.b16 %v1751, %v1747
        %v2240 = vpack.c.b16 %v1756, %v1752
        %v2241 = vpack.c.b16 %v1757, %v1753
        %v2242 = vpack.c.b16 %v1758, %v1754
        %v2243 = vpack.c.b16 %v1759, %v1755
        %v2244 = vpack.c.b16 %v1764, %v1760
        %v2245 = vpack.c.b16 %v1765, %v1761
        %v2246 = vpack.c.b16 %v1766, %v1762
        %v2247 = vpack.c.b16 %v1767, %v1763
        %v2248 = vpack.c.b16 %v1772, %v1768
        %v2249 = vpack.c.b16 %v1773, %v1769
        %v2250 = vpack.c.b16 %v1774, %v1770
        %v2251 = vpack.c.b16 %v1775, %v1771
        %v2252 = vpack.c.b16 %v1780, %v1776
        %v2253 = vpack.c.b16 %v1781, %v1777
        %v2254 = vpack.c.b16 %v1782, %v1778
        %v2255 = vpack.c.b16 %v1783, %v1779
        %v2256 = vpack.c.b16 %v1788, %v1784
        %v2257 = vpack.c.b16 %v1789, %v1785
        %v2258 = vpack.c.b16 %v1790, %v1786
        %v2259 = vpack.c.b16 %v1791, %v1787
        %v2260 = vpack.c.b16 %v1796, %v1792
        %v2261 = vpack.c.b16 %v1797, %v1793
        %v2262 = vpack.c.b16 %v1798, %v1794
        %v2263 = vpack.c.b16 %v1799, %v1795
        %v2264 = vpack.c.b16 %v1804, %v1800
        %v2265 = vpack.c.b16 %v1805, %v1801
        %v2266 = vpack.c.b16 %v1806, %v1802
        %v2267 = vpack.c.b16 %v1807, %v1803
        %v2268 = vpack.c.b16 %v1812, %v1808
        %v2269 = vpack.c.b16 %v1813, %v1809
        %v2270 = vpack.c.b16 %v1814, %v1810
        %v2271 = vpack.c.b16 %v1815, %v1811
        %v2272 = vpack.c.b16 %v1820, %v1816
        %v2273 = vpack.c.b16 %v1821, %v1817
        %v2274 = vpack.c.b16 %v1822, %v1818
        %v2275 = vpack.c.b16 %v1823, %v1819
        %v2276 = vpack.c.b16 %v1828, %v1824
        %v2277 = vpack.c.b16 %v1829, %v1825
        %v2278 = vpack.c.b16 %v1830, %v1826
        %v2279 = vpack.c.b16 %v1831, %v1827
        %v2280 = vpack.c.b16 %v1836, %v1832
        %v2281 = vpack.c.b16 %v1837, %v1833
        %v2282 = vpack.c.b16 %v1838, %v1834
        %v2283 = vpack.c.b16 %v1839, %v1835
        %v2284 = vpack.c.b16 %v1844, %v1840
        %v2285 = vpack.c.b16 %v1845, %v1841
        %v2286 = vpack.c.b16 %v1846, %v1842
        %v2287 = vpack.c.b16 %v1847, %v1843
        %v2288 = vpack.c.b16 %v1852, %v1848
        %v2289 = vpack.c.b16 %v1853, %v1849
        %v2290 = vpack.c.b16 %v1854, %v1850
        %v2291 = vpack.c.b16 %v1855, %v1851
        %v2292 = vpack.c.b16 %v1860, %v1856
        %v2293 = vpack.c.b16 %v1861, %v1857
        %v2294 = vpack.c.b16 %v1862, %v1858
        %v2295 = vpack.c.b16 %v1863, %v1859
        %v2296 = vpack.c.b16 %v1868, %v1864
        %v2297 = vpack.c.b16 %v1869, %v1865
        %v2298 = vpack.c.b16 %v1870, %v1866
        %v2299 = vpack.c.b16 %v1871, %v1867
        %v2300 = vpack.c.b16 %v1876, %v1872
        %v2301 = vpack.c.b16 %v1877, %v1873
        %v2302 = vpack.c.b16 %v1878, %v1874
        %v2303 = vpack.c.b16 %v1879, %v1875
        %v2304 = vpack.c.b16 %v1884, %v1880
        %v2305 = vpack.c.b16 %v1885, %v1881
        %v2306 = vpack.c.b16 %v1886, %v1882
        %v2307 = vpack.c.b16 %v1887, %v1883
        %v2308 = vpack.c.b16 %v1892, %v1888
        %v2309 = vpack.c.b16 %v1893, %v1889
        %v2310 = vpack.c.b16 %v1894, %v1890
        %v2311 = vpack.c.b16 %v1895, %v1891
        %v2312 = vpack.c.b16 %v1900, %v1896
        %v2313 = vpack.c.b16 %v1901, %v1897
        %v2314 = vpack.c.b16 %v1902, %v1898
        %v2315 = vpack.c.b16 %v1903, %v1899
        %v2316 = vpack.c.b16 %v1908, %v1904
        %v2317 = vpack.c.b16 %v1909, %v1905
        %v2318 = vpack.c.b16 %v1910, %v1906
        %v2319 = vpack.c.b16 %v1911, %v1907
        %v2320 = vpack.c.b16 %v1916, %v1912
        %v2321 = vpack.c.b16 %v1917, %v1913
        %v2322 = vpack.c.b16 %v1918, %v1914
        %v2323 = vpack.c.b16 %v1919, %v1915
        %v2324 = vpack.c.b16 %v1924, %v1920
        %v2325 = vpack.c.b16 %v1925, %v1921
        %v2326 = vpack.c.b16 %v1926, %v1922
        %v2327 = vpack.c.b16 %v1927, %v1923
        %v2328 = vpack.c.b16 %v1932, %v1928
        %v2329 = vpack.c.b16 %v1933, %v1929
        %v2330 = vpack.c.b16 %v1934, %v1930
        %v2331 = vpack.c.b16 %v1935, %v1931
        %v2332 = vpack.c.b16 %v1940, %v1936
        %v2333 = vpack.c.b16 %v1941, %v1937
        %v2334 = vpack.c.b16 %v1942, %v1938
        %v2335 = vpack.c.b16 %v1943, %v1939
        %v2336 = vpack.c.b16 %v1948, %v1944
        %v2337 = vpack.c.b16 %v1949, %v1945
        %v2338 = vpack.c.b16 %v1950, %v1946
        %v2339 = vpack.c.b16 %v1951, %v1947
        %v2340 = vpack.c.b16 %v1952, %v1952
        %v2341 = vpack.c.b16 %v1953, %v1953
        %v2342 = vpack.c.b16 %v1954, %v1954
        %v2343 = vpack.c.b16 %v1955, %v1955
        %vm2728 = vcmask 31744
        %v2730 = vsel %vm2728, %v388, 0
        %v2733 = vsel %vm2728, %v401, 0
        %vm2735 = vcmask 1041408
        %v2737 = vsel %vm2735, %v2340, 0
        %v2740 = vsel %vm2735, %v2341, 0
        %v2743 = vsel %vm2735, %v2342, 0
        %v2746 = vsel %vm2735, %v2343, 0
        %2748 = vmatpush.bf16.msra.mxu0 %v1984
        %2749 = vmatpush.bf16.msra.mxu0 %v1980
        %2750 = vmatpush.bf16.msra.mxu0 %v1976
        %2751 = vmatpush.bf16.msra.mxu0 %v1972
        %2752 = vmatpush.bf16.msra.mxu0 %v1968
        %2753 = vmatpush.bf16.msra.mxu0 %v1964
        %2754 = vmatpush.bf16.msra.mxu0 %v1960
        %2755 = vmatpush.bf16.msra.mxu0 %v1956
        %2756 = vmatmul.bf16.gmra.mxu0 %v376
        %v2757 = vpop.f32.mrf.mxu0
        %v2758 = vadd.f32 %v790, %v2757
        %v2759 = vpop.f32.mrf.mxu0
        %v2760 = vadd.f32 %v790, %v2759
        %2761 = vmatmul.bf16.gmra.mxu0 %v389
        %v2762 = vpop.f32.mrf.mxu0
        %v2763 = vadd.f32 %v790, %v2762
        %v2764 = vpop.f32.mrf.mxu0
        %v2765 = vadd.f32 %v790, %v2764
        %2766 = vdwg.mxu0
        %2767 = vmatpush.bf16.msra.mxu0 %v2016
        %2768 = vmatpush.bf16.msra.mxu0 %v2012
        %2769 = vmatpush.bf16.msra.mxu0 %v2008
        %2770 = vmatpush.bf16.msra.mxu0 %v2004
        %2771 = vmatpush.bf16.msra.mxu0 %v2000
        %2772 = vmatpush.bf16.msra.mxu0 %v1996
        %2773 = vmatpush.bf16.msra.mxu0 %v1992
        %2774 = vmatpush.bf16.msra.mxu0 %v1988
        %2775 = vmatmul.bf16.gmra.mxu0 %v377
        %v2776 = vpop.f32.mrf.mxu0
        %v2777 = vadd.f32 %v2758, %v2776
        %v2778 = vpop.f32.mrf.mxu0
        %v2779 = vadd.f32 %v2760, %v2778
        %2780 = vmatmul.bf16.gmra.mxu0 %v390
        %v2781 = vpop.f32.mrf.mxu0
        %v2782 = vadd.f32 %v2763, %v2781
        %v2783 = vpop.f32.mrf.mxu0
        %v2784 = vadd.f32 %v2765, %v2783
        %2785 = vdwg.mxu0
        %2786 = vmatpush.bf16.msra.mxu0 %v2048
        %2787 = vmatpush.bf16.msra.mxu0 %v2044
        %2788 = vmatpush.bf16.msra.mxu0 %v2040
        %2789 = vmatpush.bf16.msra.mxu0 %v2036
        %2790 = vmatpush.bf16.msra.mxu0 %v2032
        %2791 = vmatpush.bf16.msra.mxu0 %v2028
        %2792 = vmatpush.bf16.msra.mxu0 %v2024
        %2793 = vmatpush.bf16.msra.mxu0 %v2020
        %2794 = vmatmul.bf16.gmra.mxu0 %v378
        %v2795 = vpop.f32.mrf.mxu0
        %v2796 = vadd.f32 %v2777, %v2795
        %v2797 = vpop.f32.mrf.mxu0
        %v2798 = vadd.f32 %v2779, %v2797
        %2799 = vmatmul.bf16.gmra.mxu0 %v391
        %v2800 = vpop.f32.mrf.mxu0
        %v2801 = vadd.f32 %v2782, %v2800
        %v2802 = vpop.f32.mrf.mxu0
        %v2803 = vadd.f32 %v2784, %v2802
        %2804 = vdwg.mxu0
        %2805 = vmatpush.bf16.msra.mxu0 %v2080
        %2806 = vmatpush.bf16.msra.mxu0 %v2076
        %2807 = vmatpush.bf16.msra.mxu0 %v2072
        %2808 = vmatpush.bf16.msra.mxu0 %v2068
        %2809 = vmatpush.bf16.msra.mxu0 %v2064
        %2810 = vmatpush.bf16.msra.mxu0 %v2060
        %2811 = vmatpush.bf16.msra.mxu0 %v2056
        %2812 = vmatpush.bf16.msra.mxu0 %v2052
        %2813 = vmatmul.bf16.gmra.mxu0 %v379
        %v2814 = vpop.f32.mrf.mxu0
        %v2815 = vadd.f32 %v2796, %v2814
        %v2816 = vpop.f32.mrf.mxu0
        %v2817 = vadd.f32 %v2798, %v2816
        %2818 = vmatmul.bf16.gmra.mxu0 %v392
        %v2819 = vpop.f32.mrf.mxu0
        %v2820 = vadd.f32 %v2801, %v2819
        %v2821 = vpop.f32.mrf.mxu0
        %v2822 = vadd.f32 %v2803, %v2821
        %2823 = vdwg.mxu0
        %2824 = vmatpush.bf16.msra.mxu0 %v2112
        %2825 = vmatpush.bf16.msra.mxu0 %v2108
        %2826 = vmatpush.bf16.msra.mxu0 %v2104
        %2827 = vmatpush.bf16.msra.mxu0 %v2100
        %2828 = vmatpush.bf16.msra.mxu0 %v2096
        %2829 = vmatpush.bf16.msra.mxu0 %v2092
        %2830 = vmatpush.bf16.msra.mxu0 %v2088
        %2831 = vmatpush.bf16.msra.mxu0 %v2084
        %2832 = vmatmul.bf16.gmra.mxu0 %v380
        %v2833 = vpop.f32.mrf.mxu0
        %v2834 = vadd.f32 %v2815, %v2833
        %v2835 = vpop.f32.mrf.mxu0
        %v2836 = vadd.f32 %v2817, %v2835
        %2837 = vmatmul.bf16.gmra.mxu0 %v393
        %v2838 = vpop.f32.mrf.mxu0
        %v2839 = vadd.f32 %v2820, %v2838
        %v2840 = vpop.f32.mrf.mxu0
        %v2841 = vadd.f32 %v2822, %v2840
        %2842 = vdwg.mxu0
        %2843 = vmatpush.bf16.msra.mxu0 %v2144
        %2844 = vmatpush.bf16.msra.mxu0 %v2140
        %2845 = vmatpush.bf16.msra.mxu0 %v2136
        %2846 = vmatpush.bf16.msra.mxu0 %v2132
        %2847 = vmatpush.bf16.msra.mxu0 %v2128
        %2848 = vmatpush.bf16.msra.mxu0 %v2124
        %2849 = vmatpush.bf16.msra.mxu0 %v2120
        %2850 = vmatpush.bf16.msra.mxu0 %v2116
        %2851 = vmatmul.bf16.gmra.mxu0 %v381
        %v2852 = vpop.f32.mrf.mxu0
        %v2853 = vadd.f32 %v2834, %v2852
        %v2854 = vpop.f32.mrf.mxu0
        %v2855 = vadd.f32 %v2836, %v2854
        %2856 = vmatmul.bf16.gmra.mxu0 %v394
        %v2857 = vpop.f32.mrf.mxu0
        %v2858 = vadd.f32 %v2839, %v2857
        %v2859 = vpop.f32.mrf.mxu0
        %v2860 = vadd.f32 %v2841, %v2859
        %2861 = vdwg.mxu0
        %2862 = vmatpush.bf16.msra.mxu0 %v2176
        %2863 = vmatpush.bf16.msra.mxu0 %v2172
        %2864 = vmatpush.bf16.msra.mxu0 %v2168
        %2865 = vmatpush.bf16.msra.mxu0 %v2164
        %2866 = vmatpush.bf16.msra.mxu0 %v2160
        %2867 = vmatpush.bf16.msra.mxu0 %v2156
        %2868 = vmatpush.bf16.msra.mxu0 %v2152
        %2869 = vmatpush.bf16.msra.mxu0 %v2148
        %2870 = vmatmul.bf16.gmra.mxu0 %v382
        %v2871 = vpop.f32.mrf.mxu0
        %v2872 = vadd.f32 %v2853, %v2871
        %v2873 = vpop.f32.mrf.mxu0
        %v2874 = vadd.f32 %v2855, %v2873
        %2875 = vmatmul.bf16.gmra.mxu0 %v395
        %v2876 = vpop.f32.mrf.mxu0
        %v2877 = vadd.f32 %v2858, %v2876
        %v2878 = vpop.f32.mrf.mxu0
        %v2879 = vadd.f32 %v2860, %v2878
        %2880 = vdwg.mxu0
        %2881 = vmatpush.bf16.msra.mxu0 %v2208
        %2882 = vmatpush.bf16.msra.mxu0 %v2204
        %2883 = vmatpush.bf16.msra.mxu0 %v2200
        %2884 = vmatpush.bf16.msra.mxu0 %v2196
        %2885 = vmatpush.bf16.msra.mxu0 %v2192
        %2886 = vmatpush.bf16.msra.mxu0 %v2188
        %2887 = vmatpush.bf16.msra.mxu0 %v2184
        %2888 = vmatpush.bf16.msra.mxu0 %v2180
        %2889 = vmatmul.bf16.gmra.mxu0 %v383
        %v2890 = vpop.f32.mrf.mxu0
        %v2891 = vadd.f32 %v2872, %v2890
        %v2892 = vpop.f32.mrf.mxu0
        %v2893 = vadd.f32 %v2874, %v2892
        %2894 = vmatmul.bf16.gmra.mxu0 %v396
        %v2895 = vpop.f32.mrf.mxu0
        %v2896 = vadd.f32 %v2877, %v2895
        %v2897 = vpop.f32.mrf.mxu0
        %v2898 = vadd.f32 %v2879, %v2897
        %2899 = vdwg.mxu0
        %2900 = vmatpush.bf16.msra.mxu0 %v2240
        %2901 = vmatpush.bf16.msra.mxu0 %v2236
        %2902 = vmatpush.bf16.msra.mxu0 %v2232
        %2903 = vmatpush.bf16.msra.mxu0 %v2228
        %2904 = vmatpush.bf16.msra.mxu0 %v2224
        %2905 = vmatpush.bf16.msra.mxu0 %v2220
        %2906 = vmatpush.bf16.msra.mxu0 %v2216
        %2907 = vmatpush.bf16.msra.mxu0 %v2212
        %2908 = vmatmul.bf16.gmra.mxu0 %v384
        %v2909 = vpop.f32.mrf.mxu0
        %v2910 = vadd.f32 %v2891, %v2909
        %v2911 = vpop.f32.mrf.mxu0
        %v2912 = vadd.f32 %v2893, %v2911
        %2913 = vmatmul.bf16.gmra.mxu0 %v397
        %v2914 = vpop.f32.mrf.mxu0
        %v2915 = vadd.f32 %v2896, %v2914
        %v2916 = vpop.f32.mrf.mxu0
        %v2917 = vadd.f32 %v2898, %v2916
        %2918 = vdwg.mxu0
        %2919 = vmatpush.bf16.msra.mxu0 %v2272
        %2920 = vmatpush.bf16.msra.mxu0 %v2268
        %2921 = vmatpush.bf16.msra.mxu0 %v2264
        %2922 = vmatpush.bf16.msra.mxu0 %v2260
        %2923 = vmatpush.bf16.msra.mxu0 %v2256
        %2924 = vmatpush.bf16.msra.mxu0 %v2252
        %2925 = vmatpush.bf16.msra.mxu0 %v2248
        %2926 = vmatpush.bf16.msra.mxu0 %v2244
        %2927 = vmatmul.bf16.gmra.mxu0 %v385
        %v2928 = vpop.f32.mrf.mxu0
        %v2929 = vadd.f32 %v2910, %v2928
        %v2930 = vpop.f32.mrf.mxu0
        %v2931 = vadd.f32 %v2912, %v2930
        %2932 = vmatmul.bf16.gmra.mxu0 %v398
        %v2933 = vpop.f32.mrf.mxu0
        %v2934 = vadd.f32 %v2915, %v2933
        %v2935 = vpop.f32.mrf.mxu0
        %v2936 = vadd.f32 %v2917, %v2935
        %2937 = vdwg.mxu0
        %2938 = vmatpush.bf16.msra.mxu0 %v2304
        %2939 = vmatpush.bf16.msra.mxu0 %v2300
        %2940 = vmatpush.bf16.msra.mxu0 %v2296
        %2941 = vmatpush.bf16.msra.mxu0 %v2292
        %2942 = vmatpush.bf16.msra.mxu0 %v2288
        %2943 = vmatpush.bf16.msra.mxu0 %v2284
        %2944 = vmatpush.bf16.msra.mxu0 %v2280
        %2945 = vmatpush.bf16.msra.mxu0 %v2276
        %2946 = vmatmul.bf16.gmra.mxu0 %v386
        %v2947 = vpop.f32.mrf.mxu0
        %v2948 = vadd.f32 %v2929, %v2947
        %v2949 = vpop.f32.mrf.mxu0
        %v2950 = vadd.f32 %v2931, %v2949
        %2951 = vmatmul.bf16.gmra.mxu0 %v399
        %v2952 = vpop.f32.mrf.mxu0
        %v2953 = vadd.f32 %v2934, %v2952
        %v2954 = vpop.f32.mrf.mxu0
        %v2955 = vadd.f32 %v2936, %v2954
        %2956 = vdwg.mxu0
        %2957 = vmatpush.bf16.msra.mxu0 %v2336
        %2958 = vmatpush.bf16.msra.mxu0 %v2332
        %2959 = vmatpush.bf16.msra.mxu0 %v2328
        %2960 = vmatpush.bf16.msra.mxu0 %v2324
        %2961 = vmatpush.bf16.msra.mxu0 %v2320
        %2962 = vmatpush.bf16.msra.mxu0 %v2316
        %2963 = vmatpush.bf16.msra.mxu0 %v2312
        %2964 = vmatpush.bf16.msra.mxu0 %v2308
        %2965 = vmatmul.bf16.gmra.mxu0 %v387
        %v2966 = vpop.f32.mrf.mxu0
        %v2967 = vadd.f32 %v2948, %v2966
        %v2968 = vpop.f32.mrf.mxu0
        %v2969 = vadd.f32 %v2950, %v2968
        %2970 = vmatmul.bf16.gmra.mxu0 %v400
        %v2971 = vpop.f32.mrf.mxu0
        %v2972 = vadd.f32 %v2953, %v2971
        %v2973 = vpop.f32.mrf.mxu0
        %v2974 = vadd.f32 %v2955, %v2973
        %2975 = vdwg.mxu0
        %2976 = vmatpush.bf16.msra.mxu0 0
        %2977 = vmatpush.bf16.msra.mxu0 0
        %2978 = vmatpush.bf16.msra.mxu0 0
        %2979 = vmatpush.bf16.msra.mxu0 0
        %2980 = vmatpush.bf16.msra.mxu0 0
        %2981 = vmatpush.bf16.msra.mxu0 0
        %2982 = vmatpush.bf16.msra.mxu0 0
        %2983 = vmatpush.bf16.msra.mxu0 %v2737
        %2984 = vmatmul.bf16.gmra.mxu0 %v2730
        %v2985 = vpop.f32.mrf.mxu0
        %v2986 = vadd.f32 %v2967, %v2985
        %v2987 = vpop.f32.mrf.mxu0
        %v2988 = vadd.f32 %v2969, %v2987
        %2989 = vmatmul.bf16.gmra.mxu0 %v2733
        %v2990 = vpop.f32.mrf.mxu0
        %v2991 = vadd.f32 %v2972, %v2990
        %v2992 = vpop.f32.mrf.mxu0
        %v2993 = vadd.f32 %v2974, %v2992
        %2994 = vdwg.mxu0
        %2995 = vmatpush.bf16.msra.mxu0 %v1985
        %2996 = vmatpush.bf16.msra.mxu0 %v1981
        %2997 = vmatpush.bf16.msra.mxu0 %v1977
        %2998 = vmatpush.bf16.msra.mxu0 %v1973
        %2999 = vmatpush.bf16.msra.mxu0 %v1969
        %3000 = vmatpush.bf16.msra.mxu0 %v1965
        %3001 = vmatpush.bf16.msra.mxu0 %v1961
        %3002 = vmatpush.bf16.msra.mxu0 %v1957
        %3003 = vmatmul.bf16.gmra.mxu0 %v376
        %v3004 = vpop.f32.mrf.mxu0
        %v3005 = vadd.f32 %v791, %v3004
        %v3006 = vpop.f32.mrf.mxu0
        %v3007 = vadd.f32 %v791, %v3006
        %3008 = vmatmul.bf16.gmra.mxu0 %v389
        %v3009 = vpop.f32.mrf.mxu0
        %v3010 = vadd.f32 %v791, %v3009
        %v3011 = vpop.f32.mrf.mxu0
        %v3012 = vadd.f32 %v791, %v3011
        %3013 = vdwg.mxu0
        %3014 = vmatpush.bf16.msra.mxu0 %v2017
        %3015 = vmatpush.bf16.msra.mxu0 %v2013
        %3016 = vmatpush.bf16.msra.mxu0 %v2009
        %3017 = vmatpush.bf16.msra.mxu0 %v2005
        %3018 = vmatpush.bf16.msra.mxu0 %v2001
        %3019 = vmatpush.bf16.msra.mxu0 %v1997
        %3020 = vmatpush.bf16.msra.mxu0 %v1993
        %3021 = vmatpush.bf16.msra.mxu0 %v1989
        %3022 = vmatmul.bf16.gmra.mxu0 %v377
        %v3023 = vpop.f32.mrf.mxu0
        %v3024 = vadd.f32 %v3005, %v3023
        %v3025 = vpop.f32.mrf.mxu0
        %v3026 = vadd.f32 %v3007, %v3025
        %3027 = vmatmul.bf16.gmra.mxu0 %v390
        %v3028 = vpop.f32.mrf.mxu0
        %v3029 = vadd.f32 %v3010, %v3028
        %v3030 = vpop.f32.mrf.mxu0
        %v3031 = vadd.f32 %v3012, %v3030
        %3032 = vdwg.mxu0
        %3033 = vmatpush.bf16.msra.mxu0 %v2049
        %3034 = vmatpush.bf16.msra.mxu0 %v2045
        %3035 = vmatpush.bf16.msra.mxu0 %v2041
        %3036 = vmatpush.bf16.msra.mxu0 %v2037
        %3037 = vmatpush.bf16.msra.mxu0 %v2033
        %3038 = vmatpush.bf16.msra.mxu0 %v2029
        %3039 = vmatpush.bf16.msra.mxu0 %v2025
        %3040 = vmatpush.bf16.msra.mxu0 %v2021
        %3041 = vmatmul.bf16.gmra.mxu0 %v378
        %v3042 = vpop.f32.mrf.mxu0
        %v3043 = vadd.f32 %v3024, %v3042
        %v3044 = vpop.f32.mrf.mxu0
        %v3045 = vadd.f32 %v3026, %v3044
        %3046 = vmatmul.bf16.gmra.mxu0 %v391
        %v3047 = vpop.f32.mrf.mxu0
        %v3048 = vadd.f32 %v3029, %v3047
        %v3049 = vpop.f32.mrf.mxu0
        %v3050 = vadd.f32 %v3031, %v3049
        %3051 = vdwg.mxu0
        %3052 = vmatpush.bf16.msra.mxu0 %v2081
        %3053 = vmatpush.bf16.msra.mxu0 %v2077
        %3054 = vmatpush.bf16.msra.mxu0 %v2073
        %3055 = vmatpush.bf16.msra.mxu0 %v2069
        %3056 = vmatpush.bf16.msra.mxu0 %v2065
        %3057 = vmatpush.bf16.msra.mxu0 %v2061
        %3058 = vmatpush.bf16.msra.mxu0 %v2057
        %3059 = vmatpush.bf16.msra.mxu0 %v2053
        %3060 = vmatmul.bf16.gmra.mxu0 %v379
        %v3061 = vpop.f32.mrf.mxu0
        %v3062 = vadd.f32 %v3043, %v3061
        %v3063 = vpop.f32.mrf.mxu0
        %v3064 = vadd.f32 %v3045, %v3063
        %3065 = vmatmul.bf16.gmra.mxu0 %v392
        %v3066 = vpop.f32.mrf.mxu0
        %v3067 = vadd.f32 %v3048, %v3066
        %v3068 = vpop.f32.mrf.mxu0
        %v3069 = vadd.f32 %v3050, %v3068
        %3070 = vdwg.mxu0
        %3071 = vmatpush.bf16.msra.mxu0 %v2113
        %3072 = vmatpush.bf16.msra.mxu0 %v2109
        %3073 = vmatpush.bf16.msra.mxu0 %v2105
        %3074 = vmatpush.bf16.msra.mxu0 %v2101
        %3075 = vmatpush.bf16.msra.mxu0 %v2097
        %3076 = vmatpush.bf16.msra.mxu0 %v2093
        %3077 = vmatpush.bf16.msra.mxu0 %v2089
        %3078 = vmatpush.bf16.msra.mxu0 %v2085
        %3079 = vmatmul.bf16.gmra.mxu0 %v380
        %v3080 = vpop.f32.mrf.mxu0
        %v3081 = vadd.f32 %v3062, %v3080
        %v3082 = vpop.f32.mrf.mxu0
        %v3083 = vadd.f32 %v3064, %v3082
        %3084 = vmatmul.bf16.gmra.mxu0 %v393
        %v3085 = vpop.f32.mrf.mxu0
        %v3086 = vadd.f32 %v3067, %v3085
        %v3087 = vpop.f32.mrf.mxu0
        %v3088 = vadd.f32 %v3069, %v3087
        %3089 = vdwg.mxu0
        %3090 = vmatpush.bf16.msra.mxu0 %v2145
        %3091 = vmatpush.bf16.msra.mxu0 %v2141
        %3092 = vmatpush.bf16.msra.mxu0 %v2137
        %3093 = vmatpush.bf16.msra.mxu0 %v2133
        %3094 = vmatpush.bf16.msra.mxu0 %v2129
        %3095 = vmatpush.bf16.msra.mxu0 %v2125
        %3096 = vmatpush.bf16.msra.mxu0 %v2121
        %3097 = vmatpush.bf16.msra.mxu0 %v2117
        %3098 = vmatmul.bf16.gmra.mxu0 %v381
        %v3099 = vpop.f32.mrf.mxu0
        %v3100 = vadd.f32 %v3081, %v3099
        %v3101 = vpop.f32.mrf.mxu0
        %v3102 = vadd.f32 %v3083, %v3101
        %3103 = vmatmul.bf16.gmra.mxu0 %v394
        %v3104 = vpop.f32.mrf.mxu0
        %v3105 = vadd.f32 %v3086, %v3104
        %v3106 = vpop.f32.mrf.mxu0
        %v3107 = vadd.f32 %v3088, %v3106
        %3108 = vdwg.mxu0
        %3109 = vmatpush.bf16.msra.mxu0 %v2177
        %3110 = vmatpush.bf16.msra.mxu0 %v2173
        %3111 = vmatpush.bf16.msra.mxu0 %v2169
        %3112 = vmatpush.bf16.msra.mxu0 %v2165
        %3113 = vmatpush.bf16.msra.mxu0 %v2161
        %3114 = vmatpush.bf16.msra.mxu0 %v2157
        %3115 = vmatpush.bf16.msra.mxu0 %v2153
        %3116 = vmatpush.bf16.msra.mxu0 %v2149
        %3117 = vmatmul.bf16.gmra.mxu0 %v382
        %v3118 = vpop.f32.mrf.mxu0
        %v3119 = vadd.f32 %v3100, %v3118
        %v3120 = vpop.f32.mrf.mxu0
        %v3121 = vadd.f32 %v3102, %v3120
        %3122 = vmatmul.bf16.gmra.mxu0 %v395
        %v3123 = vpop.f32.mrf.mxu0
        %v3124 = vadd.f32 %v3105, %v3123
        %v3125 = vpop.f32.mrf.mxu0
        %v3126 = vadd.f32 %v3107, %v3125
        %3127 = vdwg.mxu0
        %3128 = vmatpush.bf16.msra.mxu0 %v2209
        %3129 = vmatpush.bf16.msra.mxu0 %v2205
        %3130 = vmatpush.bf16.msra.mxu0 %v2201
        %3131 = vmatpush.bf16.msra.mxu0 %v2197
        %3132 = vmatpush.bf16.msra.mxu0 %v2193
        %3133 = vmatpush.bf16.msra.mxu0 %v2189
        %3134 = vmatpush.bf16.msra.mxu0 %v2185
        %3135 = vmatpush.bf16.msra.mxu0 %v2181
        %3136 = vmatmul.bf16.gmra.mxu0 %v383
        %v3137 = vpop.f32.mrf.mxu0
        %v3138 = vadd.f32 %v3119, %v3137
        %v3139 = vpop.f32.mrf.mxu0
        %v3140 = vadd.f32 %v3121, %v3139
        %3141 = vmatmul.bf16.gmra.mxu0 %v396
        %v3142 = vpop.f32.mrf.mxu0
        %v3143 = vadd.f32 %v3124, %v3142
        %v3144 = vpop.f32.mrf.mxu0
        %v3145 = vadd.f32 %v3126, %v3144
        %3146 = vdwg.mxu0
        %3147 = vmatpush.bf16.msra.mxu0 %v2241
        %3148 = vmatpush.bf16.msra.mxu0 %v2237
        %3149 = vmatpush.bf16.msra.mxu0 %v2233
        %3150 = vmatpush.bf16.msra.mxu0 %v2229
        %3151 = vmatpush.bf16.msra.mxu0 %v2225
        %3152 = vmatpush.bf16.msra.mxu0 %v2221
        %3153 = vmatpush.bf16.msra.mxu0 %v2217
        %3154 = vmatpush.bf16.msra.mxu0 %v2213
        %3155 = vmatmul.bf16.gmra.mxu0 %v384
        %v3156 = vpop.f32.mrf.mxu0
        %v3157 = vadd.f32 %v3138, %v3156
        %v3158 = vpop.f32.mrf.mxu0
        %v3159 = vadd.f32 %v3140, %v3158
        %3160 = vmatmul.bf16.gmra.mxu0 %v397
        %v3161 = vpop.f32.mrf.mxu0
        %v3162 = vadd.f32 %v3143, %v3161
        %v3163 = vpop.f32.mrf.mxu0
        %v3164 = vadd.f32 %v3145, %v3163
        %3165 = vdwg.mxu0
        %3166 = vmatpush.bf16.msra.mxu0 %v2273
        %3167 = vmatpush.bf16.msra.mxu0 %v2269
        %3168 = vmatpush.bf16.msra.mxu0 %v2265
        %3169 = vmatpush.bf16.msra.mxu0 %v2261
        %3170 = vmatpush.bf16.msra.mxu0 %v2257
        %3171 = vmatpush.bf16.msra.mxu0 %v2253
        %3172 = vmatpush.bf16.msra.mxu0 %v2249
        %3173 = vmatpush.bf16.msra.mxu0 %v2245
        %3174 = vmatmul.bf16.gmra.mxu0 %v385
        %v3175 = vpop.f32.mrf.mxu0
        %v3176 = vadd.f32 %v3157, %v3175
        %v3177 = vpop.f32.mrf.mxu0
        %v3178 = vadd.f32 %v3159, %v3177
        %3179 = vmatmul.bf16.gmra.mxu0 %v398
        %v3180 = vpop.f32.mrf.mxu0
        %v3181 = vadd.f32 %v3162, %v3180
        %v3182 = vpop.f32.mrf.mxu0
        %v3183 = vadd.f32 %v3164, %v3182
        %3184 = vdwg.mxu0
        %3185 = vmatpush.bf16.msra.mxu0 %v2305
        %3186 = vmatpush.bf16.msra.mxu0 %v2301
        %3187 = vmatpush.bf16.msra.mxu0 %v2297
        %3188 = vmatpush.bf16.msra.mxu0 %v2293
        %3189 = vmatpush.bf16.msra.mxu0 %v2289
        %3190 = vmatpush.bf16.msra.mxu0 %v2285
        %3191 = vmatpush.bf16.msra.mxu0 %v2281
        %3192 = vmatpush.bf16.msra.mxu0 %v2277
        %3193 = vmatmul.bf16.gmra.mxu0 %v386
        %v3194 = vpop.f32.mrf.mxu0
        %v3195 = vadd.f32 %v3176, %v3194
        %v3196 = vpop.f32.mrf.mxu0
        %v3197 = vadd.f32 %v3178, %v3196
        %3198 = vmatmul.bf16.gmra.mxu0 %v399
        %v3199 = vpop.f32.mrf.mxu0
        %v3200 = vadd.f32 %v3181, %v3199
        %v3201 = vpop.f32.mrf.mxu0
        %v3202 = vadd.f32 %v3183, %v3201
        %3203 = vdwg.mxu0
        %3204 = vmatpush.bf16.msra.mxu0 %v2337
        %3205 = vmatpush.bf16.msra.mxu0 %v2333
        %3206 = vmatpush.bf16.msra.mxu0 %v2329
        %3207 = vmatpush.bf16.msra.mxu0 %v2325
        %3208 = vmatpush.bf16.msra.mxu0 %v2321
        %3209 = vmatpush.bf16.msra.mxu0 %v2317
        %3210 = vmatpush.bf16.msra.mxu0 %v2313
        %3211 = vmatpush.bf16.msra.mxu0 %v2309
        %3212 = vmatmul.bf16.gmra.mxu0 %v387
        %v3213 = vpop.f32.mrf.mxu0
        %v3214 = vadd.f32 %v3195, %v3213
        %v3215 = vpop.f32.mrf.mxu0
        %v3216 = vadd.f32 %v3197, %v3215
        %3217 = vmatmul.bf16.gmra.mxu0 %v400
        %v3218 = vpop.f32.mrf.mxu0
        %v3219 = vadd.f32 %v3200, %v3218
        %v3220 = vpop.f32.mrf.mxu0
        %v3221 = vadd.f32 %v3202, %v3220
        %3222 = vdwg.mxu0
        %3223 = vmatpush.bf16.msra.mxu0 0
        %3224 = vmatpush.bf16.msra.mxu0 0
        %3225 = vmatpush.bf16.msra.mxu0 0
        %3226 = vmatpush.bf16.msra.mxu0 0
        %3227 = vmatpush.bf16.msra.mxu0 0
        %3228 = vmatpush.bf16.msra.mxu0 0
        %3229 = vmatpush.bf16.msra.mxu0 0
        %3230 = vmatpush.bf16.msra.mxu0 %v2740
        %3231 = vmatmul.bf16.gmra.mxu0 %v2730
        %v3232 = vpop.f32.mrf.mxu0
        %v3233 = vadd.f32 %v3214, %v3232
        %v3234 = vpop.f32.mrf.mxu0
        %v3235 = vadd.f32 %v3216, %v3234
        %3236 = vmatmul.bf16.gmra.mxu0 %v2733
        %v3237 = vpop.f32.mrf.mxu0
        %v3238 = vadd.f32 %v3219, %v3237
        %v3239 = vpop.f32.mrf.mxu0
        %v3240 = vadd.f32 %v3221, %v3239
        %3241 = vdwg.mxu0
        %3242 = vmatpush.bf16.msra.mxu0 %v1986
        %3243 = vmatpush.bf16.msra.mxu0 %v1982
        %3244 = vmatpush.bf16.msra.mxu0 %v1978
        %3245 = vmatpush.bf16.msra.mxu0 %v1974
        %3246 = vmatpush.bf16.msra.mxu0 %v1970
        %3247 = vmatpush.bf16.msra.mxu0 %v1966
        %3248 = vmatpush.bf16.msra.mxu0 %v1962
        %3249 = vmatpush.bf16.msra.mxu0 %v1958
        %3250 = vmatmul.bf16.gmra.mxu0 %v376
        %v3251 = vpop.f32.mrf.mxu0
        %v3252 = vadd.f32 %v792, %v3251
        %v3253 = vpop.f32.mrf.mxu0
        %v3254 = vadd.f32 %v792, %v3253
        %3255 = vmatmul.bf16.gmra.mxu0 %v389
        %v3256 = vpop.f32.mrf.mxu0
        %v3257 = vadd.f32 %v792, %v3256
        %v3258 = vpop.f32.mrf.mxu0
        %v3259 = vadd.f32 %v792, %v3258
        %3260 = vdwg.mxu0
        %3261 = vmatpush.bf16.msra.mxu0 %v2018
        %3262 = vmatpush.bf16.msra.mxu0 %v2014
        %3263 = vmatpush.bf16.msra.mxu0 %v2010
        %3264 = vmatpush.bf16.msra.mxu0 %v2006
        %3265 = vmatpush.bf16.msra.mxu0 %v2002
        %3266 = vmatpush.bf16.msra.mxu0 %v1998
        %3267 = vmatpush.bf16.msra.mxu0 %v1994
        %3268 = vmatpush.bf16.msra.mxu0 %v1990
        %3269 = vmatmul.bf16.gmra.mxu0 %v377
        %v3270 = vpop.f32.mrf.mxu0
        %v3271 = vadd.f32 %v3252, %v3270
        %v3272 = vpop.f32.mrf.mxu0
        %v3273 = vadd.f32 %v3254, %v3272
        %3274 = vmatmul.bf16.gmra.mxu0 %v390
        %v3275 = vpop.f32.mrf.mxu0
        %v3276 = vadd.f32 %v3257, %v3275
        %v3277 = vpop.f32.mrf.mxu0
        %v3278 = vadd.f32 %v3259, %v3277
        %3279 = vdwg.mxu0
        %3280 = vmatpush.bf16.msra.mxu0 %v2050
        %3281 = vmatpush.bf16.msra.mxu0 %v2046
        %3282 = vmatpush.bf16.msra.mxu0 %v2042
        %3283 = vmatpush.bf16.msra.mxu0 %v2038
        %3284 = vmatpush.bf16.msra.mxu0 %v2034
        %3285 = vmatpush.bf16.msra.mxu0 %v2030
        %3286 = vmatpush.bf16.msra.mxu0 %v2026
        %3287 = vmatpush.bf16.msra.mxu0 %v2022
        %3288 = vmatmul.bf16.gmra.mxu0 %v378
        %v3289 = vpop.f32.mrf.mxu0
        %v3290 = vadd.f32 %v3271, %v3289
        %v3291 = vpop.f32.mrf.mxu0
        %v3292 = vadd.f32 %v3273, %v3291
        %3293 = vmatmul.bf16.gmra.mxu0 %v391
        %v3294 = vpop.f32.mrf.mxu0
        %v3295 = vadd.f32 %v3276, %v3294
        %v3296 = vpop.f32.mrf.mxu0
        %v3297 = vadd.f32 %v3278, %v3296
        %3298 = vdwg.mxu0
        %3299 = vmatpush.bf16.msra.mxu0 %v2082
        %3300 = vmatpush.bf16.msra.mxu0 %v2078
        %3301 = vmatpush.bf16.msra.mxu0 %v2074
        %3302 = vmatpush.bf16.msra.mxu0 %v2070
        %3303 = vmatpush.bf16.msra.mxu0 %v2066
        %3304 = vmatpush.bf16.msra.mxu0 %v2062
        %3305 = vmatpush.bf16.msra.mxu0 %v2058
        %3306 = vmatpush.bf16.msra.mxu0 %v2054
        %3307 = vmatmul.bf16.gmra.mxu0 %v379
        %v3308 = vpop.f32.mrf.mxu0
        %v3309 = vadd.f32 %v3290, %v3308
        %v3310 = vpop.f32.mrf.mxu0
        %v3311 = vadd.f32 %v3292, %v3310
        %3312 = vmatmul.bf16.gmra.mxu0 %v392
        %v3313 = vpop.f32.mrf.mxu0
        %v3314 = vadd.f32 %v3295, %v3313
        %v3315 = vpop.f32.mrf.mxu0
        %v3316 = vadd.f32 %v3297, %v3315
        %3317 = vdwg.mxu0
        %3318 = vmatpush.bf16.msra.mxu0 %v2114
        %3319 = vmatpush.bf16.msra.mxu0 %v2110
        %3320 = vmatpush.bf16.msra.mxu0 %v2106
        %3321 = vmatpush.bf16.msra.mxu0 %v2102
        %3322 = vmatpush.bf16.msra.mxu0 %v2098
        %3323 = vmatpush.bf16.msra.mxu0 %v2094
        %3324 = vmatpush.bf16.msra.mxu0 %v2090
        %3325 = vmatpush.bf16.msra.mxu0 %v2086
        %3326 = vmatmul.bf16.gmra.mxu0 %v380
        %v3327 = vpop.f32.mrf.mxu0
        %v3328 = vadd.f32 %v3309, %v3327
        %v3329 = vpop.f32.mrf.mxu0
        %v3330 = vadd.f32 %v3311, %v3329
        %3331 = vmatmul.bf16.gmra.mxu0 %v393
        %v3332 = vpop.f32.mrf.mxu0
        %v3333 = vadd.f32 %v3314, %v3332
        %v3334 = vpop.f32.mrf.mxu0
        %v3335 = vadd.f32 %v3316, %v3334
        %3336 = vdwg.mxu0
        %3337 = vmatpush.bf16.msra.mxu0 %v2146
        %3338 = vmatpush.bf16.msra.mxu0 %v2142
        %3339 = vmatpush.bf16.msra.mxu0 %v2138
        %3340 = vmatpush.bf16.msra.mxu0 %v2134
        %3341 = vmatpush.bf16.msra.mxu0 %v2130
        %3342 = vmatpush.bf16.msra.mxu0 %v2126
        %3343 = vmatpush.bf16.msra.mxu0 %v2122
        %3344 = vmatpush.bf16.msra.mxu0 %v2118
        %3345 = vmatmul.bf16.gmra.mxu0 %v381
        %v3346 = vpop.f32.mrf.mxu0
        %v3347 = vadd.f32 %v3328, %v3346
        %v3348 = vpop.f32.mrf.mxu0
        %v3349 = vadd.f32 %v3330, %v3348
        %3350 = vmatmul.bf16.gmra.mxu0 %v394
        %v3351 = vpop.f32.mrf.mxu0
        %v3352 = vadd.f32 %v3333, %v3351
        %v3353 = vpop.f32.mrf.mxu0
        %v3354 = vadd.f32 %v3335, %v3353
        %3355 = vdwg.mxu0
        %3356 = vmatpush.bf16.msra.mxu0 %v2178
        %3357 = vmatpush.bf16.msra.mxu0 %v2174
        %3358 = vmatpush.bf16.msra.mxu0 %v2170
        %3359 = vmatpush.bf16.msra.mxu0 %v2166
        %3360 = vmatpush.bf16.msra.mxu0 %v2162
        %3361 = vmatpush.bf16.msra.mxu0 %v2158
        %3362 = vmatpush.bf16.msra.mxu0 %v2154
        %3363 = vmatpush.bf16.msra.mxu0 %v2150
        %3364 = vmatmul.bf16.gmra.mxu0 %v382
        %v3365 = vpop.f32.mrf.mxu0
        %v3366 = vadd.f32 %v3347, %v3365
        %v3367 = vpop.f32.mrf.mxu0
        %v3368 = vadd.f32 %v3349, %v3367
        %3369 = vmatmul.bf16.gmra.mxu0 %v395
        %v3370 = vpop.f32.mrf.mxu0
        %v3371 = vadd.f32 %v3352, %v3370
        %v3372 = vpop.f32.mrf.mxu0
        %v3373 = vadd.f32 %v3354, %v3372
        %3374 = vdwg.mxu0
        %3375 = vmatpush.bf16.msra.mxu0 %v2210
        %3376 = vmatpush.bf16.msra.mxu0 %v2206
        %3377 = vmatpush.bf16.msra.mxu0 %v2202
        %3378 = vmatpush.bf16.msra.mxu0 %v2198
        %3379 = vmatpush.bf16.msra.mxu0 %v2194
        %3380 = vmatpush.bf16.msra.mxu0 %v2190
        %3381 = vmatpush.bf16.msra.mxu0 %v2186
        %3382 = vmatpush.bf16.msra.mxu0 %v2182
        %3383 = vmatmul.bf16.gmra.mxu0 %v383
        %v3384 = vpop.f32.mrf.mxu0
        %v3385 = vadd.f32 %v3366, %v3384
        %v3386 = vpop.f32.mrf.mxu0
        %v3387 = vadd.f32 %v3368, %v3386
        %3388 = vmatmul.bf16.gmra.mxu0 %v396
        %v3389 = vpop.f32.mrf.mxu0
        %v3390 = vadd.f32 %v3371, %v3389
        %v3391 = vpop.f32.mrf.mxu0
        %v3392 = vadd.f32 %v3373, %v3391
        %3393 = vdwg.mxu0
        %3394 = vmatpush.bf16.msra.mxu0 %v2242
        %3395 = vmatpush.bf16.msra.mxu0 %v2238
        %3396 = vmatpush.bf16.msra.mxu0 %v2234
        %3397 = vmatpush.bf16.msra.mxu0 %v2230
        %3398 = vmatpush.bf16.msra.mxu0 %v2226
        %3399 = vmatpush.bf16.msra.mxu0 %v2222
        %3400 = vmatpush.bf16.msra.mxu0 %v2218
        %3401 = vmatpush.bf16.msra.mxu0 %v2214
        %3402 = vmatmul.bf16.gmra.mxu0 %v384
        %v3403 = vpop.f32.mrf.mxu0
        %v3404 = vadd.f32 %v3385, %v3403
        %v3405 = vpop.f32.mrf.mxu0
        %v3406 = vadd.f32 %v3387, %v3405
        %3407 = vmatmul.bf16.gmra.mxu0 %v397
        %v3408 = vpop.f32.mrf.mxu0
        %v3409 = vadd.f32 %v3390, %v3408
        %v3410 = vpop.f32.mrf.mxu0
        %v3411 = vadd.f32 %v3392, %v3410
        %3412 = vdwg.mxu0
        %3413 = vmatpush.bf16.msra.mxu0 %v2274
        %3414 = vmatpush.bf16.msra.mxu0 %v2270
        %3415 = vmatpush.bf16.msra.mxu0 %v2266
        %3416 = vmatpush.bf16.msra.mxu0 %v2262
        %3417 = vmatpush.bf16.msra.mxu0 %v2258
        %3418 = vmatpush.bf16.msra.mxu0 %v2254
        %3419 = vmatpush.bf16.msra.mxu0 %v2250
        %3420 = vmatpush.bf16.msra.mxu0 %v2246
        %3421 = vmatmul.bf16.gmra.mxu0 %v385
        %v3422 = vpop.f32.mrf.mxu0
        %v3423 = vadd.f32 %v3404, %v3422
        %v3424 = vpop.f32.mrf.mxu0
        %v3425 = vadd.f32 %v3406, %v3424
        %3426 = vmatmul.bf16.gmra.mxu0 %v398
        %v3427 = vpop.f32.mrf.mxu0
        %v3428 = vadd.f32 %v3409, %v3427
        %v3429 = vpop.f32.mrf.mxu0
        %v3430 = vadd.f32 %v3411, %v3429
        %3431 = vdwg.mxu0
        %3432 = vmatpush.bf16.msra.mxu0 %v2306
        %3433 = vmatpush.bf16.msra.mxu0 %v2302
        %3434 = vmatpush.bf16.msra.mxu0 %v2298
        %3435 = vmatpush.bf16.msra.mxu0 %v2294
        %3436 = vmatpush.bf16.msra.mxu0 %v2290
        %3437 = vmatpush.bf16.msra.mxu0 %v2286
        %3438 = vmatpush.bf16.msra.mxu0 %v2282
        %3439 = vmatpush.bf16.msra.mxu0 %v2278
        %3440 = vmatmul.bf16.gmra.mxu0 %v386
        %v3441 = vpop.f32.mrf.mxu0
        %v3442 = vadd.f32 %v3423, %v3441
        %v3443 = vpop.f32.mrf.mxu0
        %v3444 = vadd.f32 %v3425, %v3443
        %3445 = vmatmul.bf16.gmra.mxu0 %v399
        %v3446 = vpop.f32.mrf.mxu0
        %v3447 = vadd.f32 %v3428, %v3446
        %v3448 = vpop.f32.mrf.mxu0
        %v3449 = vadd.f32 %v3430, %v3448
        %3450 = vdwg.mxu0
        %3451 = vmatpush.bf16.msra.mxu0 %v2338
        %3452 = vmatpush.bf16.msra.mxu0 %v2334
        %3453 = vmatpush.bf16.msra.mxu0 %v2330
        %3454 = vmatpush.bf16.msra.mxu0 %v2326
        %3455 = vmatpush.bf16.msra.mxu0 %v2322
        %3456 = vmatpush.bf16.msra.mxu0 %v2318
        %3457 = vmatpush.bf16.msra.mxu0 %v2314
        %3458 = vmatpush.bf16.msra.mxu0 %v2310
        %3459 = vmatmul.bf16.gmra.mxu0 %v387
        %v3460 = vpop.f32.mrf.mxu0
        %v3461 = vadd.f32 %v3442, %v3460
        %v3462 = vpop.f32.mrf.mxu0
        %v3463 = vadd.f32 %v3444, %v3462
        %3464 = vmatmul.bf16.gmra.mxu0 %v400
        %v3465 = vpop.f32.mrf.mxu0
        %v3466 = vadd.f32 %v3447, %v3465
        %v3467 = vpop.f32.mrf.mxu0
        %v3468 = vadd.f32 %v3449, %v3467
        %3469 = vdwg.mxu0
        %3470 = vmatpush.bf16.msra.mxu0 0
        %3471 = vmatpush.bf16.msra.mxu0 0
        %3472 = vmatpush.bf16.msra.mxu0 0
        %3473 = vmatpush.bf16.msra.mxu0 0
        %3474 = vmatpush.bf16.msra.mxu0 0
        %3475 = vmatpush.bf16.msra.mxu0 0
        %3476 = vmatpush.bf16.msra.mxu0 0
        %3477 = vmatpush.bf16.msra.mxu0 %v2743
        %3478 = vmatmul.bf16.gmra.mxu0 %v2730
        %v3479 = vpop.f32.mrf.mxu0
        %v3480 = vadd.f32 %v3461, %v3479
        %v3481 = vpop.f32.mrf.mxu0
        %v3482 = vadd.f32 %v3463, %v3481
        %3483 = vmatmul.bf16.gmra.mxu0 %v2733
        %v3484 = vpop.f32.mrf.mxu0
        %v3485 = vadd.f32 %v3466, %v3484
        %v3486 = vpop.f32.mrf.mxu0
        %v3487 = vadd.f32 %v3468, %v3486
        %3488 = vdwg.mxu0
        %3489 = vmatpush.bf16.msra.mxu0 %v1987
        %3490 = vmatpush.bf16.msra.mxu0 %v1983
        %3491 = vmatpush.bf16.msra.mxu0 %v1979
        %3492 = vmatpush.bf16.msra.mxu0 %v1975
        %3493 = vmatpush.bf16.msra.mxu0 %v1971
        %3494 = vmatpush.bf16.msra.mxu0 %v1967
        %3495 = vmatpush.bf16.msra.mxu0 %v1963
        %3496 = vmatpush.bf16.msra.mxu0 %v1959
        %3497 = vmatmul.bf16.gmra.mxu0 %v376
        %v3498 = vpop.f32.mrf.mxu0
        %v3499 = vadd.f32 %v793, %v3498
        %v3500 = vpop.f32.mrf.mxu0
        %v3501 = vadd.f32 %v793, %v3500
        %3502 = vmatmul.bf16.gmra.mxu0 %v389
        %v3503 = vpop.f32.mrf.mxu0
        %v3504 = vadd.f32 %v793, %v3503
        %v3505 = vpop.f32.mrf.mxu0
        %v3506 = vadd.f32 %v793, %v3505
        %3507 = vdwg.mxu0
        %3508 = vmatpush.bf16.msra.mxu0 %v2019
        %3509 = vmatpush.bf16.msra.mxu0 %v2015
        %3510 = vmatpush.bf16.msra.mxu0 %v2011
        %3511 = vmatpush.bf16.msra.mxu0 %v2007
        %3512 = vmatpush.bf16.msra.mxu0 %v2003
        %3513 = vmatpush.bf16.msra.mxu0 %v1999
        %3514 = vmatpush.bf16.msra.mxu0 %v1995
        %3515 = vmatpush.bf16.msra.mxu0 %v1991
        %3516 = vmatmul.bf16.gmra.mxu0 %v377
        %v3517 = vpop.f32.mrf.mxu0
        %v3518 = vadd.f32 %v3499, %v3517
        %v3519 = vpop.f32.mrf.mxu0
        %v3520 = vadd.f32 %v3501, %v3519
        %3521 = vmatmul.bf16.gmra.mxu0 %v390
        %v3522 = vpop.f32.mrf.mxu0
        %v3523 = vadd.f32 %v3504, %v3522
        %v3524 = vpop.f32.mrf.mxu0
        %v3525 = vadd.f32 %v3506, %v3524
        %3526 = vdwg.mxu0
        %3527 = vmatpush.bf16.msra.mxu0 %v2051
        %3528 = vmatpush.bf16.msra.mxu0 %v2047
        %3529 = vmatpush.bf16.msra.mxu0 %v2043
        %3530 = vmatpush.bf16.msra.mxu0 %v2039
        %3531 = vmatpush.bf16.msra.mxu0 %v2035
        %3532 = vmatpush.bf16.msra.mxu0 %v2031
        %3533 = vmatpush.bf16.msra.mxu0 %v2027
        %3534 = vmatpush.bf16.msra.mxu0 %v2023
        %3535 = vmatmul.bf16.gmra.mxu0 %v378
        %v3536 = vpop.f32.mrf.mxu0
        %v3537 = vadd.f32 %v3518, %v3536
        %v3538 = vpop.f32.mrf.mxu0
        %v3539 = vadd.f32 %v3520, %v3538
        %3540 = vmatmul.bf16.gmra.mxu0 %v391
        %v3541 = vpop.f32.mrf.mxu0
        %v3542 = vadd.f32 %v3523, %v3541
        %v3543 = vpop.f32.mrf.mxu0
        %v3544 = vadd.f32 %v3525, %v3543
        %3545 = vdwg.mxu0
        %3546 = vmatpush.bf16.msra.mxu0 %v2083
        %3547 = vmatpush.bf16.msra.mxu0 %v2079
        %3548 = vmatpush.bf16.msra.mxu0 %v2075
        %3549 = vmatpush.bf16.msra.mxu0 %v2071
        %3550 = vmatpush.bf16.msra.mxu0 %v2067
        %3551 = vmatpush.bf16.msra.mxu0 %v2063
        %3552 = vmatpush.bf16.msra.mxu0 %v2059
        %3553 = vmatpush.bf16.msra.mxu0 %v2055
        %3554 = vmatmul.bf16.gmra.mxu0 %v379
        %v3555 = vpop.f32.mrf.mxu0
        %v3556 = vadd.f32 %v3537, %v3555
        %v3557 = vpop.f32.mrf.mxu0
        %v3558 = vadd.f32 %v3539, %v3557
        %3559 = vmatmul.bf16.gmra.mxu0 %v392
        %v3560 = vpop.f32.mrf.mxu0
        %v3561 = vadd.f32 %v3542, %v3560
        %v3562 = vpop.f32.mrf.mxu0
        %v3563 = vadd.f32 %v3544, %v3562
        %3564 = vdwg.mxu0
        %3565 = vmatpush.bf16.msra.mxu0 %v2115
        %3566 = vmatpush.bf16.msra.mxu0 %v2111
        %3567 = vmatpush.bf16.msra.mxu0 %v2107
        %3568 = vmatpush.bf16.msra.mxu0 %v2103
        %3569 = vmatpush.bf16.msra.mxu0 %v2099
        %3570 = vmatpush.bf16.msra.mxu0 %v2095
        %3571 = vmatpush.bf16.msra.mxu0 %v2091
        %3572 = vmatpush.bf16.msra.mxu0 %v2087
        %3573 = vmatmul.bf16.gmra.mxu0 %v380
        %v3574 = vpop.f32.mrf.mxu0
        %v3575 = vadd.f32 %v3556, %v3574
        %v3576 = vpop.f32.mrf.mxu0
        %v3577 = vadd.f32 %v3558, %v3576
        %3578 = vmatmul.bf16.gmra.mxu0 %v393
        %v3579 = vpop.f32.mrf.mxu0
        %v3580 = vadd.f32 %v3561, %v3579
        %v3581 = vpop.f32.mrf.mxu0
        %v3582 = vadd.f32 %v3563, %v3581
        %3583 = vdwg.mxu0
        %3584 = vmatpush.bf16.msra.mxu0 %v2147
        %3585 = vmatpush.bf16.msra.mxu0 %v2143
        %3586 = vmatpush.bf16.msra.mxu0 %v2139
        %3587 = vmatpush.bf16.msra.mxu0 %v2135
        %3588 = vmatpush.bf16.msra.mxu0 %v2131
        %3589 = vmatpush.bf16.msra.mxu0 %v2127
        %3590 = vmatpush.bf16.msra.mxu0 %v2123
        %3591 = vmatpush.bf16.msra.mxu0 %v2119
        %3592 = vmatmul.bf16.gmra.mxu0 %v381
        %v3593 = vpop.f32.mrf.mxu0
        %v3594 = vadd.f32 %v3575, %v3593
        %v3595 = vpop.f32.mrf.mxu0
        %v3596 = vadd.f32 %v3577, %v3595
        %3597 = vmatmul.bf16.gmra.mxu0 %v394
        %v3598 = vpop.f32.mrf.mxu0
        %v3599 = vadd.f32 %v3580, %v3598
        %v3600 = vpop.f32.mrf.mxu0
        %v3601 = vadd.f32 %v3582, %v3600
        %3602 = vdwg.mxu0
        %3603 = vmatpush.bf16.msra.mxu0 %v2179
        %3604 = vmatpush.bf16.msra.mxu0 %v2175
        %3605 = vmatpush.bf16.msra.mxu0 %v2171
        %3606 = vmatpush.bf16.msra.mxu0 %v2167
        %3607 = vmatpush.bf16.msra.mxu0 %v2163
        %3608 = vmatpush.bf16.msra.mxu0 %v2159
        %3609 = vmatpush.bf16.msra.mxu0 %v2155
        %3610 = vmatpush.bf16.msra.mxu0 %v2151
        %3611 = vmatmul.bf16.gmra.mxu0 %v382
        %v3612 = vpop.f32.mrf.mxu0
        %v3613 = vadd.f32 %v3594, %v3612
        %v3614 = vpop.f32.mrf.mxu0
        %v3615 = vadd.f32 %v3596, %v3614
        %3616 = vmatmul.bf16.gmra.mxu0 %v395
        %v3617 = vpop.f32.mrf.mxu0
        %v3618 = vadd.f32 %v3599, %v3617
        %v3619 = vpop.f32.mrf.mxu0
        %v3620 = vadd.f32 %v3601, %v3619
        %3621 = vdwg.mxu0
        %3622 = vmatpush.bf16.msra.mxu0 %v2211
        %3623 = vmatpush.bf16.msra.mxu0 %v2207
        %3624 = vmatpush.bf16.msra.mxu0 %v2203
        %3625 = vmatpush.bf16.msra.mxu0 %v2199
        %3626 = vmatpush.bf16.msra.mxu0 %v2195
        %3627 = vmatpush.bf16.msra.mxu0 %v2191
        %3628 = vmatpush.bf16.msra.mxu0 %v2187
        %3629 = vmatpush.bf16.msra.mxu0 %v2183
        %3630 = vmatmul.bf16.gmra.mxu0 %v383
        %v3631 = vpop.f32.mrf.mxu0
        %v3632 = vadd.f32 %v3613, %v3631
        %v3633 = vpop.f32.mrf.mxu0
        %v3634 = vadd.f32 %v3615, %v3633
        %3635 = vmatmul.bf16.gmra.mxu0 %v396
        %v3636 = vpop.f32.mrf.mxu0
        %v3637 = vadd.f32 %v3618, %v3636
        %v3638 = vpop.f32.mrf.mxu0
        %v3639 = vadd.f32 %v3620, %v3638
        %3640 = vdwg.mxu0
        %3641 = vmatpush.bf16.msra.mxu0 %v2243
        %3642 = vmatpush.bf16.msra.mxu0 %v2239
        %3643 = vmatpush.bf16.msra.mxu0 %v2235
        %3644 = vmatpush.bf16.msra.mxu0 %v2231
        %3645 = vmatpush.bf16.msra.mxu0 %v2227
        %3646 = vmatpush.bf16.msra.mxu0 %v2223
        %3647 = vmatpush.bf16.msra.mxu0 %v2219
        %3648 = vmatpush.bf16.msra.mxu0 %v2215
        %3649 = vmatmul.bf16.gmra.mxu0 %v384
        %v3650 = vpop.f32.mrf.mxu0
        %v3651 = vadd.f32 %v3632, %v3650
        %v3652 = vpop.f32.mrf.mxu0
        %v3653 = vadd.f32 %v3634, %v3652
        %3654 = vmatmul.bf16.gmra.mxu0 %v397
        %v3655 = vpop.f32.mrf.mxu0
        %v3656 = vadd.f32 %v3637, %v3655
        %v3657 = vpop.f32.mrf.mxu0
        %v3658 = vadd.f32 %v3639, %v3657
        %3659 = vdwg.mxu0
        %3660 = vmatpush.bf16.msra.mxu0 %v2275
        %3661 = vmatpush.bf16.msra.mxu0 %v2271
        %3662 = vmatpush.bf16.msra.mxu0 %v2267
        %3663 = vmatpush.bf16.msra.mxu0 %v2263
        %3664 = vmatpush.bf16.msra.mxu0 %v2259
        %3665 = vmatpush.bf16.msra.mxu0 %v2255
        %3666 = vmatpush.bf16.msra.mxu0 %v2251
        %3667 = vmatpush.bf16.msra.mxu0 %v2247
        %3668 = vmatmul.bf16.gmra.mxu0 %v385
        %v3669 = vpop.f32.mrf.mxu0
        %v3670 = vadd.f32 %v3651, %v3669
        %v3671 = vpop.f32.mrf.mxu0
        %v3672 = vadd.f32 %v3653, %v3671
        %3673 = vmatmul.bf16.gmra.mxu0 %v398
        %v3674 = vpop.f32.mrf.mxu0
        %v3675 = vadd.f32 %v3656, %v3674
        %v3676 = vpop.f32.mrf.mxu0
        %v3677 = vadd.f32 %v3658, %v3676
        %3678 = vdwg.mxu0
        %3679 = vmatpush.bf16.msra.mxu0 %v2307
        %3680 = vmatpush.bf16.msra.mxu0 %v2303
        %3681 = vmatpush.bf16.msra.mxu0 %v2299
        %3682 = vmatpush.bf16.msra.mxu0 %v2295
        %3683 = vmatpush.bf16.msra.mxu0 %v2291
        %3684 = vmatpush.bf16.msra.mxu0 %v2287
        %3685 = vmatpush.bf16.msra.mxu0 %v2283
        %3686 = vmatpush.bf16.msra.mxu0 %v2279
        %3687 = vmatmul.bf16.gmra.mxu0 %v386
        %v3688 = vpop.f32.mrf.mxu0
        %v3689 = vadd.f32 %v3670, %v3688
        %v3690 = vpop.f32.mrf.mxu0
        %v3691 = vadd.f32 %v3672, %v3690
        %3692 = vmatmul.bf16.gmra.mxu0 %v399
        %v3693 = vpop.f32.mrf.mxu0
        %v3694 = vadd.f32 %v3675, %v3693
        %v3695 = vpop.f32.mrf.mxu0
        %v3696 = vadd.f32 %v3677, %v3695
        %3697 = vdwg.mxu0
        %3698 = vmatpush.bf16.msra.mxu0 %v2339
        %3699 = vmatpush.bf16.msra.mxu0 %v2335
        %3700 = vmatpush.bf16.msra.mxu0 %v2331
        %3701 = vmatpush.bf16.msra.mxu0 %v2327
        %3702 = vmatpush.bf16.msra.mxu0 %v2323
        %3703 = vmatpush.bf16.msra.mxu0 %v2319
        %3704 = vmatpush.bf16.msra.mxu0 %v2315
        %3705 = vmatpush.bf16.msra.mxu0 %v2311
        %3706 = vmatmul.bf16.gmra.mxu0 %v387
        %v3707 = vpop.f32.mrf.mxu0
        %v3708 = vadd.f32 %v3689, %v3707
        %v3709 = vpop.f32.mrf.mxu0
        %v3710 = vadd.f32 %v3691, %v3709
        %3711 = vmatmul.bf16.gmra.mxu0 %v400
        %v3712 = vpop.f32.mrf.mxu0
        %v3713 = vadd.f32 %v3694, %v3712
        %v3714 = vpop.f32.mrf.mxu0
        %v3715 = vadd.f32 %v3696, %v3714
        %3716 = vdwg.mxu0
        %3717 = vmatpush.bf16.msra.mxu0 0
        %3718 = vmatpush.bf16.msra.mxu0 0
        %3719 = vmatpush.bf16.msra.mxu0 0
        %3720 = vmatpush.bf16.msra.mxu0 0
        %3721 = vmatpush.bf16.msra.mxu0 0
        %3722 = vmatpush.bf16.msra.mxu0 0
        %3723 = vmatpush.bf16.msra.mxu0 0
        %3724 = vmatpush.bf16.msra.mxu0 %v2746
        %3725 = vmatmul.bf16.gmra.mxu0 %v2730
        %v3726 = vpop.f32.mrf.mxu0
        %v3727 = vadd.f32 %v3708, %v3726
        %v3728 = vpop.f32.mrf.mxu0
        %v3729 = vadd.f32 %v3710, %v3728
        %3730 = vmatmul.bf16.gmra.mxu0 %v2733
        %v3731 = vpop.f32.mrf.mxu0
        %v3732 = vadd.f32 %v3713, %v3731
        %v3733 = vpop.f32.mrf.mxu0
        %v3734 = vadd.f32 %v3715, %v3733
        %3735 = vdwg.mxu0
        %v3736 = vmax.f32 %v2986, 0.0
        %v3737 = vmax.f32 %v3233, 0.0
        %v3738 = vmax.f32 %v3480, 0.0
        %v3739 = vmax.f32 %v3727, 0.0
        %v3740 = vmax.f32 %v2988, 0.0
        %v3741 = vmax.f32 %v3235, 0.0
        %v3742 = vmax.f32 %v3482, 0.0
        %v3743 = vmax.f32 %v3729, 0.0
        %v3744 = vmax.f32 %v2991, 0.0
        %v3745 = vmax.f32 %v3238, 0.0
        %v3746 = vmax.f32 %v3485, 0.0
        %v3747 = vmax.f32 %v3732, 0.0
        %v3748 = vmax.f32 %v2993, 0.0
        %v3749 = vmax.f32 %v3240, 0.0
        %v3750 = vmax.f32 %v3487, 0.0
        %v3751 = vmax.f32 %v3734, 0.0
        %v3752 = vpack.c.bf16 %v3740, %v3736
        %v3753 = vpack.c.bf16 %v3741, %v3737
        %v3754 = vpack.c.bf16 %v3742, %v3738
        %v3755 = vpack.c.bf16 %v3743, %v3739
        %v3756 = vpack.c.bf16 %v3748, %v3744
        %v3757 = vpack.c.bf16 %v3749, %v3745
        %v3758 = vpack.c.bf16 %v3750, %v3746
        %v3759 = vpack.c.bf16 %v3751, %v3747
        %v3760 = vld [vmem:[#allocation7] sm:$0xf]
        %v3761 = vld [vmem:[#allocation7 + $0x4] sm:$0xf]
        %v3762 = vld [vmem:[#allocation7 + $0x8] sm:$0xf]
        %v3763 = vld [vmem:[#allocation7 + $0xc] sm:$0xf]
        %v3764 = vld [vmem:[#allocation7 + $0x10] sm:$0xf]
        %v3765 = vld [vmem:[#allocation7 + $0x14] sm:$0xf]
        %v3766 = vld [vmem:[#allocation7 + $0x18] sm:$0xf]
        %v3767 = vld [vmem:[#allocation7 + $0x1c] sm:$0xf]
        %v3768 = vld [vmem:[#allocation7 + $0x20] sm:$0xf]
        %v3769 = vld [vmem:[#allocation7 + $0x24] sm:$0xf]
        %v3770 = vld [vmem:[#allocation7 + $0x28] sm:$0xf]
        %v3771 = vld [vmem:[#allocation7 + $0x2c] sm:$0xf]
        %v3772 = vld [vmem:[#allocation7 + $0x30] sm:$0xf]
        %v3773 = vld [vmem:[#allocation7 + $0x34] sm:$0xf]
        %v3774 = vld [vmem:[#allocation7 + $0x38] sm:$0xf]
        %v3775 = vld [vmem:[#allocation7 + $0x3c] sm:$0xf]
        %v3776 = vld [vmem:[#allocation7 + $0x40] sm:$0xf]
        %v3777 = vld [vmem:[#allocation7 + $0x44] sm:$0xf]
        %v3778 = vld [vmem:[#allocation7 + $0x48] sm:$0xf]
        %v3779 = vld [vmem:[#allocation7 + $0x4c] sm:$0xf]
        %v3780 = vld [vmem:[#allocation7 + $0x50] sm:$0xf]
        %v3781 = vld [vmem:[#allocation7 + $0x54] sm:$0xf]
        %v3782 = vld [vmem:[#allocation7 + $0x58] sm:$0xf]
        %v3783 = vld [vmem:[#allocation7 + $0x5c] sm:$0xf]
        %v3784 = vld [vmem:[#allocation7 + $0x60] sm:$0xf]
        %v3785 = vld [vmem:[#allocation7 + $0x64] sm:$0xf]
        %v3786 = vld [vmem:[#allocation7 + $0x68] sm:$0xf]
        %v3787 = vld [vmem:[#allocation7 + $0x6c] sm:$0xf]
        %v3788 = vld [vmem:[#allocation7 + $0x70] sm:$0xf]
        %v3789 = vld [vmem:[#allocation7 + $0x74] sm:$0xf]
        %v3790 = vld [vmem:[#allocation7 + $0x78] sm:$0xf]
        %v3791 = vld [vmem:[#allocation7 + $0x7c] sm:$0xf]
        %v3792 = vld [vmem:[#allocation7 + $0x80] sm:$0xf]
        %v3793 = vld [vmem:[#allocation7 + $0x84] sm:$0xf]
        %v3794 = vld [vmem:[#allocation7 + $0x88] sm:$0xf]
        %v3795 = vld [vmem:[#allocation7 + $0x8c] sm:$0xf]
        %v3796 = vld [vmem:[#allocation7 + $0x90] sm:$0xf]
        %v3797 = vld [vmem:[#allocation7 + $0x94] sm:$0xf]
        %v3798 = vld [vmem:[#allocation7 + $0x98] sm:$0xf]
        %v3799 = vld [vmem:[#allocation7 + $0x9c] sm:$0xf]
        %v3800 = vld [vmem:[#allocation7 + $0xa0] sm:$0xf]
        %v3801 = vld [vmem:[#allocation7 + $0xa4] sm:$0xf]
        %v3802 = vld [vmem:[#allocation7 + $0xa8] sm:$0xf]
        %v3803 = vld [vmem:[#allocation7 + $0xac] sm:$0xf]
        %v3804 = vld [vmem:[#allocation7 + $0xb0] sm:$0xf]
        %v3805 = vld [vmem:[#allocation7 + $0xb4] sm:$0xf]
        %v3806 = vld [vmem:[#allocation7 + $0xb8] sm:$0xf]
        %v3807 = vld [vmem:[#allocation7 + $0xbc] sm:$0xf]
        %v3808 = vld [vmem:[#allocation7 + $0xc0] sm:$0xf]
        %v3809 = vld [vmem:[#allocation7 + $0xc4] sm:$0xf]
        %v3810 = vld [vmem:[#allocation7 + $0xc8] sm:$0xf]
        %v3811 = vld [vmem:[#allocation7 + $0xcc] sm:$0xf]
        %v3812 = vld [vmem:[#allocation7 + $0xd0] sm:$0xf]
        %v3813 = vld [vmem:[#allocation7 + $0xd4] sm:$0xf]
        %v3814 = vld [vmem:[#allocation7 + $0xd8] sm:$0xf]
        %v3815 = vld [vmem:[#allocation7 + $0xdc] sm:$0xf]
        %v3816 = vld [vmem:[#allocation7 + $0xe0] sm:$0xf]
        %v3817 = vld [vmem:[#allocation7 + $0xe4] sm:$0xf]
        %v3818 = vld [vmem:[#allocation7 + $0xe8] sm:$0xf]
        %v3819 = vld [vmem:[#allocation7 + $0xec] sm:$0xf]
        %v3820 = vld [vmem:[#allocation7 + $0xf0] sm:$0xf]
        %v3821 = vld [vmem:[#allocation7 + $0xf4] sm:$0xf]
        %v3822 = vld [vmem:[#allocation7 + $0xf8] sm:$0xf]
        %v3823 = vld [vmem:[#allocation7 + $0xfc] sm:$0xf]
        %v3824 = vld [vmem:[#allocation9] sm:$0x1]
        %v3826 = vperm.slane %v3824, 0
        %v3892 = vunpack.c.l.b16 %v3760
        %v3893 = vunpack.c.l.b16 %v3761
        %v3894 = vunpack.c.l.b16 %v3762
        %v3895 = vunpack.c.l.b16 %v3763
        %v3896 = vunpack.c.l.b16 %v3764
        %v3897 = vunpack.c.l.b16 %v3765
        %v3898 = vunpack.c.l.b16 %v3766
        %v3899 = vunpack.c.l.b16 %v3767
        %v3900 = vunpack.c.l.b16 %v3768
        %v3901 = vunpack.c.l.b16 %v3769
        %v3902 = vunpack.c.l.b16 %v3770
        %v3903 = vunpack.c.l.b16 %v3771
        %v3904 = vunpack.c.l.b16 %v3772
        %v3905 = vunpack.c.l.b16 %v3773
        %v3906 = vunpack.c.l.b16 %v3774
        %v3907 = vunpack.c.l.b16 %v3775
        %v3908 = vunpack.c.l.b16 %v3776
        %v3909 = vunpack.c.l.b16 %v3777
        %v3910 = vunpack.c.l.b16 %v3778
        %v3911 = vunpack.c.l.b16 %v3779
        %v3912 = vunpack.c.l.b16 %v3780
        %v3913 = vunpack.c.l.b16 %v3781
        %v3914 = vunpack.c.l.b16 %v3782
        %v3915 = vunpack.c.l.b16 %v3783
        %v3916 = vunpack.c.l.b16 %v3784
        %v3917 = vunpack.c.l.b16 %v3785
        %v3918 = vunpack.c.l.b16 %v3786
        %v3919 = vunpack.c.l.b16 %v3787
        %v3920 = vunpack.c.l.b16 %v3788
        %v3921 = vunpack.c.l.b16 %v3789
        %v3922 = vunpack.c.l.b16 %v3790
        %v3923 = vunpack.c.l.b16 %v3791
        %v3924 = vunpack.c.l.b16 %v3792
        %v3925 = vunpack.c.l.b16 %v3793
        %v3926 = vunpack.c.l.b16 %v3794
        %v3927 = vunpack.c.l.b16 %v3795
        %v3928 = vunpack.c.l.b16 %v3796
        %v3929 = vunpack.c.l.b16 %v3797
        %v3930 = vunpack.c.l.b16 %v3798
        %v3931 = vunpack.c.l.b16 %v3799
        %v3932 = vunpack.c.l.b16 %v3800
        %v3933 = vunpack.c.l.b16 %v3801
        %v3934 = vunpack.c.l.b16 %v3802
        %v3935 = vunpack.c.l.b16 %v3803
        %v3936 = vunpack.c.l.b16 %v3804
        %v3937 = vunpack.c.l.b16 %v3805
        %v3938 = vunpack.c.l.b16 %v3806
        %v3939 = vunpack.c.l.b16 %v3807
        %v3940 = vunpack.c.l.b16 %v3808
        %v3941 = vunpack.c.l.b16 %v3809
        %v3942 = vunpack.c.l.b16 %v3810
        %v3943 = vunpack.c.l.b16 %v3811
        %v3944 = vunpack.c.l.b16 %v3812
        %v3945 = vunpack.c.l.b16 %v3813
        %v3946 = vunpack.c.l.b16 %v3814
        %v3947 = vunpack.c.l.b16 %v3815
        %v3948 = vunpack.c.l.b16 %v3816
        %v3949 = vunpack.c.l.b16 %v3817
        %v3950 = vunpack.c.l.b16 %v3818
        %v3951 = vunpack.c.l.b16 %v3819
        %v3952 = vunpack.c.l.b16 %v3820
        %v3953 = vunpack.c.l.b16 %v3821
        %v3954 = vunpack.c.l.b16 %v3822
        %v3955 = vunpack.c.l.b16 %v3823
        %v3956 = vpack.c.b16 %v3893, %v3892
        %v3957 = vpack.c.b16 %v3895, %v3894
        %v3958 = vpack.c.b16 %v3897, %v3896
        %v3959 = vpack.c.b16 %v3899, %v3898
        %v3960 = vpack.c.b16 %v3901, %v3900
        %v3961 = vpack.c.b16 %v3903, %v3902
        %v3962 = vpack.c.b16 %v3905, %v3904
        %v3963 = vpack.c.b16 %v3907, %v3906
        %v3964 = vpack.c.b16 %v3909, %v3908
        %v3965 = vpack.c.b16 %v3911, %v3910
        %v3966 = vpack.c.b16 %v3913, %v3912
        %v3967 = vpack.c.b16 %v3915, %v3914
        %v3968 = vpack.c.b16 %v3917, %v3916
        %v3969 = vpack.c.b16 %v3919, %v3918
        %v3970 = vpack.c.b16 %v3921, %v3920
        %v3971 = vpack.c.b16 %v3923, %v3922
        %v3972 = vpack.c.b16 %v3925, %v3924
        %v3973 = vpack.c.b16 %v3927, %v3926
        %v3974 = vpack.c.b16 %v3929, %v3928
        %v3975 = vpack.c.b16 %v3931, %v3930
        %v3976 = vpack.c.b16 %v3933, %v3932
        %v3977 = vpack.c.b16 %v3935, %v3934
        %v3978 = vpack.c.b16 %v3937, %v3936
        %v3979 = vpack.c.b16 %v3939, %v3938
        %v3980 = vpack.c.b16 %v3941, %v3940
        %v3981 = vpack.c.b16 %v3943, %v3942
        %v3982 = vpack.c.b16 %v3945, %v3944
        %v3983 = vpack.c.b16 %v3947, %v3946
        %v3984 = vpack.c.b16 %v3949, %v3948
        %v3985 = vpack.c.b16 %v3951, %v3950
        %v3986 = vpack.c.b16 %v3953, %v3952
        %v3987 = vpack.c.b16 %v3955, %v3954
        %4020 = vmatpush.bf16.msra.mxu0 %v3963
        %4021 = vmatpush.bf16.msra.mxu0 %v3962
        %4022 = vmatpush.bf16.msra.mxu0 %v3961
        %4023 = vmatpush.bf16.msra.mxu0 %v3960
        %4024 = vmatpush.bf16.msra.mxu0 %v3959
        %4025 = vmatpush.bf16.msra.mxu0 %v3958
        %4026 = vmatpush.bf16.msra.mxu0 %v3957
        %4027 = vmatpush.bf16.msra.mxu0 %v3956
        %4028 = vmatmul.bf16.gmra.mxu0 %v3752
        %v4029 = vpop.f32.mrf.mxu0
        %v4030 = vadd.f32 %v3826, %v4029
        %v4031 = vpop.f32.mrf.mxu0
        %v4032 = vadd.f32 %v3826, %v4031
        %4033 = vmatmul.bf16.gmra.mxu0 %v3756
        %v4034 = vpop.f32.mrf.mxu0
        %v4035 = vadd.f32 %v3826, %v4034
        %v4036 = vpop.f32.mrf.mxu0
        %v4037 = vadd.f32 %v3826, %v4036
        %4038 = vdwg.mxu0
        %4039 = vmatpush.bf16.msra.mxu0 %v3971
        %4040 = vmatpush.bf16.msra.mxu0 %v3970
        %4041 = vmatpush.bf16.msra.mxu0 %v3969
        %4042 = vmatpush.bf16.msra.mxu0 %v3968
        %4043 = vmatpush.bf16.msra.mxu0 %v3967
        %4044 = vmatpush.bf16.msra.mxu0 %v3966
        %4045 = vmatpush.bf16.msra.mxu0 %v3965
        %4046 = vmatpush.bf16.msra.mxu0 %v3964
        %4047 = vmatmul.bf16.gmra.mxu0 %v3753
        %v4048 = vpop.f32.mrf.mxu0
        %v4049 = vadd.f32 %v4030, %v4048
        %v4050 = vpop.f32.mrf.mxu0
        %v4051 = vadd.f32 %v4032, %v4050
        %4052 = vmatmul.bf16.gmra.mxu0 %v3757
        %v4053 = vpop.f32.mrf.mxu0
        %v4054 = vadd.f32 %v4035, %v4053
        %v4055 = vpop.f32.mrf.mxu0
        %v4056 = vadd.f32 %v4037, %v4055
        %4057 = vdwg.mxu0
        %4058 = vmatpush.bf16.msra.mxu0 %v3979
        %4059 = vmatpush.bf16.msra.mxu0 %v3978
        %4060 = vmatpush.bf16.msra.mxu0 %v3977
        %4061 = vmatpush.bf16.msra.mxu0 %v3976
        %4062 = vmatpush.bf16.msra.mxu0 %v3975
        %4063 = vmatpush.bf16.msra.mxu0 %v3974
        %4064 = vmatpush.bf16.msra.mxu0 %v3973
        %4065 = vmatpush.bf16.msra.mxu0 %v3972
        %4066 = vmatmul.bf16.gmra.mxu0 %v3754
        %v4067 = vpop.f32.mrf.mxu0
        %v4068 = vadd.f32 %v4049, %v4067
        %v4069 = vpop.f32.mrf.mxu0
        %v4070 = vadd.f32 %v4051, %v4069
        %4071 = vmatmul.bf16.gmra.mxu0 %v3758
        %v4072 = vpop.f32.mrf.mxu0
        %v4073 = vadd.f32 %v4054, %v4072
        %v4074 = vpop.f32.mrf.mxu0
        %v4075 = vadd.f32 %v4056, %v4074
        %4076 = vdwg.mxu0
        %4077 = vmatpush.bf16.msra.mxu0 %v3987
        %4078 = vmatpush.bf16.msra.mxu0 %v3986
        %4079 = vmatpush.bf16.msra.mxu0 %v3985
        %4080 = vmatpush.bf16.msra.mxu0 %v3984
        %4081 = vmatpush.bf16.msra.mxu0 %v3983
        %4082 = vmatpush.bf16.msra.mxu0 %v3982
        %4083 = vmatpush.bf16.msra.mxu0 %v3981
        %4084 = vmatpush.bf16.msra.mxu0 %v3980
        %4085 = vmatmul.bf16.gmra.mxu0 %v3755
        %v4086 = vpop.f32.mrf.mxu0
        %v4087 = vadd.f32 %v4068, %v4086
        %v4088 = vpop.f32.mrf.mxu0
        %v4089 = vadd.f32 %v4070, %v4088
        %4090 = vmatmul.bf16.gmra.mxu0 %v3759
        %v4091 = vpop.f32.mrf.mxu0
        %v4092 = vadd.f32 %v4073, %v4091
        %v4093 = vpop.f32.mrf.mxu0
        %v4094 = vadd.f32 %v4075, %v4093
        %4095 = vdwg.mxu0
        %v4096 = vpack.c.bf16 %v4087, %v4087
        %v4097 = vpack.c.bf16 %v4089, %v4089
        %v4098 = vpack.c.bf16 %v4092, %v4092
        %v4099 = vpack.c.bf16 %v4094, %v4094
        %4100 = vst [vmem:[%s311] sm:$0xf] %v4096
        %4101 = vst [vmem:[%s311 + $0x4] sm:$0xf] %v4097
        %4102 = vst [vmem:[%s311 + $0x8] sm:$0xf] %v4098
        %4103 = vst [vmem:[%s311 + $0xc] sm:$0xf] %v4099
        %s4104 = sand.u32 %s139, 1
        %s4105 = sand.u32 %s139, 1
        %s4106 = smul.addr %s4105, 16
        %s4107 = scalar_lea.vmem [#allocation10], %s4106
        // Predicated region
        $region61: #{sarcasm_mlp_forward.1} parent=39 // pred_check
          %p4108 = pneg %p149
        $region62: #{sarcasm_mlp_forward.1} parent=39 // pred_check_branch
          %4110 = sbr.rel (%p4108) target = $region64
        $region63: #{sarcasm_mlp_forward.1} parent=39 // pred_region
          %s4111 = smul.u32 4, %s21
          %s4112 = ssub.s32 6, %s4111
          %p4113 = scmp.lt.s32.totalorder %s4112, 4
          %s4114 = scalar_select %p4113, %s4112, 4
          %s4115 = smul.u32 4, %s4114
          %p4116 = scmp.ne.s32.totalorder 0, %s4115
          %s4117 = smul.addr %s4111, 4
          %s4118 = scalar_lea.vmem %s5, %s4117
          // Predicated region
          $region65: #{sarcasm_mlp_forward.1} parent=63 // pred_check
            %p4119 = pneg %p4116
          $region66: #{sarcasm_mlp_forward.1} parent=63 // pred_check_branch
            %4121 = sbr.rel (%p4119) target = $region68
          $region67: #{sarcasm_mlp_forward.1} parent=63 // pred_region
            // Predicated region
            $region69: #{sarcasm_mlp_forward.1} parent=67 // pred_check
              _
            $region70: #{sarcasm_mlp_forward.1} parent=67 // pred_check_branch
              %4123 = sbr.rel target = $region72
            $region71: #{sarcasm_mlp_forward.1} parent=67 // pred_region
              // Predicated region
              $region91: #{sarcasm_mlp_forward.1} parent=71 // pred_check
                _
              $region92: #{sarcasm_mlp_forward.1} parent=71 // pred_check_branch
                %4179 = sbr.rel (0) target = $region94
              $region93: #{sarcasm_mlp_forward.1} parent=71 // pred_region
                %s4181 = ssub.s32 16, 1
                %s4182 = sshrl.u32 %s4114, 2
                // While loop
                $region95: #{sarcasm_mlp_forward.1} parent=93 // loop_pre_header
                  _
                $region96: #{sarcasm_mlp_forward.1} parent=93 // loop_header
                  %s4184 = sphi 0, %s4186
                  %p4185 = scmp.ge.s32.totalorder %s4184, %s4182
                  %s4189 = sphi 0, %s4202
                  %s4190 = sphi %s4107, %s4205
                  %s4191 = sphi %s4118, %s4206
                $region97: #{sarcasm_mlp_forward.1} parent=93 // loop_header_branch
                  %4188 = sbr.rel (%p4185) target = $region101
                $region98: #{sarcasm_mlp_forward.1} parent=93 // loop_body
                  %v4192 = vld [vmem:[%s4190] sm:%s4181]
                  %4193 = vst [vmem:[%s4191] sm:%s4181] %v4192
                  %v4194 = vld [vmem:[%s4190 + $0x4] sm:%s4181]
                  %4195 = vst [vmem:[%s4191 + $0x4] sm:%s4181] %v4194
                  %v4196 = vld [vmem:[%s4190 + $0x8] sm:%s4181]
                  %4197 = vst [vmem:[%s4191 + $0x8] sm:%s4181] %v4196
                  %v4198 = vld [vmem:[%s4190 + $0xc] sm:%s4181]
                  %4199 = vst [vmem:[%s4191 + $0xc] sm:%s4181] %v4198
                  %s4200 = sadd.s32 1, %s4189
                  %p4201 = scmp.ge.s32.totalorder %s4200, %s4182
                  %s4202 = scalar_select %p4201, 0, %s4200
                  %s4203 = smul.u32 %s4202, 16
                  %s4204 = smul.u32 %s4202, 16
                  %s4205 = scalar_lea.vmem %s4107, %s4203 [#allocation10]
                  %s4206 = scalar_lea.vmem %s4118, %s4204
                $region99: #{sarcasm_mlp_forward.1} parent=93 // loop_footer
                  %s4186 = sadd.s32 %s4184, 1
                $region100: #{sarcasm_mlp_forward.1} parent=93 // loop_footer_branch
                  %4183 = sbr.rel target = $region96
                $region101: #{sarcasm_mlp_forward.1} parent=93 // loop_exit
                  _
                %s4207 = sshrl.u32 %s4114, 2
                %s4208 = sand.u32 %s4114, 3
                %s4209 = smul.u32 %s4207, 4
                %s4210 = smul.u32 4, %s4209
                %s4211 = scalar_lea.vmem %s4107, %s4210 [#allocation10]
                %s4212 = smul.u32 4, %s4209
                %s4213 = scalar_lea.vmem %s4118, %s4212
                // While loop
                $region102: #{sarcasm_mlp_forward.1} parent=93 // loop_pre_header
                  _
                $region103: #{sarcasm_mlp_forward.1} parent=93 // loop_header
                  %s4215 = sphi 0, %s4217
                  %p4216 = scmp.ge.s32.totalorder %s4215, %s4208
                  %s4220 = sphi 0, %s4227
                  %s4221 = sphi %s4211, %s4230
                  %s4222 = sphi %s4213, %s4231
                $region104: #{sarcasm_mlp_forward.1} parent=93 // loop_header_branch
                  %4219 = sbr.rel (%p4216) target = $region108
                $region105: #{sarcasm_mlp_forward.1} parent=93 // loop_body
                  %v4223 = vld [vmem:[%s4221] sm:%s4181]
                  %4224 = vst [vmem:[%s4222] sm:%s4181] %v4223
                  %s4225 = sadd.s32 1, %s4220
                  %p4226 = scmp.ge.s32.totalorder %s4225, %s4208
                  %s4227 = scalar_select %p4226, 0, %s4225
                  %s4228 = smul.u32 %s4227, 4
                  %s4229 = smul.u32 %s4227, 4
                  %s4230 = scalar_lea.vmem %s4211, %s4228 [#allocation10]
                  %s4231 = scalar_lea.vmem %s4213, %s4229
                $region106: #{sarcasm_mlp_forward.1} parent=93 // loop_footer
                  %s4217 = sadd.s32 %s4215, 1
                $region107: #{sarcasm_mlp_forward.1} parent=93 // loop_footer_branch
                  %4214 = sbr.rel target = $region103
                $region108: #{sarcasm_mlp_forward.1} parent=93 // loop_exit
                  _
              $region94: #{sarcasm_mlp_forward.1} parent=71 // pred_fallthru
                _
            $region72: #{sarcasm_mlp_forward.1} parent=67 // pred_fallthru
              _
            // Predicated region
            $region73: #{sarcasm_mlp_forward.1} parent=67 // pred_check
              _
            $region74: #{sarcasm_mlp_forward.1} parent=67 // pred_check_branch
              %4125 = sbr.rel (0) target = $region76
            $region75: #{sarcasm_mlp_forward.1} parent=67 // pred_region
              %s4127 = ssub.s32 16, 1
              %s4128 = sshrl.u32 %s4114, 2
              // While loop
              $region77: #{sarcasm_mlp_forward.1} parent=75 // loop_pre_header
                _
              $region78: #{sarcasm_mlp_forward.1} parent=75 // loop_header
                %s4130 = sphi 0, %s4132
                %p4131 = scmp.ge.s32.totalorder %s4130, %s4128
                %s4135 = sphi 0, %s4148
                %s4136 = sphi %s4107, %s4151
                %s4137 = sphi %s4118, %s4152
              $region79: #{sarcasm_mlp_forward.1} parent=75 // loop_header_branch
                %4134 = sbr.rel (%p4131) target = $region83
              $region80: #{sarcasm_mlp_forward.1} parent=75 // loop_body
                %v4138 = vld [vmem:[%s4136] sm:%s4127]
                %4139 = vst [vmem:[%s4137] sm:%s4127] %v4138
                %v4140 = vld [vmem:[%s4136 + $0x4] sm:%s4127]
                %4141 = vst [vmem:[%s4137 + $0x4] sm:%s4127] %v4140
                %v4142 = vld [vmem:[%s4136 + $0x8] sm:%s4127]
                %4143 = vst [vmem:[%s4137 + $0x8] sm:%s4127] %v4142
                %v4144 = vld [vmem:[%s4136 + $0xc] sm:%s4127]
                %4145 = vst [vmem:[%s4137 + $0xc] sm:%s4127] %v4144
                %s4146 = sadd.s32 1, %s4135
                %p4147 = scmp.ge.s32.totalorder %s4146, %s4128
                %s4148 = scalar_select %p4147, 0, %s4146
                %s4149 = smul.u32 %s4148, 16
                %s4150 = smul.u32 %s4148, 16
                %s4151 = scalar_lea.vmem %s4107, %s4149 [#allocation10]
                %s4152 = scalar_lea.vmem %s4118, %s4150
              $region81: #{sarcasm_mlp_forward.1} parent=75 // loop_footer
                %s4132 = sadd.s32 %s4130, 1
              $region82: #{sarcasm_mlp_forward.1} parent=75 // loop_footer_branch
                %4129 = sbr.rel target = $region78
              $region83: #{sarcasm_mlp_forward.1} parent=75 // loop_exit
                _
              %s4153 = sshrl.u32 %s4114, 2
              %s4154 = sand.u32 %s4114, 3
              %s4155 = smul.u32 %s4153, 4
              %s4156 = smul.u32 4, %s4155
              %s4157 = scalar_lea.vmem %s4107, %s4156 [#allocation10]
              %s4158 = smul.u32 4, %s4155
              %s4159 = scalar_lea.vmem %s4118, %s4158
              // While loop
              $region84: #{sarcasm_mlp_forward.1} parent=75 // loop_pre_header
                _
              $region85: #{sarcasm_mlp_forward.1} parent=75 // loop_header
                %s4161 = sphi 0, %s4163
                %p4162 = scmp.ge.s32.totalorder %s4161, %s4154
                %s4166 = sphi 0, %s4173
                %s4167 = sphi %s4157, %s4176
                %s4168 = sphi %s4159, %s4177
              $region86: #{sarcasm_mlp_forward.1} parent=75 // loop_header_branch
                %4165 = sbr.rel (%p4162) target = $region90
              $region87: #{sarcasm_mlp_forward.1} parent=75 // loop_body
                %v4169 = vld [vmem:[%s4167] sm:%s4127]
                %4170 = vst [vmem:[%s4168] sm:%s4127] %v4169
                %s4171 = sadd.s32 1, %s4166
                %p4172 = scmp.ge.s32.totalorder %s4171, %s4154
                %s4173 = scalar_select %p4172, 0, %s4171
                %s4174 = smul.u32 %s4173, 4
                %s4175 = smul.u32 %s4173, 4
                %s4176 = scalar_lea.vmem %s4157, %s4174 [#allocation10]
                %s4177 = scalar_lea.vmem %s4159, %s4175
              $region88: #{sarcasm_mlp_forward.1} parent=75 // loop_footer
                %s4163 = sadd.s32 %s4161, 1
              $region89: #{sarcasm_mlp_forward.1} parent=75 // loop_footer_branch
                %4160 = sbr.rel target = $region85
              $region90: #{sarcasm_mlp_forward.1} parent=75 // loop_exit
                _
            $region76: #{sarcasm_mlp_forward.1} parent=67 // pred_fallthru
              _
          $region68: #{sarcasm_mlp_forward.1} parent=63 // pred_fallthru
            _
          %4232 = vnop
        $region64: #{sarcasm_mlp_forward.1} parent=39 // pred_fallthru
          _
      $region40: #{sarcasm_mlp_forward.1} parent=5 // pred_fallthru
        _
      %p4233 = scmp.le.s32.totalorder 2, %s16
      // Predicated region
      $region109: #{sarcasm_mlp_forward.1} parent=5 // pred_check
        %p4234 = pneg %p4233
      $region110: #{sarcasm_mlp_forward.1} parent=5 // pred_check_branch
        %4236 = sbr.rel (%p4234) target = $region112
      $region111: #{sarcasm_mlp_forward.1} parent=5 // pred_region
        %s4237 = ssub.s32 %s16, 2
        // Predicated region
        $region113: #{sarcasm_mlp_forward.1} parent=111 // pred_check
          %p4238 = pneg %p155
        $region114: #{sarcasm_mlp_forward.1} parent=111 // pred_check_branch
          %4240 = sbr.rel (%p4238) target = $region116
        $region115: #{sarcasm_mlp_forward.1} parent=111 // pred_region
          %s4241 = sand.u32 %s140, 1
          %s4242 = sand.u32 %s140, 1
          %s4243 = smul.addr %s4242, 16
          %s4244 = scalar_lea.vmem [#allocation10], %s4243
        $region116: #{sarcasm_mlp_forward.1} parent=111 // pred_fallthru
          _
      $region112: #{sarcasm_mlp_forward.1} parent=5 // pred_fallthru
        _
    $region6: #{sarcasm_mlp_forward.1} parent=1 // loop_footer
      %s20 = sadd.s32 1, %s16
    $region7: #{sarcasm_mlp_forward.1} parent=1 // loop_footer_branch
      %15 = sbr.rel target = $region3
    $region8: #{sarcasm_mlp_forward.1} parent=1 // loop_exit
      _
    %4245 = vsyncpa [#allocation3], 1
    %s4246 = scalar_lea.sflag [#allocation3], 1
    %4247 = vsyncpa %s4246, 1
    %4248 = vsyncpa [#allocation5], 1
    %4249 = vsyncpa [#allocation8], 1

</llo_original>
